<compile_context>
chip_gen: v7x
topology: tpu7x:2x2x1
jax: 0.10.0
libtpu: 0.0.40
codegen_flags: <defaults>
</compile_context>

<pallas_src>
import functools
import math

import jax
import jax.numpy as jnp
from jax import lax
from jax.experimental import pallas as pl
from jax.experimental.pallas import tpu as pltpu


CONFIG = dict(
    vocab_size=100,
    type_vocab_size=2,
    max_position=16,
    hidden=32,
    num_heads=2,
    intermediate=64,
    num_layers=2,
    label_dim=4,
)

# contract the LAST dims of both operands (q @ k^T without an explicit transpose)
_TRANS_B = (((1,), (1,)), ((), ()))


# ------------------------------ fused kernel --------------------------------


def _rnt_fused_kernel(
    ids_ref, types_ref,      # scalar prefetch (SMEM): (B, S) int32 each
    mask_ref,                # (B, S) int32 attention mask (1 keep / 0 pad)
    tab_ref,                 # (V+P+T+C, H) f32: [word | pos | type | cls_w^T]
    glb_ref,                 # (3, H) f32: [emb_ln_g | emb_ln_b | cls_b (padded)]
    w_ref,                   # (L, H, 256) f32: [wqkv(3H) | wo(H) | w1(I) | w2^T(I)]
    bias_ref,                # (L, 8, 128) f32: per-layer bias / LN rows
    pooled_ref,              # out (B, H)
    logits_ref,              # out (B, C)
    emb_ref,                 # scratch VMEM (B*S, H)
    *, B, S, H, nH, L, I, V, P, T, C, scale,
):
    Dh = H // nH
    f32 = jnp.float32

    def ln(x, g, b, eps=1e-12):
        mean = jnp.mean(x, axis=-1, keepdims=True)
        var = jnp.mean(jnp.square(x - mean), axis=-1, keepdims=True)
        return (x - mean) * lax.rsqrt(var + eps) * g + b

    def gelu(x):
        # TODO(synk): HF default 'gelu' is erf-based; tanh approx ('gelu_new')
        # differs slightly but is kept for guaranteed Mosaic lowering (EUP tanh).
        c = math.sqrt(2.0 / math.pi)
        return 0.5 * x * (1.0 + jnp.tanh(c * (x + 0.044715 * x * x * x)))

    # ---- embeddings: in-kernel gather + sum (no XLA glue outside the kernel) ----
    for b in range(B):
        for si in range(S):
            wid = ids_ref[b, si]
            tid = types_ref[b, si]
            row = (
                tab_ref[pl.ds(wid, 1), :]
                + tab_ref[pl.ds(V + si, 1), :]
                + tab_ref[pl.ds(V + P + tid, 1), :]
            )
            emb_ref[pl.ds(b * S + si, 1), :] = row

    h = ln(emb_ref[...], glb_ref[0:1, :], glb_ref[1:2, :])          # (B*S, H)

    # additive key mask built in-kernel: 0 keep, -10000 masked
    add_mask = (1.0 - mask_ref[...].astype(f32)) * -10000.0         # (B, S)

    # ------------------------------ encoder layers ------------------------------
    for li in range(L):
        bqkv = bias_ref[li, 0:1, 0:3 * H]
        bo   = bias_ref[li, 1:2, 0:H]
        ln1g = bias_ref[li, 2:3, 0:H]
        ln1b = bias_ref[li, 3:4, 0:H]
        b1   = bias_ref[li, 4:5, 0:I]
        b2   = bias_ref[li, 5:6, 0:H]
        ln2g = bias_ref[li, 6:7, 0:H]
        ln2b = bias_ref[li, 7:8, 0:H]

        # fused QKV projection; columns head-interleaved as [Q_h|K_h|V_h] per head
        qkv = jnp.dot(h, w_ref[li, :, 0:3 * H],
                      preferred_element_type=f32) + bqkv             # (B*S, 3H)

        # attention + per-head fused output projection (vreg-resident accumulate)
        attn_rows = []
        for b in range(B):
            mb = add_mask[b:b + 1, :]                                 # (1, S)
            r0 = b * S
            acc = None
            for hd in range(nH):
                base = hd * 3 * Dh                 # contiguous window per head
                q = qkv[r0:r0 + S, base:base + Dh]
                k = qkv[r0:r0 + S, base + Dh:base + 2 * Dh]
                v = qkv[r0:r0 + S, base + 2 * Dh:base + 3 * Dh]
                sc = lax.dot_general(q, k, _TRANS_B,
                                     preferred_element_type=f32)      # (S, S)
                sc = sc * scale + mb
                sc = sc - jnp.max(sc, axis=-1, keepdims=True)
                p = jnp.exp(sc)
                p = p / jnp.sum(p, axis=-1, keepdims=True)            # exact softmax
                ctx = jnp.dot(p, v, preferred_element_type=f32)       # (S, Dh)
                wo_h = w_ref[li, hd * Dh:(hd + 1) * Dh, 3 * H:4 * H]  # (Dh, H)
                contrib = jnp.dot(ctx, wo_h, preferred_element_type=f32)
                acc = contrib if acc is None else acc + contrib
            attn_rows.append(acc)
        attn_out = jnp.concatenate(attn_rows, axis=0) + bo            # (B*S, H)
        h = ln(h + attn_out, ln1g, ln1b)

        # FFN (GELU) + residual + LN;  w2 is stored transposed -> trans-B matmul
        inter = gelu(jnp.dot(h, w_ref[li, :, 4 * H:4 * H + I],
                             preferred_element_type=f32) + b1)        # (B*S, I)
        ffn = lax.dot_general(inter, w_ref[li, :, 4 * H + I:4 * H + 2 * I],
                              _TRANS_B, preferred_element_type=f32) + b2
        h = ln(h + ffn, ln2g, ln2b)

    # ---------- pooled = last_hidden_state[:, 0, :]; logits = classifier ----------
    pooled = jnp.concatenate([h[b * S:b * S + 1, :] for b in range(B)], axis=0)
    cls_wt = tab_ref[V + P + T:V + P + T + C, :]                      # (C, H)
    cls_b = glb_ref[2:3, 0:C]                                         # (1, C)
    logits = lax.dot_general(pooled, cls_wt, _TRANS_B,
                             preferred_element_type=f32) + cls_b
    pooled_ref[...] = pooled.astype(pooled_ref.dtype)
    logits_ref[...] = logits.astype(logits_ref.dtype)


# ------------------------- deterministic packed parameters -------------------------


def init_params(key, cfg):
    H = cfg["hidden"]; I = cfg["intermediate"]; L = cfg["num_layers"]
    nH = cfg["num_heads"]; Dh = H // nH
    V = cfg["vocab_size"]; P = cfg["max_position"]; T = cfg["type_vocab_size"]
    C = cfg["label_dim"]
    std = 0.02

    def nrm(k, shape):
        return jax.random.normal(k, shape, jnp.float32) * std

    keys = iter(jax.random.split(key, 64))

    word_emb = nrm(next(keys), (V, H))
    pos_emb = nrm(next(keys), (P, H))
    type_emb = nrm(next(keys), (T, H))
    cls_w = nrm(next(keys), (H, C))
    cls_b = jnp.zeros((C,), jnp.float32)

    # one contiguous VMEM table: [word | pos | type | cls_w^T]
    table = jnp.concatenate([word_emb, pos_emb, type_emb, cls_w.T], axis=0)

    glb = jnp.zeros((3, H), jnp.float32)
    glb = glb.at[0, :].set(1.0)          # embedding LN gamma (beta = row 1 = 0)
    glb = glb.at[2, :C].set(cls_b)       # classifier bias (padded to H lanes)

    def interleave_heads(wq, wk, wv):
        # columns -> [Q_h0|K_h0|V_h0|Q_h1|K_h1|V_h1|...] so each head slices one
        # contiguous 3*Dh window of the fused QKV product.
        blocks = []
        for hd in range(nH):
            blocks += [wq[..., hd * Dh:(hd + 1) * Dh],
                       wk[..., hd * Dh:(hd + 1) * Dh],
                       wv[..., hd * Dh:(hd + 1) * Dh]]
        return jnp.concatenate(blocks, axis=-1)

    w_layers, b_layers = [], []
    for _ in range(L):
        wq = nrm(next(keys), (H, H)); wk = nrm(next(keys), (H, H))
        wv = nrm(next(keys), (H, H)); wo = nrm(next(keys), (H, H))
        w1 = nrm(next(keys), (H, I)); w2 = nrm(next(keys), (I, H))
        wqkv = interleave_heads(wq, wk, wv)                           # (H, 3H)
        # weight slab columns: [wqkv(3H) | wo(H) | w1(I) | w2^T(I)] -> (H, 256)
        w_layers.append(jnp.concatenate([wqkv, wo, w1, w2.T], axis=1))

        # per-layer bias/LN slab: one lane-aligned 128-wide row per vector
        bias = jnp.zeros((8, 128), jnp.float32)
        bqkv = interleave_heads(jnp.zeros((H,), jnp.float32),
                                jnp.zeros((H,), jnp.float32),
                                jnp.zeros((H,), jnp.float32))
        bias = bias.at[0, :3 * H].set(bqkv)     # fused QKV bias
        # row 1: attn-out bias (0), row 3: LN1 beta (0), row 4/5: FFN biases (0)
        bias = bias.at[2, :H].set(1.0)          # LN1 gamma
        bias = bias.at[6, :H].set(1.0)          # LN2 gamma (row 7: LN2 beta = 0)
        b_layers.append(bias)

    return dict(
        table=table,                       # (V+P+T+C, H)
        globals=glb,                       # (3, H)
        w_slab=jnp.stack(w_layers),        # (L, H, 256)
        bias_slab=jnp.stack(b_layers),     # (L, 8, 128)
    )


# --------------------------------- forward pass ---------------------------------


def rnt_forward(params, cfg, input_ids, token_type_ids, attention_mask):
    B, S = input_ids.shape
    H = cfg["hidden"]; nH = cfg["num_heads"]; L = cfg["num_layers"]
    C = cfg["label_dim"]; I = cfg["intermediate"]
    V = cfg["vocab_size"]; P = cfg["max_position"]; T = cfg["type_vocab_size"]
    Dh = H // nH

    tab = params["table"]
    glb = params["globals"]
    w_slab = params["w_slab"]
    bias_slab = params["bias_slab"]

    kernel = functools.partial(
        _rnt_fused_kernel,
        B=B, S=S, H=H, nH=nH, L=L, I=I, V=V, P=P, T=T, C=C,
        scale=1.0 / math.sqrt(Dh),
    )

    grid_spec = pltpu.PrefetchScalarGridSpec(
        num_scalar_prefetch=2,          # input_ids, token_type_ids -> SMEM
        grid=(1,),
        in_specs=[
            pl.BlockSpec((B, S), lambda i, *_: (0, 0)),              # mask
            pl.BlockSpec(tab.shape, lambda i, *_: (0, 0)),           # table
            pl.BlockSpec(glb.shape, lambda i, *_: (0, 0)),           # globals
            pl.BlockSpec(w_slab.shape, lambda i, *_: (0, 0, 0)),     # weight slab
            pl.BlockSpec(bias_slab.shape, lambda i, *_: (0, 0, 0)),  # bias slab
        ],
        out_specs=(
            pl.BlockSpec((B, H), lambda i, *_: (0, 0)),
            pl.BlockSpec((B, C), lambda i, *_: (0, 0)),
        ),
        scratch_shapes=[pltpu.VMEM((B * S, H), jnp.float32)],
    )

    pooled, logits = pl.pallas_call(
        kernel,
        grid_spec=grid_spec,
        out_shape=(
            jax.ShapeDtypeStruct((B, H), jnp.float32),
            jax.ShapeDtypeStruct((B, C), jnp.float32),
        ),
        compiler_params=pltpu.CompilerParams(
            dimension_semantics=("arbitrary",)   # single TC; do NOT shard at this size
        ),
    )(
        input_ids.astype(jnp.int32),
        token_type_ids.astype(jnp.int32),
        attention_mask.astype(jnp.int32),
        tab, glb, w_slab, bias_slab,
    )
    return pooled, logits


# -------------------------------------- main --------------------------------------


if __name__ == "__main__":
    cfg = CONFIG
    key = jax.random.PRNGKey(0)
    k_param, k_ids, k_types = jax.random.split(key, 3)

    params = init_params(k_param, cfg)

    B, S = 2, 8
    input_ids = jax.random.randint(k_ids, (B, S), 0, cfg["vocab_size"], jnp.int32)
    token_type_ids = jax.random.randint(
        k_types, (B, S), 0, cfg["type_vocab_size"], jnp.int32
    )
    attention_mask = jnp.ones((B, S), jnp.int32)
    attention_mask = attention_mask.at[1, S - 2:].set(0)  # exercise padding mask

    fwd = jax.jit(
        lambda p, ids, types, mask: rnt_forward(p, CONFIG, ids, types, mask)
    )
    pooled, logits = fwd(params, input_ids, token_type_ids, attention_mask)
    jax.block_until_ready((pooled, logits))

    assert pooled.shape == (B, cfg["hidden"])
    assert logits.shape == (B, cfg["label_dim"])
    assert bool(jnp.all(jnp.isfinite(pooled))) and bool(jnp.all(jnp.isfinite(logits)))
    print("KERNEL_OK")
</pallas_src>

<mosaic_0001>
module attributes {stable_mosaic.version = 11 : i64} {
  func.func @_rnt_fused_kernel(%arg0: i32, %arg1: memref<2x8xi32, #tpu.memory_space<smem>>, %arg2: memref<2x8xi32, #tpu.memory_space<smem>>, %arg3: memref<2x8xi32, #tpu.memory_space<vmem>>, %arg4: memref<122x32xf32, #tpu.memory_space<vmem>>, %arg5: memref<3x32xf32, #tpu.memory_space<vmem>>, %arg6: memref<2x32x256xf32, #tpu.memory_space<vmem>>, %arg7: memref<2x8x128xf32, #tpu.memory_space<vmem>>, %arg8: memref<2x32xf32, #tpu.memory_space<vmem>>, %arg9: memref<2x4xf32, #tpu.memory_space<vmem>>, %arg10: memref<16x32xf32, #tpu.memory_space<vmem>>) attributes {dimension_semantics = [#tpu.dimension_semantics<arbitrary>], iteration_bounds = array<i64: 1>, scalar_prefetch = 2 : i64, scratch_operands = 1 : i64, tpu.core_type = #tpu.core_type<tc>, window_params = [{pipeline_mode = #tpu.pipeline_mode<synchronous>, transform_indices = @transform_0, window_bounds = array<i64: 2, 8>}, {pipeline_mode = #tpu.pipeline_mode<synchronous>, transform_indices = @transform_1, window_bounds = array<i64: 122, 32>}, {pipeline_mode = #tpu.pipeline_mode<synchronous>, transform_indices = @transform_2, window_bounds = array<i64: 3, 32>}, {pipeline_mode = #tpu.pipeline_mode<synchronous>, transform_indices = @transform_3, window_bounds = array<i64: 2, 32, 256>}, {pipeline_mode = #tpu.pipeline_mode<synchronous>, transform_indices = @transform_4, window_bounds = array<i64: 2, 8, 128>}, {pipeline_mode = #tpu.pipeline_mode<synchronous>, transform_indices = @transform_5, window_bounds = array<i64: 2, 32>}, {pipeline_mode = #tpu.pipeline_mode<synchronous>, transform_indices = @transform_6, window_bounds = array<i64: 2, 4>}]} {
    %c0 = arith.constant 0 : index
    %c0_0 = arith.constant 0 : index
    %0 = memref.load %arg1[%c0, %c0_0] : memref<2x8xi32, #tpu.memory_space<smem>>
    %c0_1 = arith.constant 0 : index
    %c0_2 = arith.constant 0 : index
    %1 = memref.load %arg2[%c0_1, %c0_2] : memref<2x8xi32, #tpu.memory_space<smem>>
    %2 = arith.index_cast %0 : i32 to index
    %c0_3 = arith.constant 0 : index
    %3 = vector.load %arg4[%2, %c0_3] : memref<122x32xf32, #tpu.memory_space<vmem>>, vector<1x32xf32>
    %c100 = arith.constant 100 : index
    %c0_4 = arith.constant 0 : index
    %4 = vector.load %arg4[%c100, %c0_4] : memref<122x32xf32, #tpu.memory_space<vmem>>, vector<1x32xf32>
    %5 = arith.addf %3, %4 : vector<1x32xf32>
    %c116_i32 = arith.constant 116 : i32
    %6 = arith.addi %c116_i32, %1 : i32
    %7 = arith.index_cast %6 : i32 to index
    %c0_5 = arith.constant 0 : index
    %8 = vector.load %arg4[%7, %c0_5] : memref<122x32xf32, #tpu.memory_space<vmem>>, vector<1x32xf32>
    %9 = arith.addf %5, %8 : vector<1x32xf32>
    %c0_6 = arith.constant 0 : index
    %c0_7 = arith.constant 0 : index
    %10 = vector.load %arg10[%c0_6, %c0_7] : memref<16x32xf32, #tpu.memory_space<vmem>>, vector<1x32xf32>
    tpu.vector_store %arg10[%c0_6, %c0_7], %9 {strides = array<i32>} : memref<16x32xf32, #tpu.memory_space<vmem>>, vector<1x32xf32>,
    %c0_8 = arith.constant 0 : index
    %c1 = arith.constant 1 : index
    %11 = memref.load %arg1[%c0_8, %c1] : memref<2x8xi32, #tpu.memory_space<smem>>
    %c0_9 = arith.constant 0 : index
    %c1_10 = arith.constant 1 : index
    %12 = memref.load %arg2[%c0_9, %c1_10] : memref<2x8xi32, #tpu.memory_space<smem>>
    %13 = arith.index_cast %11 : i32 to index
    %c0_11 = arith.constant 0 : index
    %14 = vector.load %arg4[%13, %c0_11] : memref<122x32xf32, #tpu.memory_space<vmem>>, vector<1x32xf32>
    %c101 = arith.constant 101 : index
    %c0_12 = arith.constant 0 : index
    %15 = vector.load %arg4[%c101, %c0_12] : memref<122x32xf32, #tpu.memory_space<vmem>>, vector<1x32xf32>
    %16 = arith.addf %14, %15 : vector<1x32xf32>
    %c116_i32_13 = arith.constant 116 : i32
    %17 = arith.addi %c116_i32_13, %12 : i32
    %18 = arith.index_cast %17 : i32 to index
    %c0_14 = arith.constant 0 : index
    %19 = vector.load %arg4[%18, %c0_14] : memref<122x32xf32, #tpu.memory_space<vmem>>, vector<1x32xf32>
    %20 = arith.addf %16, %19 : vector<1x32xf32>
    %c1_15 = arith.constant 1 : index
    %c0_16 = arith.constant 0 : index
    %21 = vector.load %arg10[%c1_15, %c0_16] : memref<16x32xf32, #tpu.memory_space<vmem>>, vector<1x32xf32>
    tpu.vector_store %arg10[%c1_15, %c0_16], %20 {strides = array<i32>} : memref<16x32xf32, #tpu.memory_space<vmem>>, vector<1x32xf32>,
    %c0_17 = arith.constant 0 : index
    %c2 = arith.constant 2 : index
    %22 = memref.load %arg1[%c0_17, %c2] : memref<2x8xi32, #tpu.memory_space<smem>>
    %c0_18 = arith.constant 0 : index
    %c2_19 = arith.constant 2 : index
    %23 = memref.load %arg2[%c0_18, %c2_19] : memref<2x8xi32, #tpu.memory_space<smem>>
    %24 = arith.index_cast %22 : i32 to index
    %c0_20 = arith.constant 0 : index
    %25 = vector.load %arg4[%24, %c0_20] : memref<122x32xf32, #tpu.memory_space<vmem>>, vector<1x32xf32>
    %c102 = arith.constant 102 : index
    %c0_21 = arith.constant 0 : index
    %26 = vector.load %arg4[%c102, %c0_21] : memref<122x32xf32, #tpu.memory_space<vmem>>, vector<1x32xf32>
    %27 = arith.addf %25, %26 : vector<1x32xf32>
    %c116_i32_22 = arith.constant 116 : i32
    %28 = arith.addi %c116_i32_22, %23 : i32
    %29 = arith.index_cast %28 : i32 to index
    %c0_23 = arith.constant 0 : index
    %30 = vector.load %arg4[%29, %c0_23] : memref<122x32xf32, #tpu.memory_space<vmem>>, vector<1x32xf32>
    %31 = arith.addf %27, %30 : vector<1x32xf32>
    %c2_24 = arith.constant 2 : index
    %c0_25 = arith.constant 0 : index
    %32 = vector.load %arg10[%c2_24, %c0_25] : memref<16x32xf32, #tpu.memory_space<vmem>>, vector<1x32xf32>
    tpu.vector_store %arg10[%c2_24, %c0_25], %31 {strides = array<i32>} : memref<16x32xf32, #tpu.memory_space<vmem>>, vector<1x32xf32>,
    %c0_26 = arith.constant 0 : index
    %c3 = arith.constant 3 : index
    %33 = memref.load %arg1[%c0_26, %c3] : memref<2x8xi32, #tpu.memory_space<smem>>
    %c0_27 = arith.constant 0 : index
    %c3_28 = arith.constant 3 : index
    %34 = memref.load %arg2[%c0_27, %c3_28] : memref<2x8xi32, #tpu.memory_space<smem>>
    %35 = arith.index_cast %33 : i32 to index
    %c0_29 = arith.constant 0 : index
    %36 = vector.load %arg4[%35, %c0_29] : memref<122x32xf32, #tpu.memory_space<vmem>>, vector<1x32xf32>
    %c103 = arith.constant 103 : index
    %c0_30 = arith.constant 0 : index
    %37 = vector.load %arg4[%c103, %c0_30] : memref<122x32xf32, #tpu.memory_space<vmem>>, vector<1x32xf32>
    %38 = arith.addf %36, %37 : vector<1x32xf32>
    %c116_i32_31 = arith.constant 116 : i32
    %39 = arith.addi %c116_i32_31, %34 : i32
    %40 = arith.index_cast %39 : i32 to index
    %c0_32 = arith.constant 0 : index
    %41 = vector.load %arg4[%40, %c0_32] : memref<122x32xf32, #tpu.memory_space<vmem>>, vector<1x32xf32>
    %42 = arith.addf %38, %41 : vector<1x32xf32>
    %c3_33 = arith.constant 3 : index
    %c0_34 = arith.constant 0 : index
    %43 = vector.load %arg10[%c3_33, %c0_34] : memref<16x32xf32, #tpu.memory_space<vmem>>, vector<1x32xf32>
    tpu.vector_store %arg10[%c3_33, %c0_34], %42 {strides = array<i32>} : memref<16x32xf32, #tpu.memory_space<vmem>>, vector<1x32xf32>,
    %c0_35 = arith.constant 0 : index
    %c4 = arith.constant 4 : index
    %44 = memref.load %arg1[%c0_35, %c4] : memref<2x8xi32, #tpu.memory_space<smem>>
    %c0_36 = arith.constant 0 : index
    %c4_37 = arith.constant 4 : index
    %45 = memref.load %arg2[%c0_36, %c4_37] : memref<2x8xi32, #tpu.memory_space<smem>>
    %46 = arith.index_cast %44 : i32 to index
    %c0_38 = arith.constant 0 : index
    %47 = vector.load %arg4[%46, %c0_38] : memref<122x32xf32, #tpu.memory_space<vmem>>, vector<1x32xf32>
    %c104 = arith.constant 104 : index
    %c0_39 = arith.constant 0 : index
    %48 = vector.load %arg4[%c104, %c0_39] : memref<122x32xf32, #tpu.memory_space<vmem>>, vector<1x32xf32>
    %49 = arith.addf %47, %48 : vector<1x32xf32>
    %c116_i32_40 = arith.constant 116 : i32
    %50 = arith.addi %c116_i32_40, %45 : i32
    %51 = arith.index_cast %50 : i32 to index
    %c0_41 = arith.constant 0 : index
    %52 = vector.load %arg4[%51, %c0_41] : memref<122x32xf32, #tpu.memory_space<vmem>>, vector<1x32xf32>
    %53 = arith.addf %49, %52 : vector<1x32xf32>
    %c4_42 = arith.constant 4 : index
    %c0_43 = arith.constant 0 : index
    %54 = vector.load %arg10[%c4_42, %c0_43] : memref<16x32xf32, #tpu.memory_space<vmem>>, vector<1x32xf32>
    tpu.vector_store %arg10[%c4_42, %c0_43], %53 {strides = array<i32>} : memref<16x32xf32, #tpu.memory_space<vmem>>, vector<1x32xf32>,
    %c0_44 = arith.constant 0 : index
    %c5 = arith.constant 5 : index
    %55 = memref.load %arg1[%c0_44, %c5] : memref<2x8xi32, #tpu.memory_space<smem>>
    %c0_45 = arith.constant 0 : index
    %c5_46 = arith.constant 5 : index
    %56 = memref.load %arg2[%c0_45, %c5_46] : memref<2x8xi32, #tpu.memory_space<smem>>
    %57 = arith.index_cast %55 : i32 to index
    %c0_47 = arith.constant 0 : index
    %58 = vector.load %arg4[%57, %c0_47] : memref<122x32xf32, #tpu.memory_space<vmem>>, vector<1x32xf32>
    %c105 = arith.constant 105 : index
    %c0_48 = arith.constant 0 : index
    %59 = vector.load %arg4[%c105, %c0_48] : memref<122x32xf32, #tpu.memory_space<vmem>>, vector<1x32xf32>
    %60 = arith.addf %58, %59 : vector<1x32xf32>
    %c116_i32_49 = arith.constant 116 : i32
    %61 = arith.addi %c116_i32_49, %56 : i32
    %62 = arith.index_cast %61 : i32 to index
    %c0_50 = arith.constant 0 : index
    %63 = vector.load %arg4[%62, %c0_50] : memref<122x32xf32, #tpu.memory_space<vmem>>, vector<1x32xf32>
    %64 = arith.addf %60, %63 : vector<1x32xf32>
    %c5_51 = arith.constant 5 : index
    %c0_52 = arith.constant 0 : index
    %65 = vector.load %arg10[%c5_51, %c0_52] : memref<16x32xf32, #tpu.memory_space<vmem>>, vector<1x32xf32>
    tpu.vector_store %arg10[%c5_51, %c0_52], %64 {strides = array<i32>} : memref<16x32xf32, #tpu.memory_space<vmem>>, vector<1x32xf32>,
    %c0_53 = arith.constant 0 : index
    %c6 = arith.constant 6 : index
    %66 = memref.load %arg1[%c0_53, %c6] : memref<2x8xi32, #tpu.memory_space<smem>>
    %c0_54 = arith.constant 0 : index
    %c6_55 = arith.constant 6 : index
    %67 = memref.load %arg2[%c0_54, %c6_55] : memref<2x8xi32, #tpu.memory_space<smem>>
    %68 = arith.index_cast %66 : i32 to index
    %c0_56 = arith.constant 0 : index
    %69 = vector.load %arg4[%68, %c0_56] : memref<122x32xf32, #tpu.memory_space<vmem>>, vector<1x32xf32>
    %c106 = arith.constant 106 : index
    %c0_57 = arith.constant 0 : index
    %70 = vector.load %arg4[%c106, %c0_57] : memref<122x32xf32, #tpu.memory_space<vmem>>, vector<1x32xf32>
    %71 = arith.addf %69, %70 : vector<1x32xf32>
    %c116_i32_58 = arith.constant 116 : i32
    %72 = arith.addi %c116_i32_58, %67 : i32
    %73 = arith.index_cast %72 : i32 to index
    %c0_59 = arith.constant 0 : index
    %74 = vector.load %arg4[%73, %c0_59] : memref<122x32xf32, #tpu.memory_space<vmem>>, vector<1x32xf32>
    %75 = arith.addf %71, %74 : vector<1x32xf32>
    %c6_60 = arith.constant 6 : index
    %c0_61 = arith.constant 0 : index
    %76 = vector.load %arg10[%c6_60, %c0_61] : memref<16x32xf32, #tpu.memory_space<vmem>>, vector<1x32xf32>
    tpu.vector_store %arg10[%c6_60, %c0_61], %75 {strides = array<i32>} : memref<16x32xf32, #tpu.memory_space<vmem>>, vector<1x32xf32>,
    %c0_62 = arith.constant 0 : index
    %c7 = arith.constant 7 : index
    %77 = memref.load %arg1[%c0_62, %c7] : memref<2x8xi32, #tpu.memory_space<smem>>
    %c0_63 = arith.constant 0 : index
    %c7_64 = arith.constant 7 : index
    %78 = memref.load %arg2[%c0_63, %c7_64] : memref<2x8xi32, #tpu.memory_space<smem>>
    %79 = arith.index_cast %77 : i32 to index
    %c0_65 = arith.constant 0 : index
    %80 = vector.load %arg4[%79, %c0_65] : memref<122x32xf32, #tpu.memory_space<vmem>>, vector<1x32xf32>
    %c107 = arith.constant 107 : index
    %c0_66 = arith.constant 0 : index
    %81 = vector.load %arg4[%c107, %c0_66] : memref<122x32xf32, #tpu.memory_space<vmem>>, vector<1x32xf32>
    %82 = arith.addf %80, %81 : vector<1x32xf32>
    %c116_i32_67 = arith.constant 116 : i32
    %83 = arith.addi %c116_i32_67, %78 : i32
    %84 = arith.index_cast %83 : i32 to index
    %c0_68 = arith.constant 0 : index
    %85 = vector.load %arg4[%84, %c0_68] : memref<122x32xf32, #tpu.memory_space<vmem>>, vector<1x32xf32>
    %86 = arith.addf %82, %85 : vector<1x32xf32>
    %c7_69 = arith.constant 7 : index
    %c0_70 = arith.constant 0 : index
    %87 = vector.load %arg10[%c7_69, %c0_70] : memref<16x32xf32, #tpu.memory_space<vmem>>, vector<1x32xf32>
    tpu.vector_store %arg10[%c7_69, %c0_70], %86 {strides = array<i32>} : memref<16x32xf32, #tpu.memory_space<vmem>>, vector<1x32xf32>,
    %c1_71 = arith.constant 1 : index
    %c0_72 = arith.constant 0 : index
    %88 = memref.load %arg1[%c1_71, %c0_72] : memref<2x8xi32, #tpu.memory_space<smem>>
    %c1_73 = arith.constant 1 : index
    %c0_74 = arith.constant 0 : index
    %89 = memref.load %arg2[%c1_73, %c0_74] : memref<2x8xi32, #tpu.memory_space<smem>>
    %90 = arith.index_cast %88 : i32 to index
    %c0_75 = arith.constant 0 : index
    %91 = vector.load %arg4[%90, %c0_75] : memref<122x32xf32, #tpu.memory_space<vmem>>, vector<1x32xf32>
    %c100_76 = arith.constant 100 : index
    %c0_77 = arith.constant 0 : index
    %92 = vector.load %arg4[%c100_76, %c0_77] : memref<122x32xf32, #tpu.memory_space<vmem>>, vector<1x32xf32>
    %93 = arith.addf %91, %92 : vector<1x32xf32>
    %c116_i32_78 = arith.constant 116 : i32
    %94 = arith.addi %c116_i32_78, %89 : i32
    %95 = arith.index_cast %94 : i32 to index
    %c0_79 = arith.constant 0 : index
    %96 = vector.load %arg4[%95, %c0_79] : memref<122x32xf32, #tpu.memory_space<vmem>>, vector<1x32xf32>
    %97 = arith.addf %93, %96 : vector<1x32xf32>
    %c8 = arith.constant 8 : index
    %c0_80 = arith.constant 0 : index
    %98 = vector.load %arg10[%c8, %c0_80] : memref<16x32xf32, #tpu.memory_space<vmem>>, vector<1x32xf32>
    tpu.vector_store %arg10[%c8, %c0_80], %97 {strides = array<i32>} : memref<16x32xf32, #tpu.memory_space<vmem>>, vector<1x32xf32>,
    %c1_81 = arith.constant 1 : index
    %c1_82 = arith.constant 1 : index
    %99 = memref.load %arg1[%c1_81, %c1_82] : memref<2x8xi32, #tpu.memory_space<smem>>
    %c1_83 = arith.constant 1 : index
    %c1_84 = arith.constant 1 : index
    %100 = memref.load %arg2[%c1_83, %c1_84] : memref<2x8xi32, #tpu.memory_space<smem>>
    %101 = arith.index_cast %99 : i32 to index
    %c0_85 = arith.constant 0 : index
    %102 = vector.load %arg4[%101, %c0_85] : memref<122x32xf32, #tpu.memory_space<vmem>>, vector<1x32xf32>
    %c101_86 = arith.constant 101 : index
    %c0_87 = arith.constant 0 : index
    %103 = vector.load %arg4[%c101_86, %c0_87] : memref<122x32xf32, #tpu.memory_space<vmem>>, vector<1x32xf32>
    %104 = arith.addf %102, %103 : vector<1x32xf32>
    %c116_i32_88 = arith.constant 116 : i32
    %105 = arith.addi %c116_i32_88, %100 : i32
    %106 = arith.index_cast %105 : i32 to index
    %c0_89 = arith.constant 0 : index
    %107 = vector.load %arg4[%106, %c0_89] : memref<122x32xf32, #tpu.memory_space<vmem>>, vector<1x32xf32>
    %108 = arith.addf %104, %107 : vector<1x32xf32>
    %c9 = arith.constant 9 : index
    %c0_90 = arith.constant 0 : index
    %109 = vector.load %arg10[%c9, %c0_90] : memref<16x32xf32, #tpu.memory_space<vmem>>, vector<1x32xf32>
    tpu.vector_store %arg10[%c9, %c0_90], %108 {strides = array<i32>} : memref<16x32xf32, #tpu.memory_space<vmem>>, vector<1x32xf32>,
    %c1_91 = arith.constant 1 : index
    %c2_92 = arith.constant 2 : index
    %110 = memref.load %arg1[%c1_91, %c2_92] : memref<2x8xi32, #tpu.memory_space<smem>>
    %c1_93 = arith.constant 1 : index
    %c2_94 = arith.constant 2 : index
    %111 = memref.load %arg2[%c1_93, %c2_94] : memref<2x8xi32, #tpu.memory_space<smem>>
    %112 = arith.index_cast %110 : i32 to index
    %c0_95 = arith.constant 0 : index
    %113 = vector.load %arg4[%112, %c0_95] : memref<122x32xf32, #tpu.memory_space<vmem>>, vector<1x32xf32>
    %c102_96 = arith.constant 102 : index
    %c0_97 = arith.constant 0 : index
    %114 = vector.load %arg4[%c102_96, %c0_97] : memref<122x32xf32, #tpu.memory_space<vmem>>, vector<1x32xf32>
    %115 = arith.addf %113, %114 : vector<1x32xf32>
    %c116_i32_98 = arith.constant 116 : i32
    %116 = arith.addi %c116_i32_98, %111 : i32
    %117 = arith.index_cast %116 : i32 to index
    %c0_99 = arith.constant 0 : index
    %118 = vector.load %arg4[%117, %c0_99] : memref<122x32xf32, #tpu.memory_space<vmem>>, vector<1x32xf32>
    %119 = arith.addf %115, %118 : vector<1x32xf32>
    %c10 = arith.constant 10 : index
    %c0_100 = arith.constant 0 : index
    %120 = vector.load %arg10[%c10, %c0_100] : memref<16x32xf32, #tpu.memory_space<vmem>>, vector<1x32xf32>
    tpu.vector_store %arg10[%c10, %c0_100], %119 {strides = array<i32>} : memref<16x32xf32, #tpu.memory_space<vmem>>, vector<1x32xf32>,
    %c1_101 = arith.constant 1 : index
    %c3_102 = arith.constant 3 : index
    %121 = memref.load %arg1[%c1_101, %c3_102] : memref<2x8xi32, #tpu.memory_space<smem>>
    %c1_103 = arith.constant 1 : index
    %c3_104 = arith.constant 3 : index
    %122 = memref.load %arg2[%c1_103, %c3_104] : memref<2x8xi32, #tpu.memory_space<smem>>
    %123 = arith.index_cast %121 : i32 to index
    %c0_105 = arith.constant 0 : index
    %124 = vector.load %arg4[%123, %c0_105] : memref<122x32xf32, #tpu.memory_space<vmem>>, vector<1x32xf32>
    %c103_106 = arith.constant 103 : index
    %c0_107 = arith.constant 0 : index
    %125 = vector.load %arg4[%c103_106, %c0_107] : memref<122x32xf32, #tpu.memory_space<vmem>>, vector<1x32xf32>
    %126 = arith.addf %124, %125 : vector<1x32xf32>
    %c116_i32_108 = arith.constant 116 : i32
    %127 = arith.addi %c116_i32_108, %122 : i32
    %128 = arith.index_cast %127 : i32 to index
    %c0_109 = arith.constant 0 : index
    %129 = vector.load %arg4[%128, %c0_109] : memref<122x32xf32, #tpu.memory_space<vmem>>, vector<1x32xf32>
    %130 = arith.addf %126, %129 : vector<1x32xf32>
    %c11 = arith.constant 11 : index
    %c0_110 = arith.constant 0 : index
    %131 = vector.load %arg10[%c11, %c0_110] : memref<16x32xf32, #tpu.memory_space<vmem>>, vector<1x32xf32>
    tpu.vector_store %arg10[%c11, %c0_110], %130 {strides = array<i32>} : memref<16x32xf32, #tpu.memory_space<vmem>>, vector<1x32xf32>,
    %c1_111 = arith.constant 1 : index
    %c4_112 = arith.constant 4 : index
    %132 = memref.load %arg1[%c1_111, %c4_112] : memref<2x8xi32, #tpu.memory_space<smem>>
    %c1_113 = arith.constant 1 : index
    %c4_114 = arith.constant 4 : index
    %133 = memref.load %arg2[%c1_113, %c4_114] : memref<2x8xi32, #tpu.memory_space<smem>>
    %134 = arith.index_cast %132 : i32 to index
    %c0_115 = arith.constant 0 : index
    %135 = vector.load %arg4[%134, %c0_115] : memref<122x32xf32, #tpu.memory_space<vmem>>, vector<1x32xf32>
    %c104_116 = arith.constant 104 : index
    %c0_117 = arith.constant 0 : index
    %136 = vector.load %arg4[%c104_116, %c0_117] : memref<122x32xf32, #tpu.memory_space<vmem>>, vector<1x32xf32>
    %137 = arith.addf %135, %136 : vector<1x32xf32>
    %c116_i32_118 = arith.constant 116 : i32
    %138 = arith.addi %c116_i32_118, %133 : i32
    %139 = arith.index_cast %138 : i32 to index
    %c0_119 = arith.constant 0 : index
    %140 = vector.load %arg4[%139, %c0_119] : memref<122x32xf32, #tpu.memory_space<vmem>>, vector<1x32xf32>
    %141 = arith.addf %137, %140 : vector<1x32xf32>
    %c12 = arith.constant 12 : index
    %c0_120 = arith.constant 0 : index
    %142 = vector.load %arg10[%c12, %c0_120] : memref<16x32xf32, #tpu.memory_space<vmem>>, vector<1x32xf32>
    tpu.vector_store %arg10[%c12, %c0_120], %141 {strides = array<i32>} : memref<16x32xf32, #tpu.memory_space<vmem>>, vector<1x32xf32>,
    %c1_121 = arith.constant 1 : index
    %c5_122 = arith.constant 5 : index
    %143 = memref.load %arg1[%c1_121, %c5_122] : memref<2x8xi32, #tpu.memory_space<smem>>
    %c1_123 = arith.constant 1 : index
    %c5_124 = arith.constant 5 : index
    %144 = memref.load %arg2[%c1_123, %c5_124] : memref<2x8xi32, #tpu.memory_space<smem>>
    %145 = arith.index_cast %143 : i32 to index
    %c0_125 = arith.constant 0 : index
    %146 = vector.load %arg4[%145, %c0_125] : memref<122x32xf32, #tpu.memory_space<vmem>>, vector<1x32xf32>
    %c105_126 = arith.constant 105 : index
    %c0_127 = arith.constant 0 : index
    %147 = vector.load %arg4[%c105_126, %c0_127] : memref<122x32xf32, #tpu.memory_space<vmem>>, vector<1x32xf32>
    %148 = arith.addf %146, %147 : vector<1x32xf32>
    %c116_i32_128 = arith.constant 116 : i32
    %149 = arith.addi %c116_i32_128, %144 : i32
    %150 = arith.index_cast %149 : i32 to index
    %c0_129 = arith.constant 0 : index
    %151 = vector.load %arg4[%150, %c0_129] : memref<122x32xf32, #tpu.memory_space<vmem>>, vector<1x32xf32>
    %152 = arith.addf %148, %151 : vector<1x32xf32>
    %c13 = arith.constant 13 : index
    %c0_130 = arith.constant 0 : index
    %153 = vector.load %arg10[%c13, %c0_130] : memref<16x32xf32, #tpu.memory_space<vmem>>, vector<1x32xf32>
    tpu.vector_store %arg10[%c13, %c0_130], %152 {strides = array<i32>} : memref<16x32xf32, #tpu.memory_space<vmem>>, vector<1x32xf32>,
    %c1_131 = arith.constant 1 : index
    %c6_132 = arith.constant 6 : index
    %154 = memref.load %arg1[%c1_131, %c6_132] : memref<2x8xi32, #tpu.memory_space<smem>>
    %c1_133 = arith.constant 1 : index
    %c6_134 = arith.constant 6 : index
    %155 = memref.load %arg2[%c1_133, %c6_134] : memref<2x8xi32, #tpu.memory_space<smem>>
    %156 = arith.index_cast %154 : i32 to index
    %c0_135 = arith.constant 0 : index
    %157 = vector.load %arg4[%156, %c0_135] : memref<122x32xf32, #tpu.memory_space<vmem>>, vector<1x32xf32>
    %c106_136 = arith.constant 106 : index
    %c0_137 = arith.constant 0 : index
    %158 = vector.load %arg4[%c106_136, %c0_137] : memref<122x32xf32, #tpu.memory_space<vmem>>, vector<1x32xf32>
    %159 = arith.addf %157, %158 : vector<1x32xf32>
    %c116_i32_138 = arith.constant 116 : i32
    %160 = arith.addi %c116_i32_138, %155 : i32
    %161 = arith.index_cast %160 : i32 to index
    %c0_139 = arith.constant 0 : index
    %162 = vector.load %arg4[%161, %c0_139] : memref<122x32xf32, #tpu.memory_space<vmem>>, vector<1x32xf32>
    %163 = arith.addf %159, %162 : vector<1x32xf32>
    %c14 = arith.constant 14 : index
    %c0_140 = arith.constant 0 : index
    %164 = vector.load %arg10[%c14, %c0_140] : memref<16x32xf32, #tpu.memory_space<vmem>>, vector<1x32xf32>
    tpu.vector_store %arg10[%c14, %c0_140], %163 {strides = array<i32>} : memref<16x32xf32, #tpu.memory_space<vmem>>, vector<1x32xf32>,
    %c1_141 = arith.constant 1 : index
    %c7_142 = arith.constant 7 : index
    %165 = memref.load %arg1[%c1_141, %c7_142] : memref<2x8xi32, #tpu.memory_space<smem>>
    %c1_143 = arith.constant 1 : index
    %c7_144 = arith.constant 7 : index
    %166 = memref.load %arg2[%c1_143, %c7_144] : memref<2x8xi32, #tpu.memory_space<smem>>
    %167 = arith.index_cast %165 : i32 to index
    %c0_145 = arith.constant 0 : index
    %168 = vector.load %arg4[%167, %c0_145] : memref<122x32xf32, #tpu.memory_space<vmem>>, vector<1x32xf32>
    %c107_146 = arith.constant 107 : index
    %c0_147 = arith.constant 0 : index
    %169 = vector.load %arg4[%c107_146, %c0_147] : memref<122x32xf32, #tpu.memory_space<vmem>>, vector<1x32xf32>
    %170 = arith.addf %168, %169 : vector<1x32xf32>
    %c116_i32_148 = arith.constant 116 : i32
    %171 = arith.addi %c116_i32_148, %166 : i32
    %172 = arith.index_cast %171 : i32 to index
    %c0_149 = arith.constant 0 : index
    %173 = vector.load %arg4[%172, %c0_149] : memref<122x32xf32, #tpu.memory_space<vmem>>, vector<1x32xf32>
    %174 = arith.addf %170, %173 : vector<1x32xf32>
    %c15 = arith.constant 15 : index
    %c0_150 = arith.constant 0 : index
    %175 = vector.load %arg10[%c15, %c0_150] : memref<16x32xf32, #tpu.memory_space<vmem>>, vector<1x32xf32>
    tpu.vector_store %arg10[%c15, %c0_150], %174 {strides = array<i32>} : memref<16x32xf32, #tpu.memory_space<vmem>>, vector<1x32xf32>,
    %c0_151 = arith.constant 0 : index
    %c0_152 = arith.constant 0 : index
    %176 = vector.load %arg10[%c0_151, %c0_152] : memref<16x32xf32, #tpu.memory_space<vmem>>, vector<16x32xf32>
    %c0_153 = arith.constant 0 : index
    %c0_154 = arith.constant 0 : index
    %177 = vector.load %arg5[%c0_153, %c0_154] : memref<3x32xf32, #tpu.memory_space<vmem>>, vector<1x32xf32>
    %c1_155 = arith.constant 1 : index
    %c0_156 = arith.constant 0 : index
    %178 = vector.load %arg5[%c1_155, %c0_156] : memref<3x32xf32, #tpu.memory_space<vmem>>, vector<1x32xf32>
    %cst = arith.constant dense<0.000000e+00> : vector<16xf32>
    %179 = vector.multi_reduction <add>, %176, %cst [1] : vector<16x32xf32> to vector<16xf32>
    %180 = vector.shape_cast %179 : vector<16xf32> to vector<16x1xf32>
    %cst_157 = arith.constant 3.200000e+01 : f32
    %181 = vector.broadcast %cst_157 : f32 to vector<16x1xf32>
    %182 = arith.divf %180, %181 : vector<16x1xf32>
    %183 = vector.broadcast %182 : vector<16x1xf32> to vector<16x32xf32>
    %184 = arith.subf %176, %183 : vector<16x32xf32>
    %185 = arith.mulf %184, %184 : vector<16x32xf32>
    %cst_158 = arith.constant dense<0.000000e+00> : vector<16xf32>
    %186 = vector.multi_reduction <add>, %185, %cst_158 [1] : vector<16x32xf32> to vector<16xf32>
    %187 = vector.shape_cast %186 : vector<16xf32> to vector<16x1xf32>
    %cst_159 = arith.constant 3.200000e+01 : f32
    %188 = vector.broadcast %cst_159 : f32 to vector<16x1xf32>
    %189 = arith.divf %187, %188 : vector<16x1xf32>
    %190 = vector.broadcast %182 : vector<16x1xf32> to vector<16x32xf32>
    %191 = arith.subf %176, %190 : vector<16x32xf32>
    %cst_160 = arith.constant 9.99999996E-13 : f32
    %192 = vector.broadcast %cst_160 : f32 to vector<16x1xf32>
    %193 = arith.addf %189, %192 : vector<16x1xf32>
    %194 = math.rsqrt %193 : vector<16x1xf32>
    %195 = vector.broadcast %194 : vector<16x1xf32> to vector<16x32xf32>
    %196 = arith.mulf %191, %195 : vector<16x32xf32>
    %197 = vector.broadcast %177 : vector<1x32xf32> to vector<16x32xf32>
    %198 = arith.mulf %196, %197 : vector<16x32xf32>
    %199 = vector.broadcast %178 : vector<1x32xf32> to vector<16x32xf32>
    %200 = arith.addf %198, %199 : vector<16x32xf32>
    %c0_161 = arith.constant 0 : index
    %c0_162 = arith.constant 0 : index
    %201 = vector.load %arg3[%c0_161, %c0_162] : memref<2x8xi32, #tpu.memory_space<vmem>>, vector<2x8xi32>
    %202 = arith.sitofp %201 : vector<2x8xi32> to vector<2x8xf32>
    %cst_163 = arith.constant 1.000000e+00 : f32
    %203 = vector.broadcast %cst_163 : f32 to vector<2x8xf32>
    %204 = arith.subf %203, %202 : vector<2x8xf32>
    %cst_164 = arith.constant -1.000000e+04 : f32
    %205 = vector.broadcast %cst_164 : f32 to vector<2x8xf32>
    %206 = arith.mulf %204, %205 : vector<2x8xf32>
    %c0_165 = arith.constant 0 : index
    %c0_166 = arith.constant 0 : index
    %c0_167 = arith.constant 0 : index
    %207 = vector.load %arg7[%c0_165, %c0_166, %c0_167] : memref<2x8x128xf32, #tpu.memory_space<vmem>>, vector<1x1x96xf32>
    %208 = vector.shape_cast %207 : vector<1x1x96xf32> to vector<1x96xf32>
    %c0_168 = arith.constant 0 : index
    %c1_169 = arith.constant 1 : index
    %c0_170 = arith.constant 0 : index
    %209 = vector.load %arg7[%c0_168, %c1_169, %c0_170] : memref<2x8x128xf32, #tpu.memory_space<vmem>>, vector<1x1x32xf32>
    %210 = vector.shape_cast %209 : vector<1x1x32xf32> to vector<1x32xf32>
    %c0_171 = arith.constant 0 : index
    %c2_172 = arith.constant 2 : index
    %c0_173 = arith.constant 0 : index
    %211 = vector.load %arg7[%c0_171, %c2_172, %c0_173] : memref<2x8x128xf32, #tpu.memory_space<vmem>>, vector<1x1x32xf32>
    %212 = vector.shape_cast %211 : vector<1x1x32xf32> to vector<1x32xf32>
    %c0_174 = arith.constant 0 : index
    %c3_175 = arith.constant 3 : index
    %c0_176 = arith.constant 0 : index
    %213 = vector.load %arg7[%c0_174, %c3_175, %c0_176] : memref<2x8x128xf32, #tpu.memory_space<vmem>>, vector<1x1x32xf32>
    %214 = vector.shape_cast %213 : vector<1x1x32xf32> to vector<1x32xf32>
    %c0_177 = arith.constant 0 : index
    %c4_178 = arith.constant 4 : index
    %c0_179 = arith.constant 0 : index
    %215 = vector.load %arg7[%c0_177, %c4_178, %c0_179] : memref<2x8x128xf32, #tpu.memory_space<vmem>>, vector<1x1x64xf32>
    %216 = vector.shape_cast %215 : vector<1x1x64xf32> to vector<1x64xf32>
    %c0_180 = arith.constant 0 : index
    %c5_181 = arith.constant 5 : index
    %c0_182 = arith.constant 0 : index
    %217 = vector.load %arg7[%c0_180, %c5_181, %c0_182] : memref<2x8x128xf32, #tpu.memory_space<vmem>>, vector<1x1x32xf32>
    %218 = vector.shape_cast %217 : vector<1x1x32xf32> to vector<1x32xf32>
    %c0_183 = arith.constant 0 : index
    %c6_184 = arith.constant 6 : index
    %c0_185 = arith.constant 0 : index
    %219 = vector.load %arg7[%c0_183, %c6_184, %c0_185] : memref<2x8x128xf32, #tpu.memory_space<vmem>>, vector<1x1x32xf32>
    %220 = vector.shape_cast %219 : vector<1x1x32xf32> to vector<1x32xf32>
    %c0_186 = arith.constant 0 : index
    %c7_187 = arith.constant 7 : index
    %c0_188 = arith.constant 0 : index
    %221 = vector.load %arg7[%c0_186, %c7_187, %c0_188] : memref<2x8x128xf32, #tpu.memory_space<vmem>>, vector<1x1x32xf32>
    %222 = vector.shape_cast %221 : vector<1x1x32xf32> to vector<1x32xf32>
    %c0_189 = arith.constant 0 : index
    %c0_190 = arith.constant 0 : index
    %c0_191 = arith.constant 0 : index
    %223 = vector.load %arg6[%c0_189, %c0_190, %c0_191] : memref<2x32x256xf32, #tpu.memory_space<vmem>>, vector<1x32x96xf32>
    %224 = vector.shape_cast %223 : vector<1x32x96xf32> to vector<32x96xf32>
    %cst_192 = arith.constant dense<0.000000e+00> : vector<16x96xf32>
    %225 = tpu.matmul %200, %224, %cst_192 {dimension_numbers = #tpu.dot_dimension_numbers<[1], [0], [0], [1], [0, 0, 1, 1], [], []>} : vector<16x32xf32>, vector<32x96xf32>, vector<16x96xf32> -> vector<16x96xf32>
    %226 = vector.broadcast %208 : vector<1x96xf32> to vector<16x96xf32>
    %227 = arith.addf %225, %226 : vector<16x96xf32>
    %228 = vector.extract_strided_slice %206 {offsets = [0, 0], sizes = [1, 8], strides = [1, 1]} : vector<2x8xf32> to vector<1x8xf32>
    %229 = vector.extract_strided_slice %227 {offsets = [0, 0], sizes = [8, 16], strides = [1, 1]} : vector<16x96xf32> to vector<8x16xf32>
    %230 = vector.extract_strided_slice %227 {offsets = [0, 16], sizes = [8, 16], strides = [1, 1]} : vector<16x96xf32> to vector<8x16xf32>
    %231 = vector.extract_strided_slice %227 {offsets = [0, 32], sizes = [8, 16], strides = [1, 1]} : vector<16x96xf32> to vector<8x16xf32>
    %cst_193 = arith.constant dense<0.000000e+00> : vector<8x8xf32>
    %232 = tpu.matmul %229, %230, %cst_193 {dimension_numbers = #tpu.dot_dimension_numbers<[1], [1], [0], [0], [0, 0, 1, 0], [], []>} : vector<8x16xf32>, vector<8x16xf32>, vector<8x8xf32> -> vector<8x8xf32>
    %cst_194 = arith.constant 2.500000e-01 : f32
    %233 = vector.broadcast %cst_194 : f32 to vector<8x8xf32>
    %234 = arith.mulf %232, %233 : vector<8x8xf32>
    %235 = vector.broadcast %228 : vector<1x8xf32> to vector<8x8xf32>
    %236 = arith.addf %234, %235 : vector<8x8xf32>
    %cst_195 = arith.constant dense<0xFF800000> : vector<8xf32>
    %237 = vector.multi_reduction <maximumf>, %236, %cst_195 [1] : vector<8x8xf32> to vector<8xf32>
    %238 = vector.shape_cast %237 : vector<8xf32> to vector<8x1xf32>
    %239 = vector.broadcast %238 : vector<8x1xf32> to vector<8x8xf32>
    %240 = arith.subf %236, %239 : vector<8x8xf32>
    %241 = math.exp %240 : vector<8x8xf32>
    %cst_196 = arith.constant dense<0.000000e+00> : vector<8xf32>
    %242 = vector.multi_reduction <add>, %241, %cst_196 [1] : vector<8x8xf32> to vector<8xf32>
    %243 = vector.shape_cast %242 : vector<8xf32> to vector<8x1xf32>
    %244 = vector.broadcast %243 : vector<8x1xf32> to vector<8x8xf32>
    %245 = arith.divf %241, %244 : vector<8x8xf32>
    %cst_197 = arith.constant dense<0.000000e+00> : vector<8x16xf32>
    %246 = tpu.matmul %245, %231, %cst_197 {dimension_numbers = #tpu.dot_dimension_numbers<[1], [0], [0], [1], [0, 0, 1, 1], [], []>} : vector<8x8xf32>, vector<8x16xf32>, vector<8x16xf32> -> vector<8x16xf32>
    %c0_198 = arith.constant 0 : index
    %c0_199 = arith.constant 0 : index
    %c96 = arith.constant 96 : index
    %247 = vector.load %arg6[%c0_198, %c0_199, %c96] : memref<2x32x256xf32, #tpu.memory_space<vmem>>, vector<1x16x32xf32>
    %248 = vector.shape_cast %247 : vector<1x16x32xf32> to vector<16x32xf32>
    %cst_200 = arith.constant dense<0.000000e+00> : vector<8x32xf32>
    %249 = tpu.matmul %246, %248, %cst_200 {dimension_numbers = #tpu.dot_dimension_numbers<[1], [0], [0], [1], [0, 0, 1, 1], [], []>} : vector<8x16xf32>, vector<16x32xf32>, vector<8x32xf32> -> vector<8x32xf32>
    %250 = vector.extract_strided_slice %227 {offsets = [0, 48], sizes = [8, 16], strides = [1, 1]} : vector<16x96xf32> to vector<8x16xf32>
    %251 = vector.extract_strided_slice %227 {offsets = [0, 64], sizes = [8, 16], strides = [1, 1]} : vector<16x96xf32> to vector<8x16xf32>
    %252 = vector.extract_strided_slice %227 {offsets = [0, 80], sizes = [8, 16], strides = [1, 1]} : vector<16x96xf32> to vector<8x16xf32>
    %cst_201 = arith.constant dense<0.000000e+00> : vector<8x8xf32>
    %253 = tpu.matmul %250, %251, %cst_201 {dimension_numbers = #tpu.dot_dimension_numbers<[1], [1], [0], [0], [0, 0, 1, 0], [], []>} : vector<8x16xf32>, vector<8x16xf32>, vector<8x8xf32> -> vector<8x8xf32>
    %cst_202 = arith.constant 2.500000e-01 : f32
    %254 = vector.broadcast %cst_202 : f32 to vector<8x8xf32>
    %255 = arith.mulf %253, %254 : vector<8x8xf32>
    %256 = vector.broadcast %228 : vector<1x8xf32> to vector<8x8xf32>
    %257 = arith.addf %255, %256 : vector<8x8xf32>
    %cst_203 = arith.constant dense<0xFF800000> : vector<8xf32>
    %258 = vector.multi_reduction <maximumf>, %257, %cst_203 [1] : vector<8x8xf32> to vector<8xf32>
    %259 = vector.shape_cast %258 : vector<8xf32> to vector<8x1xf32>
    %260 = vector.broadcast %259 : vector<8x1xf32> to vector<8x8xf32>
    %261 = arith.subf %257, %260 : vector<8x8xf32>
    %262 = math.exp %261 : vector<8x8xf32>
    %cst_204 = arith.constant dense<0.000000e+00> : vector<8xf32>
    %263 = vector.multi_reduction <add>, %262, %cst_204 [1] : vector<8x8xf32> to vector<8xf32>
    %264 = vector.shape_cast %263 : vector<8xf32> to vector<8x1xf32>
    %265 = vector.broadcast %264 : vector<8x1xf32> to vector<8x8xf32>
    %266 = arith.divf %262, %265 : vector<8x8xf32>
    %cst_205 = arith.constant dense<0.000000e+00> : vector<8x16xf32>
    %267 = tpu.matmul %266, %252, %cst_205 {dimension_numbers = #tpu.dot_dimension_numbers<[1], [0], [0], [1], [0, 0, 1, 1], [], []>} : vector<8x8xf32>, vector<8x16xf32>, vector<8x16xf32> -> vector<8x16xf32>
    %c0_206 = arith.constant 0 : index
    %c16 = arith.constant 16 : index
    %c96_207 = arith.constant 96 : index
    %268 = vector.load %arg6[%c0_206, %c16, %c96_207] : memref<2x32x256xf32, #tpu.memory_space<vmem>>, vector<1x16x32xf32>
    %269 = vector.shape_cast %268 : vector<1x16x32xf32> to vector<16x32xf32>
    %cst_208 = arith.constant dense<0.000000e+00> : vector<8x32xf32>
    %270 = tpu.matmul %267, %269, %cst_208 {dimension_numbers = #tpu.dot_dimension_numbers<[1], [0], [0], [1], [0, 0, 1, 1], [], []>} : vector<8x16xf32>, vector<16x32xf32>, vector<8x32xf32> -> vector<8x32xf32>
    %271 = arith.addf %249, %270 : vector<8x32xf32>
    %272 = vector.extract_strided_slice %206 {offsets = [1, 0], sizes = [1, 8], strides = [1, 1]} : vector<2x8xf32> to vector<1x8xf32>
    %273 = vector.extract_strided_slice %227 {offsets = [8, 0], sizes = [8, 16], strides = [1, 1]} : vector<16x96xf32> to vector<8x16xf32>
    %274 = vector.extract_strided_slice %227 {offsets = [8, 16], sizes = [8, 16], strides = [1, 1]} : vector<16x96xf32> to vector<8x16xf32>
    %275 = vector.extract_strided_slice %227 {offsets = [8, 32], sizes = [8, 16], strides = [1, 1]} : vector<16x96xf32> to vector<8x16xf32>
    %cst_209 = arith.constant dense<0.000000e+00> : vector<8x8xf32>
    %276 = tpu.matmul %273, %274, %cst_209 {dimension_numbers = #tpu.dot_dimension_numbers<[1], [1], [0], [0], [0, 0, 1, 0], [], []>} : vector<8x16xf32>, vector<8x16xf32>, vector<8x8xf32> -> vector<8x8xf32>
    %cst_210 = arith.constant 2.500000e-01 : f32
    %277 = vector.broadcast %cst_210 : f32 to vector<8x8xf32>
    %278 = arith.mulf %276, %277 : vector<8x8xf32>
    %279 = vector.broadcast %272 : vector<1x8xf32> to vector<8x8xf32>
    %280 = arith.addf %278, %279 : vector<8x8xf32>
    %cst_211 = arith.constant dense<0xFF800000> : vector<8xf32>
    %281 = vector.multi_reduction <maximumf>, %280, %cst_211 [1] : vector<8x8xf32> to vector<8xf32>
    %282 = vector.shape_cast %281 : vector<8xf32> to vector<8x1xf32>
    %283 = vector.broadcast %282 : vector<8x1xf32> to vector<8x8xf32>
    %284 = arith.subf %280, %283 : vector<8x8xf32>
    %285 = math.exp %284 : vector<8x8xf32>
    %cst_212 = arith.constant dense<0.000000e+00> : vector<8xf32>
    %286 = vector.multi_reduction <add>, %285, %cst_212 [1] : vector<8x8xf32> to vector<8xf32>
    %287 = vector.shape_cast %286 : vector<8xf32> to vector<8x1xf32>
    %288 = vector.broadcast %287 : vector<8x1xf32> to vector<8x8xf32>
    %289 = arith.divf %285, %288 : vector<8x8xf32>
    %cst_213 = arith.constant dense<0.000000e+00> : vector<8x16xf32>
    %290 = tpu.matmul %289, %275, %cst_213 {dimension_numbers = #tpu.dot_dimension_numbers<[1], [0], [0], [1], [0, 0, 1, 1], [], []>} : vector<8x8xf32>, vector<8x16xf32>, vector<8x16xf32> -> vector<8x16xf32>
    %c0_214 = arith.constant 0 : index
    %c0_215 = arith.constant 0 : index
    %c96_216 = arith.constant 96 : index
    %291 = vector.load %arg6[%c0_214, %c0_215, %c96_216] : memref<2x32x256xf32, #tpu.memory_space<vmem>>, vector<1x16x32xf32>
    %292 = vector.shape_cast %291 : vector<1x16x32xf32> to vector<16x32xf32>
    %cst_217 = arith.constant dense<0.000000e+00> : vector<8x32xf32>
    %293 = tpu.matmul %290, %292, %cst_217 {dimension_numbers = #tpu.dot_dimension_numbers<[1], [0], [0], [1], [0, 0, 1, 1], [], []>} : vector<8x16xf32>, vector<16x32xf32>, vector<8x32xf32> -> vector<8x32xf32>
    %294 = vector.extract_strided_slice %227 {offsets = [8, 48], sizes = [8, 16], strides = [1, 1]} : vector<16x96xf32> to vector<8x16xf32>
    %295 = vector.extract_strided_slice %227 {offsets = [8, 64], sizes = [8, 16], strides = [1, 1]} : vector<16x96xf32> to vector<8x16xf32>
    %296 = vector.extract_strided_slice %227 {offsets = [8, 80], sizes = [8, 16], strides = [1, 1]} : vector<16x96xf32> to vector<8x16xf32>
    %cst_218 = arith.constant dense<0.000000e+00> : vector<8x8xf32>
    %297 = tpu.matmul %294, %295, %cst_218 {dimension_numbers = #tpu.dot_dimension_numbers<[1], [1], [0], [0], [0, 0, 1, 0], [], []>} : vector<8x16xf32>, vector<8x16xf32>, vector<8x8xf32> -> vector<8x8xf32>
    %cst_219 = arith.constant 2.500000e-01 : f32
    %298 = vector.broadcast %cst_219 : f32 to vector<8x8xf32>
    %299 = arith.mulf %297, %298 : vector<8x8xf32>
    %300 = vector.broadcast %272 : vector<1x8xf32> to vector<8x8xf32>
    %301 = arith.addf %299, %300 : vector<8x8xf32>
    %cst_220 = arith.constant dense<0xFF800000> : vector<8xf32>
    %302 = vector.multi_reduction <maximumf>, %301, %cst_220 [1] : vector<8x8xf32> to vector<8xf32>
    %303 = vector.shape_cast %302 : vector<8xf32> to vector<8x1xf32>
    %304 = vector.broadcast %303 : vector<8x1xf32> to vector<8x8xf32>
    %305 = arith.subf %301, %304 : vector<8x8xf32>
    %306 = math.exp %305 : vector<8x8xf32>
    %cst_221 = arith.constant dense<0.000000e+00> : vector<8xf32>
    %307 = vector.multi_reduction <add>, %306, %cst_221 [1] : vector<8x8xf32> to vector<8xf32>
    %308 = vector.shape_cast %307 : vector<8xf32> to vector<8x1xf32>
    %309 = vector.broadcast %308 : vector<8x1xf32> to vector<8x8xf32>
    %310 = arith.divf %306, %309 : vector<8x8xf32>
    %cst_222 = arith.constant dense<0.000000e+00> : vector<8x16xf32>
    %311 = tpu.matmul %310, %296, %cst_222 {dimension_numbers = #tpu.dot_dimension_numbers<[1], [0], [0], [1], [0, 0, 1, 1], [], []>} : vector<8x8xf32>, vector<8x16xf32>, vector<8x16xf32> -> vector<8x16xf32>
    %c0_223 = arith.constant 0 : index
    %c16_224 = arith.constant 16 : index
    %c96_225 = arith.constant 96 : index
    %312 = vector.load %arg6[%c0_223, %c16_224, %c96_225] : memref<2x32x256xf32, #tpu.memory_space<vmem>>, vector<1x16x32xf32>
    %313 = vector.shape_cast %312 : vector<1x16x32xf32> to vector<16x32xf32>
    %cst_226 = arith.constant dense<0.000000e+00> : vector<8x32xf32>
    %314 = tpu.matmul %311, %313, %cst_226 {dimension_numbers = #tpu.dot_dimension_numbers<[1], [0], [0], [1], [0, 0, 1, 1], [], []>} : vector<8x16xf32>, vector<16x32xf32>, vector<8x32xf32> -> vector<8x32xf32>
    %315 = arith.addf %293, %314 : vector<8x32xf32>
    %316 = tpu.concatenate %271, %315 in 0 : vector<8x32xf32>, vector<8x32xf32> -> vector<16x32xf32>
    %317 = vector.broadcast %210 : vector<1x32xf32> to vector<16x32xf32>
    %318 = arith.addf %316, %317 : vector<16x32xf32>
    %319 = arith.addf %200, %318 : vector<16x32xf32>
    %cst_227 = arith.constant dense<0.000000e+00> : vector<16xf32>
    %320 = vector.multi_reduction <add>, %319, %cst_227 [1] : vector<16x32xf32> to vector<16xf32>
    %321 = vector.shape_cast %320 : vector<16xf32> to vector<16x1xf32>
    %cst_228 = arith.constant 3.200000e+01 : f32
    %322 = vector.broadcast %cst_228 : f32 to vector<16x1xf32>
    %323 = arith.divf %321, %322 : vector<16x1xf32>
    %324 = vector.broadcast %323 : vector<16x1xf32> to vector<16x32xf32>
    %325 = arith.subf %319, %324 : vector<16x32xf32>
    %326 = arith.mulf %325, %325 : vector<16x32xf32>
    %cst_229 = arith.constant dense<0.000000e+00> : vector<16xf32>
    %327 = vector.multi_reduction <add>, %326, %cst_229 [1] : vector<16x32xf32> to vector<16xf32>
    %328 = vector.shape_cast %327 : vector<16xf32> to vector<16x1xf32>
    %cst_230 = arith.constant 3.200000e+01 : f32
    %329 = vector.broadcast %cst_230 : f32 to vector<16x1xf32>
    %330 = arith.divf %328, %329 : vector<16x1xf32>
    %331 = vector.broadcast %323 : vector<16x1xf32> to vector<16x32xf32>
    %332 = arith.subf %319, %331 : vector<16x32xf32>
    %cst_231 = arith.constant 9.99999996E-13 : f32
    %333 = vector.broadcast %cst_231 : f32 to vector<16x1xf32>
    %334 = arith.addf %330, %333 : vector<16x1xf32>
    %335 = math.rsqrt %334 : vector<16x1xf32>
    %336 = vector.broadcast %335 : vector<16x1xf32> to vector<16x32xf32>
    %337 = arith.mulf %332, %336 : vector<16x32xf32>
    %338 = vector.broadcast %212 : vector<1x32xf32> to vector<16x32xf32>
    %339 = arith.mulf %337, %338 : vector<16x32xf32>
    %340 = vector.broadcast %214 : vector<1x32xf32> to vector<16x32xf32>
    %341 = arith.addf %339, %340 : vector<16x32xf32>
    %c0_232 = arith.constant 0 : index
    %c0_233 = arith.constant 0 : index
    %c128 = arith.constant 128 : index
    %342 = vector.load %arg6[%c0_232, %c0_233, %c128] : memref<2x32x256xf32, #tpu.memory_space<vmem>>, vector<1x32x64xf32>
    %343 = vector.shape_cast %342 : vector<1x32x64xf32> to vector<32x64xf32>
    %cst_234 = arith.constant dense<0.000000e+00> : vector<16x64xf32>
    %344 = tpu.matmul %341, %343, %cst_234 {dimension_numbers = #tpu.dot_dimension_numbers<[1], [0], [0], [1], [0, 0, 1, 1], [], []>} : vector<16x32xf32>, vector<32x64xf32>, vector<16x64xf32> -> vector<16x64xf32>
    %345 = vector.broadcast %216 : vector<1x64xf32> to vector<16x64xf32>
    %346 = arith.addf %344, %345 : vector<16x64xf32>
    %cst_235 = arith.constant 5.000000e-01 : f32
    %347 = vector.broadcast %cst_235 : f32 to vector<16x64xf32>
    %348 = arith.mulf %347, %346 : vector<16x64xf32>
    %cst_236 = arith.constant 4.471500e-02 : f32
    %349 = vector.broadcast %cst_236 : f32 to vector<16x64xf32>
    %350 = arith.mulf %349, %346 : vector<16x64xf32>
    %351 = arith.mulf %350, %346 : vector<16x64xf32>
    %352 = arith.mulf %351, %346 : vector<16x64xf32>
    %353 = arith.addf %346, %352 : vector<16x64xf32>
    %cst_237 = arith.constant 0.797884583 : f32
    %354 = vector.broadcast %cst_237 : f32 to vector<16x64xf32>
    %355 = arith.mulf %354, %353 : vector<16x64xf32>
    %356 = math.tanh %355 : vector<16x64xf32>
    %cst_238 = arith.constant 1.000000e+00 : f32
    %357 = vector.broadcast %cst_238 : f32 to vector<16x64xf32>
    %358 = arith.addf %357, %356 : vector<16x64xf32>
    %359 = arith.mulf %348, %358 : vector<16x64xf32>
    %c0_239 = arith.constant 0 : index
    %c0_240 = arith.constant 0 : index
    %c192 = arith.constant 192 : index
    %360 = vector.load %arg6[%c0_239, %c0_240, %c192] : memref<2x32x256xf32, #tpu.memory_space<vmem>>, vector<1x32x64xf32>
    %361 = vector.shape_cast %360 : vector<1x32x64xf32> to vector<32x64xf32>
    %cst_241 = arith.constant dense<0.000000e+00> : vector<16x32xf32>
    %362 = tpu.matmul %359, %361, %cst_241 {dimension_numbers = #tpu.dot_dimension_numbers<[1], [1], [0], [0], [0, 0, 1, 0], [], []>} : vector<16x64xf32>, vector<32x64xf32>, vector<16x32xf32> -> vector<16x32xf32>
    %363 = vector.broadcast %218 : vector<1x32xf32> to vector<16x32xf32>
    %364 = arith.addf %362, %363 : vector<16x32xf32>
    %365 = arith.addf %341, %364 : vector<16x32xf32>
    %cst_242 = arith.constant dense<0.000000e+00> : vector<16xf32>
    %366 = vector.multi_reduction <add>, %365, %cst_242 [1] : vector<16x32xf32> to vector<16xf32>
    %367 = vector.shape_cast %366 : vector<16xf32> to vector<16x1xf32>
    %cst_243 = arith.constant 3.200000e+01 : f32
    %368 = vector.broadcast %cst_243 : f32 to vector<16x1xf32>
    %369 = arith.divf %367, %368 : vector<16x1xf32>
    %370 = vector.broadcast %369 : vector<16x1xf32> to vector<16x32xf32>
    %371 = arith.subf %365, %370 : vector<16x32xf32>
    %372 = arith.mulf %371, %371 : vector<16x32xf32>
    %cst_244 = arith.constant dense<0.000000e+00> : vector<16xf32>
    %373 = vector.multi_reduction <add>, %372, %cst_244 [1] : vector<16x32xf32> to vector<16xf32>
    %374 = vector.shape_cast %373 : vector<16xf32> to vector<16x1xf32>
    %cst_245 = arith.constant 3.200000e+01 : f32
    %375 = vector.broadcast %cst_245 : f32 to vector<16x1xf32>
    %376 = arith.divf %374, %375 : vector<16x1xf32>
    %377 = vector.broadcast %369 : vector<16x1xf32> to vector<16x32xf32>
    %378 = arith.subf %365, %377 : vector<16x32xf32>
    %cst_246 = arith.constant 9.99999996E-13 : f32
    %379 = vector.broadcast %cst_246 : f32 to vector<16x1xf32>
    %380 = arith.addf %376, %379 : vector<16x1xf32>
    %381 = math.rsqrt %380 : vector<16x1xf32>
    %382 = vector.broadcast %381 : vector<16x1xf32> to vector<16x32xf32>
    %383 = arith.mulf %378, %382 : vector<16x32xf32>
    %384 = vector.broadcast %220 : vector<1x32xf32> to vector<16x32xf32>
    %385 = arith.mulf %383, %384 : vector<16x32xf32>
    %386 = vector.broadcast %222 : vector<1x32xf32> to vector<16x32xf32>
    %387 = arith.addf %385, %386 : vector<16x32xf32>
    %c1_247 = arith.constant 1 : index
    %c0_248 = arith.constant 0 : index
    %c0_249 = arith.constant 0 : index
    %388 = vector.load %arg7[%c1_247, %c0_248, %c0_249] : memref<2x8x128xf32, #tpu.memory_space<vmem>>, vector<1x1x96xf32>
    %389 = vector.shape_cast %388 : vector<1x1x96xf32> to vector<1x96xf32>
    %c1_250 = arith.constant 1 : index
    %c1_251 = arith.constant 1 : index
    %c0_252 = arith.constant 0 : index
    %390 = vector.load %arg7[%c1_250, %c1_251, %c0_252] : memref<2x8x128xf32, #tpu.memory_space<vmem>>, vector<1x1x32xf32>
    %391 = vector.shape_cast %390 : vector<1x1x32xf32> to vector<1x32xf32>
    %c1_253 = arith.constant 1 : index
    %c2_254 = arith.constant 2 : index
    %c0_255 = arith.constant 0 : index
    %392 = vector.load %arg7[%c1_253, %c2_254, %c0_255] : memref<2x8x128xf32, #tpu.memory_space<vmem>>, vector<1x1x32xf32>
    %393 = vector.shape_cast %392 : vector<1x1x32xf32> to vector<1x32xf32>
    %c1_256 = arith.constant 1 : index
    %c3_257 = arith.constant 3 : index
    %c0_258 = arith.constant 0 : index
    %394 = vector.load %arg7[%c1_256, %c3_257, %c0_258] : memref<2x8x128xf32, #tpu.memory_space<vmem>>, vector<1x1x32xf32>
    %395 = vector.shape_cast %394 : vector<1x1x32xf32> to vector<1x32xf32>
    %c1_259 = arith.constant 1 : index
    %c4_260 = arith.constant 4 : index
    %c0_261 = arith.constant 0 : index
    %396 = vector.load %arg7[%c1_259, %c4_260, %c0_261] : memref<2x8x128xf32, #tpu.memory_space<vmem>>, vector<1x1x64xf32>
    %397 = vector.shape_cast %396 : vector<1x1x64xf32> to vector<1x64xf32>
    %c1_262 = arith.constant 1 : index
    %c5_263 = arith.constant 5 : index
    %c0_264 = arith.constant 0 : index
    %398 = vector.load %arg7[%c1_262, %c5_263, %c0_264] : memref<2x8x128xf32, #tpu.memory_space<vmem>>, vector<1x1x32xf32>
    %399 = vector.shape_cast %398 : vector<1x1x32xf32> to vector<1x32xf32>
    %c1_265 = arith.constant 1 : index
    %c6_266 = arith.constant 6 : index
    %c0_267 = arith.constant 0 : index
    %400 = vector.load %arg7[%c1_265, %c6_266, %c0_267] : memref<2x8x128xf32, #tpu.memory_space<vmem>>, vector<1x1x32xf32>
    %401 = vector.shape_cast %400 : vector<1x1x32xf32> to vector<1x32xf32>
    %c1_268 = arith.constant 1 : index
    %c7_269 = arith.constant 7 : index
    %c0_270 = arith.constant 0 : index
    %402 = vector.load %arg7[%c1_268, %c7_269, %c0_270] : memref<2x8x128xf32, #tpu.memory_space<vmem>>, vector<1x1x32xf32>
    %403 = vector.shape_cast %402 : vector<1x1x32xf32> to vector<1x32xf32>
    %c1_271 = arith.constant 1 : index
    %c0_272 = arith.constant 0 : index
    %c0_273 = arith.constant 0 : index
    %404 = vector.load %arg6[%c1_271, %c0_272, %c0_273] : memref<2x32x256xf32, #tpu.memory_space<vmem>>, vector<1x32x96xf32>
    %405 = vector.shape_cast %404 : vector<1x32x96xf32> to vector<32x96xf32>
    %cst_274 = arith.constant dense<0.000000e+00> : vector<16x96xf32>
    %406 = tpu.matmul %387, %405, %cst_274 {dimension_numbers = #tpu.dot_dimension_numbers<[1], [0], [0], [1], [0, 0, 1, 1], [], []>} : vector<16x32xf32>, vector<32x96xf32>, vector<16x96xf32> -> vector<16x96xf32>
    %407 = vector.broadcast %389 : vector<1x96xf32> to vector<16x96xf32>
    %408 = arith.addf %406, %407 : vector<16x96xf32>
    %409 = vector.extract_strided_slice %206 {offsets = [0, 0], sizes = [1, 8], strides = [1, 1]} : vector<2x8xf32> to vector<1x8xf32>
    %410 = vector.extract_strided_slice %408 {offsets = [0, 0], sizes = [8, 16], strides = [1, 1]} : vector<16x96xf32> to vector<8x16xf32>
    %411 = vector.extract_strided_slice %408 {offsets = [0, 16], sizes = [8, 16], strides = [1, 1]} : vector<16x96xf32> to vector<8x16xf32>
    %412 = vector.extract_strided_slice %408 {offsets = [0, 32], sizes = [8, 16], strides = [1, 1]} : vector<16x96xf32> to vector<8x16xf32>
    %cst_275 = arith.constant dense<0.000000e+00> : vector<8x8xf32>
    %413 = tpu.matmul %410, %411, %cst_275 {dimension_numbers = #tpu.dot_dimension_numbers<[1], [1], [0], [0], [0, 0, 1, 0], [], []>} : vector<8x16xf32>, vector<8x16xf32>, vector<8x8xf32> -> vector<8x8xf32>
    %cst_276 = arith.constant 2.500000e-01 : f32
    %414 = vector.broadcast %cst_276 : f32 to vector<8x8xf32>
    %415 = arith.mulf %413, %414 : vector<8x8xf32>
    %416 = vector.broadcast %409 : vector<1x8xf32> to vector<8x8xf32>
    %417 = arith.addf %415, %416 : vector<8x8xf32>
    %cst_277 = arith.constant dense<0xFF800000> : vector<8xf32>
    %418 = vector.multi_reduction <maximumf>, %417, %cst_277 [1] : vector<8x8xf32> to vector<8xf32>
    %419 = vector.shape_cast %418 : vector<8xf32> to vector<8x1xf32>
    %420 = vector.broadcast %419 : vector<8x1xf32> to vector<8x8xf32>
    %421 = arith.subf %417, %420 : vector<8x8xf32>
    %422 = math.exp %421 : vector<8x8xf32>
    %cst_278 = arith.constant dense<0.000000e+00> : vector<8xf32>
    %423 = vector.multi_reduction <add>, %422, %cst_278 [1] : vector<8x8xf32> to vector<8xf32>
    %424 = vector.shape_cast %423 : vector<8xf32> to vector<8x1xf32>
    %425 = vector.broadcast %424 : vector<8x1xf32> to vector<8x8xf32>
    %426 = arith.divf %422, %425 : vector<8x8xf32>
    %cst_279 = arith.constant dense<0.000000e+00> : vector<8x16xf32>
    %427 = tpu.matmul %426, %412, %cst_279 {dimension_numbers = #tpu.dot_dimension_numbers<[1], [0], [0], [1], [0, 0, 1, 1], [], []>} : vector<8x8xf32>, vector<8x16xf32>, vector<8x16xf32> -> vector<8x16xf32>
    %c1_280 = arith.constant 1 : index
    %c0_281 = arith.constant 0 : index
    %c96_282 = arith.constant 96 : index
    %428 = vector.load %arg6[%c1_280, %c0_281, %c96_282] : memref<2x32x256xf32, #tpu.memory_space<vmem>>, vector<1x16x32xf32>
    %429 = vector.shape_cast %428 : vector<1x16x32xf32> to vector<16x32xf32>
    %cst_283 = arith.constant dense<0.000000e+00> : vector<8x32xf32>
    %430 = tpu.matmul %427, %429, %cst_283 {dimension_numbers = #tpu.dot_dimension_numbers<[1], [0], [0], [1], [0, 0, 1, 1], [], []>} : vector<8x16xf32>, vector<16x32xf32>, vector<8x32xf32> -> vector<8x32xf32>
    %431 = vector.extract_strided_slice %408 {offsets = [0, 48], sizes = [8, 16], strides = [1, 1]} : vector<16x96xf32> to vector<8x16xf32>
    %432 = vector.extract_strided_slice %408 {offsets = [0, 64], sizes = [8, 16], strides = [1, 1]} : vector<16x96xf32> to vector<8x16xf32>
    %433 = vector.extract_strided_slice %408 {offsets = [0, 80], sizes = [8, 16], strides = [1, 1]} : vector<16x96xf32> to vector<8x16xf32>
    %cst_284 = arith.constant dense<0.000000e+00> : vector<8x8xf32>
    %434 = tpu.matmul %431, %432, %cst_284 {dimension_numbers = #tpu.dot_dimension_numbers<[1], [1], [0], [0], [0, 0, 1, 0], [], []>} : vector<8x16xf32>, vector<8x16xf32>, vector<8x8xf32> -> vector<8x8xf32>
    %cst_285 = arith.constant 2.500000e-01 : f32
    %435 = vector.broadcast %cst_285 : f32 to vector<8x8xf32>
    %436 = arith.mulf %434, %435 : vector<8x8xf32>
    %437 = vector.broadcast %409 : vector<1x8xf32> to vector<8x8xf32>
    %438 = arith.addf %436, %437 : vector<8x8xf32>
    %cst_286 = arith.constant dense<0xFF800000> : vector<8xf32>
    %439 = vector.multi_reduction <maximumf>, %438, %cst_286 [1] : vector<8x8xf32> to vector<8xf32>
    %440 = vector.shape_cast %439 : vector<8xf32> to vector<8x1xf32>
    %441 = vector.broadcast %440 : vector<8x1xf32> to vector<8x8xf32>
    %442 = arith.subf %438, %441 : vector<8x8xf32>
    %443 = math.exp %442 : vector<8x8xf32>
    %cst_287 = arith.constant dense<0.000000e+00> : vector<8xf32>
    %444 = vector.multi_reduction <add>, %443, %cst_287 [1] : vector<8x8xf32> to vector<8xf32>
    %445 = vector.shape_cast %444 : vector<8xf32> to vector<8x1xf32>
    %446 = vector.broadcast %445 : vector<8x1xf32> to vector<8x8xf32>
    %447 = arith.divf %443, %446 : vector<8x8xf32>
    %cst_288 = arith.constant dense<0.000000e+00> : vector<8x16xf32>
    %448 = tpu.matmul %447, %433, %cst_288 {dimension_numbers = #tpu.dot_dimension_numbers<[1], [0], [0], [1], [0, 0, 1, 1], [], []>} : vector<8x8xf32>, vector<8x16xf32>, vector<8x16xf32> -> vector<8x16xf32>
    %c1_289 = arith.constant 1 : index
    %c16_290 = arith.constant 16 : index
    %c96_291 = arith.constant 96 : index
    %449 = vector.load %arg6[%c1_289, %c16_290, %c96_291] : memref<2x32x256xf32, #tpu.memory_space<vmem>>, vector<1x16x32xf32>
    %450 = vector.shape_cast %449 : vector<1x16x32xf32> to vector<16x32xf32>
    %cst_292 = arith.constant dense<0.000000e+00> : vector<8x32xf32>
    %451 = tpu.matmul %448, %450, %cst_292 {dimension_numbers = #tpu.dot_dimension_numbers<[1], [0], [0], [1], [0, 0, 1, 1], [], []>} : vector<8x16xf32>, vector<16x32xf32>, vector<8x32xf32> -> vector<8x32xf32>
    %452 = arith.addf %430, %451 : vector<8x32xf32>
    %453 = vector.extract_strided_slice %206 {offsets = [1, 0], sizes = [1, 8], strides = [1, 1]} : vector<2x8xf32> to vector<1x8xf32>
    %454 = vector.extract_strided_slice %408 {offsets = [8, 0], sizes = [8, 16], strides = [1, 1]} : vector<16x96xf32> to vector<8x16xf32>
    %455 = vector.extract_strided_slice %408 {offsets = [8, 16], sizes = [8, 16], strides = [1, 1]} : vector<16x96xf32> to vector<8x16xf32>
    %456 = vector.extract_strided_slice %408 {offsets = [8, 32], sizes = [8, 16], strides = [1, 1]} : vector<16x96xf32> to vector<8x16xf32>
    %cst_293 = arith.constant dense<0.000000e+00> : vector<8x8xf32>
    %457 = tpu.matmul %454, %455, %cst_293 {dimension_numbers = #tpu.dot_dimension_numbers<[1], [1], [0], [0], [0, 0, 1, 0], [], []>} : vector<8x16xf32>, vector<8x16xf32>, vector<8x8xf32> -> vector<8x8xf32>
    %cst_294 = arith.constant 2.500000e-01 : f32
    %458 = vector.broadcast %cst_294 : f32 to vector<8x8xf32>
    %459 = arith.mulf %457, %458 : vector<8x8xf32>
    %460 = vector.broadcast %453 : vector<1x8xf32> to vector<8x8xf32>
    %461 = arith.addf %459, %460 : vector<8x8xf32>
    %cst_295 = arith.constant dense<0xFF800000> : vector<8xf32>
    %462 = vector.multi_reduction <maximumf>, %461, %cst_295 [1] : vector<8x8xf32> to vector<8xf32>
    %463 = vector.shape_cast %462 : vector<8xf32> to vector<8x1xf32>
    %464 = vector.broadcast %463 : vector<8x1xf32> to vector<8x8xf32>
    %465 = arith.subf %461, %464 : vector<8x8xf32>
    %466 = math.exp %465 : vector<8x8xf32>
    %cst_296 = arith.constant dense<0.000000e+00> : vector<8xf32>
    %467 = vector.multi_reduction <add>, %466, %cst_296 [1] : vector<8x8xf32> to vector<8xf32>
    %468 = vector.shape_cast %467 : vector<8xf32> to vector<8x1xf32>
    %469 = vector.broadcast %468 : vector<8x1xf32> to vector<8x8xf32>
    %470 = arith.divf %466, %469 : vector<8x8xf32>
    %cst_297 = arith.constant dense<0.000000e+00> : vector<8x16xf32>
    %471 = tpu.matmul %470, %456, %cst_297 {dimension_numbers = #tpu.dot_dimension_numbers<[1], [0], [0], [1], [0, 0, 1, 1], [], []>} : vector<8x8xf32>, vector<8x16xf32>, vector<8x16xf32> -> vector<8x16xf32>
    %c1_298 = arith.constant 1 : index
    %c0_299 = arith.constant 0 : index
    %c96_300 = arith.constant 96 : index
    %472 = vector.load %arg6[%c1_298, %c0_299, %c96_300] : memref<2x32x256xf32, #tpu.memory_space<vmem>>, vector<1x16x32xf32>
    %473 = vector.shape_cast %472 : vector<1x16x32xf32> to vector<16x32xf32>
    %cst_301 = arith.constant dense<0.000000e+00> : vector<8x32xf32>
    %474 = tpu.matmul %471, %473, %cst_301 {dimension_numbers = #tpu.dot_dimension_numbers<[1], [0], [0], [1], [0, 0, 1, 1], [], []>} : vector<8x16xf32>, vector<16x32xf32>, vector<8x32xf32> -> vector<8x32xf32>
    %475 = vector.extract_strided_slice %408 {offsets = [8, 48], sizes = [8, 16], strides = [1, 1]} : vector<16x96xf32> to vector<8x16xf32>
    %476 = vector.extract_strided_slice %408 {offsets = [8, 64], sizes = [8, 16], strides = [1, 1]} : vector<16x96xf32> to vector<8x16xf32>
    %477 = vector.extract_strided_slice %408 {offsets = [8, 80], sizes = [8, 16], strides = [1, 1]} : vector<16x96xf32> to vector<8x16xf32>
    %cst_302 = arith.constant dense<0.000000e+00> : vector<8x8xf32>
    %478 = tpu.matmul %475, %476, %cst_302 {dimension_numbers = #tpu.dot_dimension_numbers<[1], [1], [0], [0], [0, 0, 1, 0], [], []>} : vector<8x16xf32>, vector<8x16xf32>, vector<8x8xf32> -> vector<8x8xf32>
    %cst_303 = arith.constant 2.500000e-01 : f32
    %479 = vector.broadcast %cst_303 : f32 to vector<8x8xf32>
    %480 = arith.mulf %478, %479 : vector<8x8xf32>
    %481 = vector.broadcast %453 : vector<1x8xf32> to vector<8x8xf32>
    %482 = arith.addf %480, %481 : vector<8x8xf32>
    %cst_304 = arith.constant dense<0xFF800000> : vector<8xf32>
    %483 = vector.multi_reduction <maximumf>, %482, %cst_304 [1] : vector<8x8xf32> to vector<8xf32>
    %484 = vector.shape_cast %483 : vector<8xf32> to vector<8x1xf32>
    %485 = vector.broadcast %484 : vector<8x1xf32> to vector<8x8xf32>
    %486 = arith.subf %482, %485 : vector<8x8xf32>
    %487 = math.exp %486 : vector<8x8xf32>
    %cst_305 = arith.constant dense<0.000000e+00> : vector<8xf32>
    %488 = vector.multi_reduction <add>, %487, %cst_305 [1] : vector<8x8xf32> to vector<8xf32>
    %489 = vector.shape_cast %488 : vector<8xf32> to vector<8x1xf32>
    %490 = vector.broadcast %489 : vector<8x1xf32> to vector<8x8xf32>
    %491 = arith.divf %487, %490 : vector<8x8xf32>
    %cst_306 = arith.constant dense<0.000000e+00> : vector<8x16xf32>
    %492 = tpu.matmul %491, %477, %cst_306 {dimension_numbers = #tpu.dot_dimension_numbers<[1], [0], [0], [1], [0, 0, 1, 1], [], []>} : vector<8x8xf32>, vector<8x16xf32>, vector<8x16xf32> -> vector<8x16xf32>
    %c1_307 = arith.constant 1 : index
    %c16_308 = arith.constant 16 : index
    %c96_309 = arith.constant 96 : index
    %493 = vector.load %arg6[%c1_307, %c16_308, %c96_309] : memref<2x32x256xf32, #tpu.memory_space<vmem>>, vector<1x16x32xf32>
    %494 = vector.shape_cast %493 : vector<1x16x32xf32> to vector<16x32xf32>
    %cst_310 = arith.constant dense<0.000000e+00> : vector<8x32xf32>
    %495 = tpu.matmul %492, %494, %cst_310 {dimension_numbers = #tpu.dot_dimension_numbers<[1], [0], [0], [1], [0, 0, 1, 1], [], []>} : vector<8x16xf32>, vector<16x32xf32>, vector<8x32xf32> -> vector<8x32xf32>
    %496 = arith.addf %474, %495 : vector<8x32xf32>
    %497 = tpu.concatenate %452, %496 in 0 : vector<8x32xf32>, vector<8x32xf32> -> vector<16x32xf32>
    %498 = vector.broadcast %391 : vector<1x32xf32> to vector<16x32xf32>
    %499 = arith.addf %497, %498 : vector<16x32xf32>
    %500 = arith.addf %387, %499 : vector<16x32xf32>
    %cst_311 = arith.constant dense<0.000000e+00> : vector<16xf32>
    %501 = vector.multi_reduction <add>, %500, %cst_311 [1] : vector<16x32xf32> to vector<16xf32>
    %502 = vector.shape_cast %501 : vector<16xf32> to vector<16x1xf32>
    %cst_312 = arith.constant 3.200000e+01 : f32
    %503 = vector.broadcast %cst_312 : f32 to vector<16x1xf32>
    %504 = arith.divf %502, %503 : vector<16x1xf32>
    %505 = vector.broadcast %504 : vector<16x1xf32> to vector<16x32xf32>
    %506 = arith.subf %500, %505 : vector<16x32xf32>
    %507 = arith.mulf %506, %506 : vector<16x32xf32>
    %cst_313 = arith.constant dense<0.000000e+00> : vector<16xf32>
    %508 = vector.multi_reduction <add>, %507, %cst_313 [1] : vector<16x32xf32> to vector<16xf32>
    %509 = vector.shape_cast %508 : vector<16xf32> to vector<16x1xf32>
    %cst_314 = arith.constant 3.200000e+01 : f32
    %510 = vector.broadcast %cst_314 : f32 to vector<16x1xf32>
    %511 = arith.divf %509, %510 : vector<16x1xf32>
    %512 = vector.broadcast %504 : vector<16x1xf32> to vector<16x32xf32>
    %513 = arith.subf %500, %512 : vector<16x32xf32>
    %cst_315 = arith.constant 9.99999996E-13 : f32
    %514 = vector.broadcast %cst_315 : f32 to vector<16x1xf32>
    %515 = arith.addf %511, %514 : vector<16x1xf32>
    %516 = math.rsqrt %515 : vector<16x1xf32>
    %517 = vector.broadcast %516 : vector<16x1xf32> to vector<16x32xf32>
    %518 = arith.mulf %513, %517 : vector<16x32xf32>
    %519 = vector.broadcast %393 : vector<1x32xf32> to vector<16x32xf32>
    %520 = arith.mulf %518, %519 : vector<16x32xf32>
    %521 = vector.broadcast %395 : vector<1x32xf32> to vector<16x32xf32>
    %522 = arith.addf %520, %521 : vector<16x32xf32>
    %c1_316 = arith.constant 1 : index
    %c0_317 = arith.constant 0 : index
    %c128_318 = arith.constant 128 : index
    %523 = vector.load %arg6[%c1_316, %c0_317, %c128_318] : memref<2x32x256xf32, #tpu.memory_space<vmem>>, vector<1x32x64xf32>
    %524 = vector.shape_cast %523 : vector<1x32x64xf32> to vector<32x64xf32>
    %cst_319 = arith.constant dense<0.000000e+00> : vector<16x64xf32>
    %525 = tpu.matmul %522, %524, %cst_319 {dimension_numbers = #tpu.dot_dimension_numbers<[1], [0], [0], [1], [0, 0, 1, 1], [], []>} : vector<16x32xf32>, vector<32x64xf32>, vector<16x64xf32> -> vector<16x64xf32>
    %526 = vector.broadcast %397 : vector<1x64xf32> to vector<16x64xf32>
    %527 = arith.addf %525, %526 : vector<16x64xf32>
    %cst_320 = arith.constant 5.000000e-01 : f32
    %528 = vector.broadcast %cst_320 : f32 to vector<16x64xf32>
    %529 = arith.mulf %528, %527 : vector<16x64xf32>
    %cst_321 = arith.constant 4.471500e-02 : f32
    %530 = vector.broadcast %cst_321 : f32 to vector<16x64xf32>
    %531 = arith.mulf %530, %527 : vector<16x64xf32>
    %532 = arith.mulf %531, %527 : vector<16x64xf32>
    %533 = arith.mulf %532, %527 : vector<16x64xf32>
    %534 = arith.addf %527, %533 : vector<16x64xf32>
    %cst_322 = arith.constant 0.797884583 : f32
    %535 = vector.broadcast %cst_322 : f32 to vector<16x64xf32>
    %536 = arith.mulf %535, %534 : vector<16x64xf32>
    %537 = math.tanh %536 : vector<16x64xf32>
    %cst_323 = arith.constant 1.000000e+00 : f32
    %538 = vector.broadcast %cst_323 : f32 to vector<16x64xf32>
    %539 = arith.addf %538, %537 : vector<16x64xf32>
    %540 = arith.mulf %529, %539 : vector<16x64xf32>
    %c1_324 = arith.constant 1 : index
    %c0_325 = arith.constant 0 : index
    %c192_326 = arith.constant 192 : index
    %541 = vector.load %arg6[%c1_324, %c0_325, %c192_326] : memref<2x32x256xf32, #tpu.memory_space<vmem>>, vector<1x32x64xf32>
    %542 = vector.shape_cast %541 : vector<1x32x64xf32> to vector<32x64xf32>
    %cst_327 = arith.constant dense<0.000000e+00> : vector<16x32xf32>
    %543 = tpu.matmul %540, %542, %cst_327 {dimension_numbers = #tpu.dot_dimension_numbers<[1], [1], [0], [0], [0, 0, 1, 0], [], []>} : vector<16x64xf32>, vector<32x64xf32>, vector<16x32xf32> -> vector<16x32xf32>
    %544 = vector.broadcast %399 : vector<1x32xf32> to vector<16x32xf32>
    %545 = arith.addf %543, %544 : vector<16x32xf32>
    %546 = arith.addf %522, %545 : vector<16x32xf32>
    %cst_328 = arith.constant dense<0.000000e+00> : vector<16xf32>
    %547 = vector.multi_reduction <add>, %546, %cst_328 [1] : vector<16x32xf32> to vector<16xf32>
    %548 = vector.shape_cast %547 : vector<16xf32> to vector<16x1xf32>
    %cst_329 = arith.constant 3.200000e+01 : f32
    %549 = vector.broadcast %cst_329 : f32 to vector<16x1xf32>
    %550 = arith.divf %548, %549 : vector<16x1xf32>
    %551 = vector.broadcast %550 : vector<16x1xf32> to vector<16x32xf32>
    %552 = arith.subf %546, %551 : vector<16x32xf32>
    %553 = arith.mulf %552, %552 : vector<16x32xf32>
    %cst_330 = arith.constant dense<0.000000e+00> : vector<16xf32>
    %554 = vector.multi_reduction <add>, %553, %cst_330 [1] : vector<16x32xf32> to vector<16xf32>
    %555 = vector.shape_cast %554 : vector<16xf32> to vector<16x1xf32>
    %cst_331 = arith.constant 3.200000e+01 : f32
    %556 = vector.broadcast %cst_331 : f32 to vector<16x1xf32>
    %557 = arith.divf %555, %556 : vector<16x1xf32>
    %558 = vector.broadcast %550 : vector<16x1xf32> to vector<16x32xf32>
    %559 = arith.subf %546, %558 : vector<16x32xf32>
    %cst_332 = arith.constant 9.99999996E-13 : f32
    %560 = vector.broadcast %cst_332 : f32 to vector<16x1xf32>
    %561 = arith.addf %557, %560 : vector<16x1xf32>
    %562 = math.rsqrt %561 : vector<16x1xf32>
    %563 = vector.broadcast %562 : vector<16x1xf32> to vector<16x32xf32>
    %564 = arith.mulf %559, %563 : vector<16x32xf32>
    %565 = vector.broadcast %401 : vector<1x32xf32> to vector<16x32xf32>
    %566 = arith.mulf %564, %565 : vector<16x32xf32>
    %567 = vector.broadcast %403 : vector<1x32xf32> to vector<16x32xf32>
    %568 = arith.addf %566, %567 : vector<16x32xf32>
    %569 = vector.extract_strided_slice %568 {offsets = [0, 0], sizes = [1, 32], strides = [1, 1]} : vector<16x32xf32> to vector<1x32xf32>
    %570 = vector.extract_strided_slice %568 {offsets = [8, 0], sizes = [1, 32], strides = [1, 1]} : vector<16x32xf32> to vector<1x32xf32>
    %571 = tpu.concatenate %569, %570 in 0 : vector<1x32xf32>, vector<1x32xf32> -> vector<2x32xf32>
    %c118 = arith.constant 118 : index
    %c0_333 = arith.constant 0 : index
    %572 = vector.load %arg4[%c118, %c0_333] : memref<122x32xf32, #tpu.memory_space<vmem>>, vector<4x32xf32>
    %c2_334 = arith.constant 2 : index
    %c0_335 = arith.constant 0 : index
    %573 = vector.load %arg5[%c2_334, %c0_335] : memref<3x32xf32, #tpu.memory_space<vmem>>, vector<1x4xf32>
    %cst_336 = arith.constant dense<0.000000e+00> : vector<2x4xf32>
    %574 = tpu.matmul %571, %572, %cst_336 {dimension_numbers = #tpu.dot_dimension_numbers<[1], [1], [0], [0], [0, 0, 1, 0], [], []>} : vector<2x32xf32>, vector<4x32xf32>, vector<2x4xf32> -> vector<2x4xf32>
    %575 = vector.broadcast %573 : vector<1x4xf32> to vector<2x4xf32>
    %576 = arith.addf %574, %575 : vector<2x4xf32>
    %c0_337 = arith.constant 0 : index
    %c0_338 = arith.constant 0 : index
    %577 = vector.load %arg8[%c0_337, %c0_338] : memref<2x32xf32, #tpu.memory_space<vmem>>, vector<2x32xf32>
    tpu.vector_store %arg8[%c0_337, %c0_338], %571 {strides = array<i32>} : memref<2x32xf32, #tpu.memory_space<vmem>>, vector<2x32xf32>,
    %c0_339 = arith.constant 0 : index
    %c0_340 = arith.constant 0 : index
    %578 = vector.load %arg9[%c0_339, %c0_340] : memref<2x4xf32, #tpu.memory_space<vmem>>, vector<2x4xf32>
    tpu.vector_store %arg9[%c0_339, %c0_340], %576 {strides = array<i32>} : memref<2x4xf32, #tpu.memory_space<vmem>>, vector<2x4xf32>,
    return
  }
  func.func @transform_0(%arg0: i32, %arg1: memref<2x8xi32, #tpu.memory_space<smem>>, %arg2: memref<2x8xi32, #tpu.memory_space<smem>>) -> (i32, i32) {
    %c0_i32 = arith.constant 0 : i32
    %c0_i32_0 = arith.constant 0 : i32
    %c0_i32_1 = arith.constant 0 : i32
    return %c0_i32, %c0_i32_0 : i32, i32
  }
  func.func @transform_1(%arg0: i32, %arg1: memref<2x8xi32, #tpu.memory_space<smem>>, %arg2: memref<2x8xi32, #tpu.memory_space<smem>>) -> (i32, i32) {
    %c0_i32 = arith.constant 0 : i32
    %c0_i32_0 = arith.constant 0 : i32
    %c0_i32_1 = arith.constant 0 : i32
    return %c0_i32, %c0_i32_0 : i32, i32
  }
  func.func @transform_2(%arg0: i32, %arg1: memref<2x8xi32, #tpu.memory_space<smem>>, %arg2: memref<2x8xi32, #tpu.memory_space<smem>>) -> (i32, i32) {
    %c0_i32 = arith.constant 0 : i32
    %c0_i32_0 = arith.constant 0 : i32
    %c0_i32_1 = arith.constant 0 : i32
    return %c0_i32, %c0_i32_0 : i32, i32
  }
  func.func @transform_3(%arg0: i32, %arg1: memref<2x8xi32, #tpu.memory_space<smem>>, %arg2: memref<2x8xi32, #tpu.memory_space<smem>>) -> (i32, i32, i32) {
    %c0_i32 = arith.constant 0 : i32
    %c0_i32_0 = arith.constant 0 : i32
    %c0_i32_1 = arith.constant 0 : i32
    %c0_i32_2 = arith.constant 0 : i32
    return %c0_i32, %c0_i32_0, %c0_i32_1 : i32, i32, i32
  }
  func.func @transform_4(%arg0: i32, %arg1: memref<2x8xi32, #tpu.memory_space<smem>>, %arg2: memref<2x8xi32, #tpu.memory_space<smem>>) -> (i32, i32, i32) {
    %c0_i32 = arith.constant 0 : i32
    %c0_i32_0 = arith.constant 0 : i32
    %c0_i32_1 = arith.constant 0 : i32
    %c0_i32_2 = arith.constant 0 : i32
    return %c0_i32, %c0_i32_0, %c0_i32_1 : i32, i32, i32
  }
  func.func @transform_5(%arg0: i32, %arg1: memref<2x8xi32, #tpu.memory_space<smem>>, %arg2: memref<2x8xi32, #tpu.memory_space<smem>>) -> (i32, i32) {
    %c0_i32 = arith.constant 0 : i32
    %c0_i32_0 = arith.constant 0 : i32
    %c0_i32_1 = arith.constant 0 : i32
    return %c0_i32, %c0_i32_0 : i32, i32
  }
  func.func @transform_6(%arg0: i32, %arg1: memref<2x8xi32, #tpu.memory_space<smem>>, %arg2: memref<2x8xi32, #tpu.memory_space<smem>>) -> (i32, i32) {
    %c0_i32 = arith.constant 0 : i32
    %c0_i32_0 = arith.constant 0 : i32
    %c0_i32_1 = arith.constant 0 : i32
    return %c0_i32, %c0_i32_0 : i32, i32
  }
}

</mosaic_0001>

<llo_original>
// kernel: _lambda_.1
$region0: #{_lambda_.1}
  #allocation0 [shape = 'u32[]', space=smem, size = 0x4, offset = 0x4, fixed_abs, tag = 'smem constant byte address 0x4 - core index']
  #allocation1 [shape = 'u32[144,128]{1,0:T(1,128)}', space=vmem, size = 0x12000, scoped, tag = 'internal scratch']
  #allocation2 [shape = 'f32[16,32]{1,0:T(8,128)}', space=vmem, size = 0x2000, scoped, tag = 'scratch operand']
  #allocation3 [shape = 's32[1]{0}', space=sflag, size = 0x4, scoped, tag = 'scoped memory for _lambda_.1']
  #allocation4 [shape = 'u8[1024]{0}', space=smem, size = 0x400, scoped, tag = 'prefetched SMEM operand 0']
  #allocation5 [shape = 'u8[1024]{0}', space=smem, size = 0x400, scoped, tag = 'prefetched SMEM operand 1']
  %s0 = inlined_call_operand.vmem [shape: s32[2,8], index: 0, kind: input, shape index: {}]
  %s1 = inlined_call_operand.vmem [shape: s32[2,8], index: 1, kind: input, shape index: {}]
  %s2 = inlined_call_operand.vmem [shape: s32[2,8], index: 2, kind: input, shape index: {}]
  %s3 = inlined_call_operand.vmem [shape: f32[122,32], index: 3, kind: input, shape index: {}]
  %s4 = inlined_call_operand.vmem [shape: f32[3,32], index: 4, kind: input, shape index: {}]
  %s5 = inlined_call_operand.vmem [shape: f32[2,32,256], index: 5, kind: input, shape index: {}]
  %s6 = inlined_call_operand.vmem [shape: f32[2,8,128], index: 6, kind: input, shape index: {}]
  %s7 = inlined_call_operand.hbm [shape: f32[2,32], index: 7, kind: output, shape index: {0}]
  %s8 = inlined_call_operand.hbm [shape: f32[2,4], index: 8, kind: output, shape index: {1}]
  %9 = xla_tuple %s7, %s8
  %s10 = sld [smem:[#allocation0]]
  $region38: #{_lambda_.1} parent=0
    _
  %s12 = ssub.s32 1, %s10
  %s13 = scalar_select 0, %s12, %s10
  %s14 = sshll.u32 %s0, 4
  %s15 = int_to_ptr.vmem [resolvable:$true] %s14
  %17 = dma.vmem_to_smem %s15, 32, [#allocation4], [#allocation3]
  %s18 = sshll.u32 %s1, 4
  %s19 = int_to_ptr.vmem [resolvable:$true] %s18
  %21 = dma.vmem_to_smem %s19, 32, [#allocation5], [#allocation3]
  %22 = dma.done [#allocation3], 64
  %23 = sfence
  $region1: #{_lambda_.1} parent=0
    #allocation6 [shape = 'u8[1024]{0}', space=vmem, size = 0x400, scoped, tag = 'output window, operand 0, single buffered']
    #allocation7 [shape = 's32[1]{0}', space=sflag, size = 0x4, scoped, tag = 'scoped memory for _lambda_.1']
    #allocation8 [shape = 'u8[1024]{0}', space=vmem, size = 0x400, scoped, tag = 'output window, operand 1, single buffered']
    #allocation9 [shape = 's32[1]{0}', space=sflag, size = 0x4, scoped, tag = 'scoped memory for _lambda_.1']
    %24 = vsyncpa [#allocation7], 0
    %25 = vsyncpa [#allocation9], 0
    // Predicated region
    $region2: #{_lambda_.1} parent=1 // pred_check
      _
    $region3: #{_lambda_.1} parent=1 // pred_check_branch
      %27 = sbr.rel (0) target = $region5
    $region4: #{_lambda_.1} parent=1 // pred_region
      _
    $region5: #{_lambda_.1} parent=1 // pred_fallthru
      _
    // Predicated region
    $region6: #{_lambda_.1} parent=1 // pred_check
      _
    $region7: #{_lambda_.1} parent=1 // pred_check_branch
      %29 = sbr.rel (0) target = $region9
    $region8: #{_lambda_.1} parent=1 // pred_region
      _
    $region9: #{_lambda_.1} parent=1 // pred_fallthru
      _
    // Predicated region
    $region10: #{_lambda_.1} parent=1 // pred_check
      _
    $region11: #{_lambda_.1} parent=1 // pred_check_branch
      %31 = sbr.rel (0) target = $region13
    $region12: #{_lambda_.1} parent=1 // pred_region
      _
    $region13: #{_lambda_.1} parent=1 // pred_fallthru
      _
    // Predicated region
    $region14: #{_lambda_.1} parent=1 // pred_check
      _
    $region15: #{_lambda_.1} parent=1 // pred_check_branch
      %33 = sbr.rel (0) target = $region17
    $region16: #{_lambda_.1} parent=1 // pred_region
      _
    $region17: #{_lambda_.1} parent=1 // pred_fallthru
      _
    // Predicated region
    $region18: #{_lambda_.1} parent=1 // pred_check
      _
    $region19: #{_lambda_.1} parent=1 // pred_check_branch
      %35 = sbr.rel (0) target = $region21
    $region20: #{_lambda_.1} parent=1 // pred_region
      _
    $region21: #{_lambda_.1} parent=1 // pred_fallthru
      _
    %s36 = sld [smem:[#allocation4]]
    %s37 = sld [smem:[#allocation5]]
    %s38 = scalar_lea.vmem %s3, %s36
    %v39 = vld [vmem:[%s38] sm:$0x1]
    %v40 = vld [vmem:[%s3 + $0x64] sm:$0x1]
    %v41 = vadd.f32 %v39, %v40
    %s42 = sadd.s32 %s37, 116
    %s43 = scalar_lea.vmem %s3, %s42
    %v44 = vld [vmem:[%s43] sm:$0x1]
    %v45 = vadd.f32 %v41, %v44
    %vm46 = vcmask 253952
    %47 = vst.msk [vmem:[#allocation2] sm:$0x1] %vm46, %v45
    %s48 = sld [smem:[#allocation4 + $0x1]]
    %s49 = sld [smem:[#allocation5 + $0x1]]
    %s50 = scalar_lea.vmem %s3, %s48
    %v51 = vld [vmem:[%s50] sm:$0x1]
    %v52 = vld [vmem:[%s3 + $0x65] sm:$0x1]
    %v53 = vadd.f32 %v51, %v52
    %s54 = sadd.s32 %s49, 116
    %s55 = scalar_lea.vmem %s3, %s54
    %v56 = vld [vmem:[%s55] sm:$0x1]
    %v57 = vadd.f32 %v53, %v56
    %58 = vst.msk [vmem:[#allocation2 + $0x1] sm:$0x1] %vm46, %v57
    %s59 = sld [smem:[#allocation4 + $0x2]]
    %s60 = sld [smem:[#allocation5 + $0x2]]
    %s61 = scalar_lea.vmem %s3, %s59
    %v62 = vld [vmem:[%s61] sm:$0x1]
    %v63 = vld [vmem:[%s3 + $0x66] sm:$0x1]
    %v64 = vadd.f32 %v62, %v63
    %s65 = sadd.s32 %s60, 116
    %s66 = scalar_lea.vmem %s3, %s65
    %v67 = vld [vmem:[%s66] sm:$0x1]
    %v68 = vadd.f32 %v64, %v67
    %69 = vst.msk [vmem:[#allocation2 + $0x2] sm:$0x1] %vm46, %v68
    %s70 = sld [smem:[#allocation4 + $0x3]]
    %s71 = sld [smem:[#allocation5 + $0x3]]
    %s72 = scalar_lea.vmem %s3, %s70
    %v73 = vld [vmem:[%s72] sm:$0x1]
    %v74 = vld [vmem:[%s3 + $0x67] sm:$0x1]
    %v75 = vadd.f32 %v73, %v74
    %s76 = sadd.s32 %s71, 116
    %s77 = scalar_lea.vmem %s3, %s76
    %v78 = vld [vmem:[%s77] sm:$0x1]
    %v79 = vadd.f32 %v75, %v78
    %80 = vst.msk [vmem:[#allocation2 + $0x3] sm:$0x1] %vm46, %v79
    %s81 = sld [smem:[#allocation4 + $0x4]]
    %s82 = sld [smem:[#allocation5 + $0x4]]
    %s83 = scalar_lea.vmem %s3, %s81
    %v84 = vld [vmem:[%s83] sm:$0x1]
    %v85 = vld [vmem:[%s3 + $0x68] sm:$0x1]
    %v86 = vadd.f32 %v84, %v85
    %s87 = sadd.s32 %s82, 116
    %s88 = scalar_lea.vmem %s3, %s87
    %v89 = vld [vmem:[%s88] sm:$0x1]
    %v90 = vadd.f32 %v86, %v89
    %91 = vst.msk [vmem:[#allocation2 + $0x4] sm:$0x1] %vm46, %v90
    %s92 = sld [smem:[#allocation4 + $0x5]]
    %s93 = sld [smem:[#allocation5 + $0x5]]
    %s94 = scalar_lea.vmem %s3, %s92
    %v95 = vld [vmem:[%s94] sm:$0x1]
    %v96 = vld [vmem:[%s3 + $0x69] sm:$0x1]
    %v97 = vadd.f32 %v95, %v96
    %s98 = sadd.s32 %s93, 116
    %s99 = scalar_lea.vmem %s3, %s98
    %v100 = vld [vmem:[%s99] sm:$0x1]
    %v101 = vadd.f32 %v97, %v100
    %102 = vst.msk [vmem:[#allocation2 + $0x5] sm:$0x1] %vm46, %v101
    %s103 = sld [smem:[#allocation4 + $0x6]]
    %s104 = sld [smem:[#allocation5 + $0x6]]
    %s105 = scalar_lea.vmem %s3, %s103
    %v106 = vld [vmem:[%s105] sm:$0x1]
    %v107 = vld [vmem:[%s3 + $0x6a] sm:$0x1]
    %v108 = vadd.f32 %v106, %v107
    %s109 = sadd.s32 %s104, 116
    %s110 = scalar_lea.vmem %s3, %s109
    %v111 = vld [vmem:[%s110] sm:$0x1]
    %v112 = vadd.f32 %v108, %v111
    %113 = vst.msk [vmem:[#allocation2 + $0x6] sm:$0x1] %vm46, %v112
    %s114 = sld [smem:[#allocation4 + $0x7]]
    %s115 = sld [smem:[#allocation5 + $0x7]]
    %s116 = scalar_lea.vmem %s3, %s114
    %v117 = vld [vmem:[%s116] sm:$0x1]
    %v118 = vld [vmem:[%s3 + $0x6b] sm:$0x1]
    %v119 = vadd.f32 %v117, %v118
    %s120 = sadd.s32 %s115, 116
    %s121 = scalar_lea.vmem %s3, %s120
    %v122 = vld [vmem:[%s121] sm:$0x1]
    %v123 = vadd.f32 %v119, %v122
    %124 = vst.msk [vmem:[#allocation2 + $0x7] sm:$0x1] %vm46, %v123
    %s125 = sld [smem:[#allocation4 + $0x80]]
    %s126 = sld [smem:[#allocation5 + $0x80]]
    %s127 = scalar_lea.vmem %s3, %s125
    %v128 = vld [vmem:[%s127] sm:$0x1]
    %v129 = vld [vmem:[%s3 + $0x64] sm:$0x1]
    %v130 = vadd.f32 %v128, %v129
    %s131 = sadd.s32 %s126, 116
    %s132 = scalar_lea.vmem %s3, %s131
    %v133 = vld [vmem:[%s132] sm:$0x1]
    %v134 = vadd.f32 %v130, %v133
    %135 = vst.msk [vmem:[#allocation2 + $0x8] sm:$0x1] %vm46, %v134
    %s136 = sld [smem:[#allocation4 + $0x81]]
    %s137 = sld [smem:[#allocation5 + $0x81]]
    %s138 = scalar_lea.vmem %s3, %s136
    %v139 = vld [vmem:[%s138] sm:$0x1]
    %v140 = vld [vmem:[%s3 + $0x65] sm:$0x1]
    %v141 = vadd.f32 %v139, %v140
    %s142 = sadd.s32 %s137, 116
    %s143 = scalar_lea.vmem %s3, %s142
    %v144 = vld [vmem:[%s143] sm:$0x1]
    %v145 = vadd.f32 %v141, %v144
    %146 = vst.msk [vmem:[#allocation2 + $0x9] sm:$0x1] %vm46, %v145
    %s147 = sld [smem:[#allocation4 + $0x82]]
    %s148 = sld [smem:[#allocation5 + $0x82]]
    %s149 = scalar_lea.vmem %s3, %s147
    %v150 = vld [vmem:[%s149] sm:$0x1]
    %v151 = vld [vmem:[%s3 + $0x66] sm:$0x1]
    %v152 = vadd.f32 %v150, %v151
    %s153 = sadd.s32 %s148, 116
    %s154 = scalar_lea.vmem %s3, %s153
    %v155 = vld [vmem:[%s154] sm:$0x1]
    %v156 = vadd.f32 %v152, %v155
    %157 = vst.msk [vmem:[#allocation2 + $0xa] sm:$0x1] %vm46, %v156
    %s158 = sld [smem:[#allocation4 + $0x83]]
    %s159 = sld [smem:[#allocation5 + $0x83]]
    %s160 = scalar_lea.vmem %s3, %s158
    %v161 = vld [vmem:[%s160] sm:$0x1]
    %v162 = vld [vmem:[%s3 + $0x67] sm:$0x1]
    %v163 = vadd.f32 %v161, %v162
    %s164 = sadd.s32 %s159, 116
    %s165 = scalar_lea.vmem %s3, %s164
    %v166 = vld [vmem:[%s165] sm:$0x1]
    %v167 = vadd.f32 %v163, %v166
    %168 = vst.msk [vmem:[#allocation2 + $0xb] sm:$0x1] %vm46, %v167
    %s169 = sld [smem:[#allocation4 + $0x84]]
    %s170 = sld [smem:[#allocation5 + $0x84]]
    %s171 = scalar_lea.vmem %s3, %s169
    %v172 = vld [vmem:[%s171] sm:$0x1]
    %v173 = vld [vmem:[%s3 + $0x68] sm:$0x1]
    %v174 = vadd.f32 %v172, %v173
    %s175 = sadd.s32 %s170, 116
    %s176 = scalar_lea.vmem %s3, %s175
    %v177 = vld [vmem:[%s176] sm:$0x1]
    %v178 = vadd.f32 %v174, %v177
    %179 = vst.msk [vmem:[#allocation2 + $0xc] sm:$0x1] %vm46, %v178
    %s180 = sld [smem:[#allocation4 + $0x85]]
    %s181 = sld [smem:[#allocation5 + $0x85]]
    %s182 = scalar_lea.vmem %s3, %s180
    %v183 = vld [vmem:[%s182] sm:$0x1]
    %v184 = vld [vmem:[%s3 + $0x69] sm:$0x1]
    %v185 = vadd.f32 %v183, %v184
    %s186 = sadd.s32 %s181, 116
    %s187 = scalar_lea.vmem %s3, %s186
    %v188 = vld [vmem:[%s187] sm:$0x1]
    %v189 = vadd.f32 %v185, %v188
    %190 = vst.msk [vmem:[#allocation2 + $0xd] sm:$0x1] %vm46, %v189
    %s191 = sld [smem:[#allocation4 + $0x86]]
    %s192 = sld [smem:[#allocation5 + $0x86]]
    %s193 = scalar_lea.vmem %s3, %s191
    %v194 = vld [vmem:[%s193] sm:$0x1]
    %v195 = vld [vmem:[%s3 + $0x6a] sm:$0x1]
    %v196 = vadd.f32 %v194, %v195
    %s197 = sadd.s32 %s192, 116
    %s198 = scalar_lea.vmem %s3, %s197
    %v199 = vld [vmem:[%s198] sm:$0x1]
    %v200 = vadd.f32 %v196, %v199
    %201 = vst.msk [vmem:[#allocation2 + $0xe] sm:$0x1] %vm46, %v200
    %s202 = sld [smem:[#allocation4 + $0x87]]
    %s203 = sld [smem:[#allocation5 + $0x87]]
    %s204 = scalar_lea.vmem %s3, %s202
    %v205 = vld [vmem:[%s204] sm:$0x1]
    %v206 = vld [vmem:[%s3 + $0x6b] sm:$0x1]
    %v207 = vadd.f32 %v205, %v206
    %s208 = sadd.s32 %s203, 116
    %s209 = scalar_lea.vmem %s3, %s208
    %v210 = vld [vmem:[%s209] sm:$0x1]
    %v211 = vadd.f32 %v207, %v210
    %212 = vst.msk [vmem:[#allocation2 + $0xf] sm:$0x1] %vm46, %v211
    %v213 = vld [vmem:[#allocation2] sm:$0xff]
    %v214 = vld [vmem:[#allocation2 + $0x8] sm:$0xff]
    %v215 = vld [vmem:[%s4] sm:$0x1]
    %v216 = vld [vmem:[%s4 + $0x1] sm:$0x1]
    %vm217 = vcmask 261120
    %v218 = vsel %vm217, %v213, 0.0
    %219 = vadd.xlane.f32.xlu0 %v218
    %v220 = vpop.xlane.xlu0 %219
    %v221 = vsel %vm217, %v214, 0.0
    %222 = vadd.xlane.f32.xlu0 %v221
    %v223 = vpop.xlane.xlu0 %222
    %v224 = vrcp.pop 32.0
    %v225 = vmul.f32 %v220, %v224
    %v226 = vmul.f32 %v223, %v224
    %v227 = vsub.f32 %v213, %v225
    %v228 = vsub.f32 %v214, %v226
    %v229 = vmul.f32 %v227, %v227
    %v230 = vmul.f32 %v228, %v228
    %v231 = vsel %vm217, %v229, 0.0
    %232 = vadd.xlane.f32.xlu0 %v231
    %v233 = vpop.xlane.xlu0 %232
    %v234 = vsel %vm217, %v230, 0.0
    %235 = vadd.xlane.f32.xlu0 %v234
    %v236 = vpop.xlane.xlu0 %235
    %v237 = vmul.f32 %v233, %v224
    %v238 = vmul.f32 %v236, %v224
    %v239 = vadd.f32 %v237, 1e-12
    %v240 = vadd.f32 %v238, 1e-12
    %v241 = vrsqrt.pop %v239
    %v242 = vrsqrt.pop %v240
    %v243 = vmul.f32 %v227, %v241
    %v244 = vmul.f32 %v228, %v242
    %v245 = vlaneseq
    %v246 = vshrl.u32 %v245, 7
    %v247 = vsub.s32 0, %v246
    %v248 = vrot.slane %v215, %v247
    %v249 = vmul.f32 %v243, %v248
    %v250 = vmul.f32 %v244, %v248
    %v251 = vlaneseq
    %v252 = vshrl.u32 %v251, 7
    %v253 = vsub.s32 0, %v252
    %v254 = vrot.slane %v216, %v253
    %v255 = vadd.f32 %v249, %v254
    %v256 = vadd.f32 %v250, %v254
    %v257 = vld [vmem:[%s2] sm:$0x3]
    %v258 = vcvt.s32.f32 %v257
    %v259 = vsub.f32 1.0, %v258
    %v260 = vmul.f32 %v259, -10000.0
    %v261 = vld [vmem:[%s6] sm:$0x1]
    %v262 = vld [vmem:[%s6 + $0x1] sm:$0x1]
    %v263 = vld [vmem:[%s6 + $0x2] sm:$0x1]
    %v264 = vld [vmem:[%s6 + $0x3] sm:$0x1]
    %v265 = vld [vmem:[%s6 + $0x4] sm:$0x1]
    %v266 = vld [vmem:[%s6 + $0x5] sm:$0x1]
    %v267 = vld [vmem:[%s6 + $0x6] sm:$0x1]
    %v268 = vld [vmem:[%s6 + $0x7] sm:$0x1]
    %v269 = vld [vmem:[%s5] sm:$0xff]
    %v270 = vld [vmem:[%s5 + $0x10] sm:$0xff]
    %v271 = vld [vmem:[%s5 + $0x20] sm:$0xff]
    %v272 = vld [vmem:[%s5 + $0x30] sm:$0xff]
    %v273 = vlaneseq
    %v274 = vshrl.u32 %v273, 7
    %v275 = vsub.s32 0, %v274
    %v276 = vrot.slane %v261, %v275
    %v278 = vsel %vm217, %v255, 0
    %v281 = vsel %vm217, %v256, 0
    %283 = vmatprep.subr.mxu0 0.0
    %284 = vmatpush1.msra.mxu0 %v269
    %285 = vmatprep.subr.mxu0 0.0
    %286 = vmatpush1.msra.mxu0 %v270
    %287 = vmatprep.subr.mxu0 0.0
    %288 = vmatpush1.msra.mxu0 %v271
    %289 = vmatprep.subr.mxu0 0.0
    %290 = vmatpush1.msra.mxu0 %v272
    %291 = vmatprep.subr.mxu0 0.0
    %292 = vmatpush1.msra.mxu0 0.0
    %293 = vmatprep.subr.mxu0 0.0
    %294 = vmatpush1.msra.mxu0 0.0
    %295 = vmatprep.subr.mxu0 0.0
    %296 = vmatpush1.msra.mxu0 0.0
    %297 = vmatprep.subr.mxu0 0.0
    %298 = vmatpush1.msra.mxu0 0.0
    %299 = vmatprep.subr.mxu0 0.0
    %300 = vmatpush1.msra.mxu0 0.0
    %301 = vmatprep.subr.mxu0 0.0
    %302 = vmatpush1.msra.mxu0 0.0
    %303 = vmatprep.subr.mxu0 0.0
    %304 = vmatpush1.msra.mxu0 0.0
    %305 = vmatprep.subr.mxu0 0.0
    %306 = vmatpush1.msra.mxu0 0.0
    %307 = vmatprep.subr.mxu0 0.0
    %308 = vmatpush1.msra.mxu0 0.0
    %309 = vmatprep.subr.mxu0 0.0
    %310 = vmatpush1.msra.mxu0 0.0
    %311 = vmatprep.subr.mxu0 0.0
    %312 = vmatpush1.msra.mxu0 0.0
    %313 = vmatprep.subr.mxu0 0.0
    %314 = vmatpush1.msra.mxu0 0.0
    %315 = vmatprep.subr.mxu0 0.0
    %316 = vmatpush1.msra.mxu0 0.0
    %317 = vmatprep.subr.mxu0 0.0
    %318 = vmatpush1.msra.mxu0 0.0
    %319 = vmatprep.subr.mxu0 0.0
    %320 = vmatpush1.msra.mxu0 0.0
    %321 = vmatprep.subr.mxu0 0.0
    %322 = vmatpush1.msra.mxu0 0.0
    %323 = vmatprep.subr.mxu0 0.0
    %324 = vmatpush1.msra.mxu0 0.0
    %325 = vmatprep.subr.mxu0 0.0
    %326 = vmatpush1.msra.mxu0 0.0
    %327 = vmatprep.subr.mxu0 0.0
    %328 = vmatpush1.msra.mxu0 0.0
    %329 = vmatprep.subr.mxu0 0.0
    %330 = vmatpush1.msra.mxu0 0.0
    %331 = vmatprep.subr.mxu0 0.0
    %332 = vmatpush1.msra.mxu0 0.0
    %333 = vmatprep.subr.mxu0 0.0
    %334 = vmatpush1.msra.mxu0 0.0
    %335 = vmatprep.subr.mxu0 0.0
    %336 = vmatpush1.msra.mxu0 0.0
    %337 = vmatprep.subr.mxu0 0.0
    %338 = vmatpush1.msra.mxu0 0.0
    %339 = vmatprep.subr.mxu0 0.0
    %340 = vmatpush1.msra.mxu0 0.0
    %341 = vmatprep.subr.mxu0 0.0
    %342 = vmatpush1.msra.mxu0 0.0
    %343 = vmatprep.subr.mxu0 0.0
    %344 = vmatpush1.msra.mxu0 0.0
    %345 = vmatprep.subr.mxu0 0.0
    %346 = vmatpush1.msra.mxu0 0.0
    %347 = vmatprep.mubr.f32.mxu0 0.0
    %348 = vmatmul.mubr.f32.gmra.mrb[0].mxu0 %v278
    %v349 = vpop.f32.mrb[0].mxu0
    %v350 = vadd.f32 %v276, %v349
    %v351 = vpop.f32.mrb[0].mxu0
    %352 = vmatprep.mubr.f32.mxu0 0.0
    %353 = vmatmul.mubr.f32.gmra.mrb[0].mxu0 %v281
    %v354 = vpop.f32.mrb[0].mxu0
    %v355 = vadd.f32 %v276, %v354
    %v356 = vpop.f32.mrb[0].mxu0
    %357 = vdwg.mxu0
    %359 = vrot.lane.b32.xlu0 %v350, 112
    %v360 = vpop.permute.xlu0 %359
    %vm361 = vcmask 130048
    %v362 = vsel %vm361, %v350, 0
    %v364 = vsel %vm361, %v360, 0
    %366 = vmatprep.subr.mxu0 0.0
    %367 = vmatpush1.xpose.msra.mxu0 %v364
    %368 = vmatprep.subr.mxu0 0.0
    %369 = vmatpush1.xpose.msra.mxu0 0.0
    %370 = vmatprep.subr.mxu0 0.0
    %371 = vmatpush1.xpose.msra.mxu0 0.0
    %372 = vmatprep.subr.mxu0 0.0
    %373 = vmatpush1.xpose.msra.mxu0 0.0
    %374 = vmatprep.subr.mxu0 0.0
    %375 = vmatpush1.xpose.msra.mxu0 0.0
    %376 = vmatprep.subr.mxu0 0.0
    %377 = vmatpush1.xpose.msra.mxu0 0.0
    %378 = vmatprep.subr.mxu0 0.0
    %379 = vmatpush1.xpose.msra.mxu0 0.0
    %380 = vmatprep.subr.mxu0 0.0
    %381 = vmatpush1.xpose.msra.mxu0 0.0
    %382 = vmatprep.subr.mxu0 0.0
    %383 = vmatpush1.xpose.msra.mxu0 0.0
    %384 = vmatprep.subr.mxu0 0.0
    %385 = vmatpush1.xpose.msra.mxu0 0.0
    %386 = vmatprep.subr.mxu0 0.0
    %387 = vmatpush1.xpose.msra.mxu0 0.0
    %388 = vmatprep.subr.mxu0 0.0
    %389 = vmatpush1.xpose.msra.mxu0 0.0
    %390 = vmatprep.subr.mxu0 0.0
    %391 = vmatpush1.xpose.msra.mxu0 0.0
    %392 = vmatprep.subr.mxu0 0.0
    %393 = vmatpush1.xpose.msra.mxu0 0.0
    %394 = vmatprep.subr.mxu0 0.0
    %395 = vmatpush1.xpose.msra.mxu0 0.0
    %396 = vmatprep.subr.mxu0 0.0
    %397 = vmatpush1.xpose.msra.mxu0 0.0
    %398 = vmatprep.subr.mxu0 0.0
    %399 = vmatpush1.xpose.msra.mxu0 0.0
    %400 = vmatprep.subr.mxu0 0.0
    %401 = vmatpush1.xpose.msra.mxu0 0.0
    %402 = vmatprep.subr.mxu0 0.0
    %403 = vmatpush1.xpose.msra.mxu0 0.0
    %404 = vmatprep.subr.mxu0 0.0
    %405 = vmatpush1.xpose.msra.mxu0 0.0
    %406 = vmatprep.subr.mxu0 0.0
    %407 = vmatpush1.xpose.msra.mxu0 0.0
    %408 = vmatprep.subr.mxu0 0.0
    %409 = vmatpush1.xpose.msra.mxu0 0.0
    %410 = vmatprep.subr.mxu0 0.0
    %411 = vmatpush1.xpose.msra.mxu0 0.0
    %412 = vmatprep.subr.mxu0 0.0
    %413 = vmatpush1.xpose.msra.mxu0 0.0
    %414 = vmatprep.subr.mxu0 0.0
    %415 = vmatpush1.xpose.msra.mxu0 0.0
    %416 = vmatprep.subr.mxu0 0.0
    %417 = vmatpush1.xpose.msra.mxu0 0.0
    %418 = vmatprep.subr.mxu0 0.0
    %419 = vmatpush1.xpose.msra.mxu0 0.0
    %420 = vmatprep.subr.mxu0 0.0
    %421 = vmatpush1.xpose.msra.mxu0 0.0
    %422 = vmatprep.subr.mxu0 0.0
    %423 = vmatpush1.xpose.msra.mxu0 0.0
    %424 = vmatprep.subr.mxu0 0.0
    %425 = vmatpush1.xpose.msra.mxu0 0.0
    %426 = vmatprep.subr.mxu0 0.0
    %427 = vmatpush1.xpose.msra.mxu0 0.0
    %428 = vmatprep.subr.mxu0 0.0
    %429 = vmatpush1.xpose.msra.mxu0 0.0
    %430 = vmatprep.mubr.f32.mxu0 0.0
    %431 = vmatmul.mubr.f32.gmra.mrb[0].mxu0 %v362
    %v432 = vpop.f32.mrb[0].mxu0
    %v433 = vadd.f32 0.0, %v432
    %v434 = vpop.f32.mrb[0].mxu0
    %435 = vdwg.mxu0
    %v436 = vmul.f32 %v433, 0.25
    %v437 = vlaneseq
    %v438 = vshrl.u32 %v437, 7
    %v439 = vsub.s32 0, %v438
    %v440 = vrot.slane %v260, %v439
    %v441 = vadd.f32 %v436, %v440
    %vm442 = vcmask 64512
    %v443 = vsel %vm442, %v441, -inf
    %444 = vmax.xlane.f32.xlu0 %v443
    %v445 = vpop.xlane.xlu0 %444
    %v446 = vsub.f32 %v441, %v445
    %v447 = vmul.f32 %v446, 1.442695
    %v448 = vpow.pop %v447
    %v449 = vsel %vm442, %v448, 0.0
    %450 = vadd.xlane.f32.xlu0 %v449
    %v451 = vpop.xlane.xlu0 %450
    %v452 = vrcp.pop %v451
    %v453 = vmul.f32 %v448, %v452
    %454 = vrot.lane.b32.xlu0 %v350, 96
    %v455 = vpop.permute.xlu0 %454
    %v458 = vsel %vm442, %v453, 0
    %460 = vmatprep.subr.mxu0 0.0
    %461 = vmatpush1.msra.mxu0 %v455
    %462 = vmatprep.subr.mxu0 0.0
    %463 = vmatpush1.msra.mxu0 0.0
    %464 = vmatprep.subr.mxu0 0.0
    %465 = vmatpush1.msra.mxu0 0.0
    %466 = vmatprep.subr.mxu0 0.0
    %467 = vmatpush1.msra.mxu0 0.0
    %468 = vmatprep.subr.mxu0 0.0
    %469 = vmatpush1.msra.mxu0 0.0
    %470 = vmatprep.subr.mxu0 0.0
    %471 = vmatpush1.msra.mxu0 0.0
    %472 = vmatprep.subr.mxu0 0.0
    %473 = vmatpush1.msra.mxu0 0.0
    %474 = vmatprep.subr.mxu0 0.0
    %475 = vmatpush1.msra.mxu0 0.0
    %476 = vmatprep.subr.mxu0 0.0
    %477 = vmatpush1.msra.mxu0 0.0
    %478 = vmatprep.subr.mxu0 0.0
    %479 = vmatpush1.msra.mxu0 0.0
    %480 = vmatprep.subr.mxu0 0.0
    %481 = vmatpush1.msra.mxu0 0.0
    %482 = vmatprep.subr.mxu0 0.0
    %483 = vmatpush1.msra.mxu0 0.0
    %484 = vmatprep.subr.mxu0 0.0
    %485 = vmatpush1.msra.mxu0 0.0
    %486 = vmatprep.subr.mxu0 0.0
    %487 = vmatpush1.msra.mxu0 0.0
    %488 = vmatprep.subr.mxu0 0.0
    %489 = vmatpush1.msra.mxu0 0.0
    %490 = vmatprep.subr.mxu0 0.0
    %491 = vmatpush1.msra.mxu0 0.0
    %492 = vmatprep.subr.mxu0 0.0
    %493 = vmatpush1.msra.mxu0 0.0
    %494 = vmatprep.subr.mxu0 0.0
    %495 = vmatpush1.msra.mxu0 0.0
    %496 = vmatprep.subr.mxu0 0.0
    %497 = vmatpush1.msra.mxu0 0.0
    %498 = vmatprep.subr.mxu0 0.0
    %499 = vmatpush1.msra.mxu0 0.0
    %500 = vmatprep.subr.mxu0 0.0
    %501 = vmatpush1.msra.mxu0 0.0
    %502 = vmatprep.subr.mxu0 0.0
    %503 = vmatpush1.msra.mxu0 0.0
    %504 = vmatprep.subr.mxu0 0.0
    %505 = vmatpush1.msra.mxu0 0.0
    %506 = vmatprep.subr.mxu0 0.0
    %507 = vmatpush1.msra.mxu0 0.0
    %508 = vmatprep.subr.mxu0 0.0
    %509 = vmatpush1.msra.mxu0 0.0
    %510 = vmatprep.subr.mxu0 0.0
    %511 = vmatpush1.msra.mxu0 0.0
    %512 = vmatprep.subr.mxu0 0.0
    %513 = vmatpush1.msra.mxu0 0.0
    %514 = vmatprep.subr.mxu0 0.0
    %515 = vmatpush1.msra.mxu0 0.0
    %516 = vmatprep.subr.mxu0 0.0
    %517 = vmatpush1.msra.mxu0 0.0
    %518 = vmatprep.subr.mxu0 0.0
    %519 = vmatpush1.msra.mxu0 0.0
    %520 = vmatprep.subr.mxu0 0.0
    %521 = vmatpush1.msra.mxu0 0.0
    %522 = vmatprep.subr.mxu0 0.0
    %523 = vmatpush1.msra.mxu0 0.0
    %524 = vmatprep.mubr.f32.mxu0 0.0
    %525 = vmatmul.mubr.f32.gmra.mrb[0].mxu0 %v458
    %v526 = vpop.f32.mrb[0].mxu0
    %v527 = vadd.f32 0.0, %v526
    %v528 = vpop.f32.mrb[0].mxu0
    %529 = vdwg.mxu0
    %v530 = vld [vmem:[%s5] sm:$0xff]
    %v531 = vld [vmem:[%s5 + $0x10] sm:$0xff]
    %532 = vrot.lane.b32.xlu0 %v350, 80
    %v533 = vpop.permute.xlu0 %532
    %534 = vrot.lane.b32.xlu0 %v350, 64
    %v535 = vpop.permute.xlu0 %534
    %v536 = vsel %vm361, %v533, 0
    %v538 = vsel %vm361, %v535, 0
    %540 = vmatprep.subr.mxu0 0.0
    %541 = vmatpush1.xpose.msra.mxu0 %v538
    %542 = vmatprep.subr.mxu0 0.0
    %543 = vmatpush1.xpose.msra.mxu0 0.0
    %544 = vmatprep.subr.mxu0 0.0
    %545 = vmatpush1.xpose.msra.mxu0 0.0
    %546 = vmatprep.subr.mxu0 0.0
    %547 = vmatpush1.xpose.msra.mxu0 0.0
    %548 = vmatprep.subr.mxu0 0.0
    %549 = vmatpush1.xpose.msra.mxu0 0.0
    %550 = vmatprep.subr.mxu0 0.0
    %551 = vmatpush1.xpose.msra.mxu0 0.0
    %552 = vmatprep.subr.mxu0 0.0
    %553 = vmatpush1.xpose.msra.mxu0 0.0
    %554 = vmatprep.subr.mxu0 0.0
    %555 = vmatpush1.xpose.msra.mxu0 0.0
    %556 = vmatprep.subr.mxu0 0.0
    %557 = vmatpush1.xpose.msra.mxu0 0.0
    %558 = vmatprep.subr.mxu0 0.0
    %559 = vmatpush1.xpose.msra.mxu0 0.0
    %560 = vmatprep.subr.mxu0 0.0
    %561 = vmatpush1.xpose.msra.mxu0 0.0
    %562 = vmatprep.subr.mxu0 0.0
    %563 = vmatpush1.xpose.msra.mxu0 0.0
    %564 = vmatprep.subr.mxu0 0.0
    %565 = vmatpush1.xpose.msra.mxu0 0.0
    %566 = vmatprep.subr.mxu0 0.0
    %567 = vmatpush1.xpose.msra.mxu0 0.0
    %568 = vmatprep.subr.mxu0 0.0
    %569 = vmatpush1.xpose.msra.mxu0 0.0
    %570 = vmatprep.subr.mxu0 0.0
    %571 = vmatpush1.xpose.msra.mxu0 0.0
    %572 = vmatprep.subr.mxu0 0.0
    %573 = vmatpush1.xpose.msra.mxu0 0.0
    %574 = vmatprep.subr.mxu0 0.0
    %575 = vmatpush1.xpose.msra.mxu0 0.0
    %576 = vmatprep.subr.mxu0 0.0
    %577 = vmatpush1.xpose.msra.mxu0 0.0
    %578 = vmatprep.subr.mxu0 0.0
    %579 = vmatpush1.xpose.msra.mxu0 0.0
    %580 = vmatprep.subr.mxu0 0.0
    %581 = vmatpush1.xpose.msra.mxu0 0.0
    %582 = vmatprep.subr.mxu0 0.0
    %583 = vmatpush1.xpose.msra.mxu0 0.0
    %584 = vmatprep.subr.mxu0 0.0
    %585 = vmatpush1.xpose.msra.mxu0 0.0
    %586 = vmatprep.subr.mxu0 0.0
    %587 = vmatpush1.xpose.msra.mxu0 0.0
    %588 = vmatprep.subr.mxu0 0.0
    %589 = vmatpush1.xpose.msra.mxu0 0.0
    %590 = vmatprep.subr.mxu0 0.0
    %591 = vmatpush1.xpose.msra.mxu0 0.0
    %592 = vmatprep.subr.mxu0 0.0
    %593 = vmatpush1.xpose.msra.mxu0 0.0
    %594 = vmatprep.subr.mxu0 0.0
    %595 = vmatpush1.xpose.msra.mxu0 0.0
    %596 = vmatprep.subr.mxu0 0.0
    %597 = vmatpush1.xpose.msra.mxu0 0.0
    %598 = vmatprep.subr.mxu0 0.0
    %599 = vmatpush1.xpose.msra.mxu0 0.0
    %600 = vmatprep.subr.mxu0 0.0
    %601 = vmatpush1.xpose.msra.mxu0 0.0
    %602 = vmatprep.subr.mxu0 0.0
    %603 = vmatpush1.xpose.msra.mxu0 0.0
    %604 = vmatprep.mubr.f32.mxu0 0.0
    %605 = vmatmul.mubr.f32.gmra.mrb[0].mxu0 %v536
    %v606 = vpop.f32.mrb[0].mxu0
    %v607 = vadd.f32 0.0, %v606
    %v608 = vpop.f32.mrb[0].mxu0
    %609 = vdwg.mxu0
    %v610 = vmul.f32 %v607, 0.25
    %v611 = vadd.f32 %v610, %v440
    %v612 = vsel %vm442, %v611, -inf
    %613 = vmax.xlane.f32.xlu0 %v612
    %v614 = vpop.xlane.xlu0 %613
    %v615 = vsub.f32 %v611, %v614
    %v616 = vmul.f32 %v615, 1.442695
    %v617 = vpow.pop %v616
    %v618 = vsel %vm442, %v617, 0.0
    %619 = vadd.xlane.f32.xlu0 %v618
    %v620 = vpop.xlane.xlu0 %619
    %v621 = vrcp.pop %v620
    %v622 = vmul.f32 %v617, %v621
    %623 = vrot.lane.b32.xlu0 %v350, 48
    %v624 = vpop.permute.xlu0 %623
    %v627 = vsel %vm442, %v622, 0
    %629 = vmatprep.subr.mxu0 0.0
    %630 = vmatpush1.msra.mxu0 %v624
    %631 = vmatprep.subr.mxu0 0.0
    %632 = vmatpush1.msra.mxu0 0.0
    %633 = vmatprep.subr.mxu0 0.0
    %634 = vmatpush1.msra.mxu0 0.0
    %635 = vmatprep.subr.mxu0 0.0
    %636 = vmatpush1.msra.mxu0 0.0
    %637 = vmatprep.subr.mxu0 0.0
    %638 = vmatpush1.msra.mxu0 0.0
    %639 = vmatprep.subr.mxu0 0.0
    %640 = vmatpush1.msra.mxu0 0.0
    %641 = vmatprep.subr.mxu0 0.0
    %642 = vmatpush1.msra.mxu0 0.0
    %643 = vmatprep.subr.mxu0 0.0
    %644 = vmatpush1.msra.mxu0 0.0
    %645 = vmatprep.subr.mxu0 0.0
    %646 = vmatpush1.msra.mxu0 0.0
    %647 = vmatprep.subr.mxu0 0.0
    %648 = vmatpush1.msra.mxu0 0.0
    %649 = vmatprep.subr.mxu0 0.0
    %650 = vmatpush1.msra.mxu0 0.0
    %651 = vmatprep.subr.mxu0 0.0
    %652 = vmatpush1.msra.mxu0 0.0
    %653 = vmatprep.subr.mxu0 0.0
    %654 = vmatpush1.msra.mxu0 0.0
    %655 = vmatprep.subr.mxu0 0.0
    %656 = vmatpush1.msra.mxu0 0.0
    %657 = vmatprep.subr.mxu0 0.0
    %658 = vmatpush1.msra.mxu0 0.0
    %659 = vmatprep.subr.mxu0 0.0
    %660 = vmatpush1.msra.mxu0 0.0
    %661 = vmatprep.subr.mxu0 0.0
    %662 = vmatpush1.msra.mxu0 0.0
    %663 = vmatprep.subr.mxu0 0.0
    %664 = vmatpush1.msra.mxu0 0.0
    %665 = vmatprep.subr.mxu0 0.0
    %666 = vmatpush1.msra.mxu0 0.0
    %667 = vmatprep.subr.mxu0 0.0
    %668 = vmatpush1.msra.mxu0 0.0
    %669 = vmatprep.subr.mxu0 0.0
    %670 = vmatpush1.msra.mxu0 0.0
    %671 = vmatprep.subr.mxu0 0.0
    %672 = vmatpush1.msra.mxu0 0.0
    %673 = vmatprep.subr.mxu0 0.0
    %674 = vmatpush1.msra.mxu0 0.0
    %675 = vmatprep.subr.mxu0 0.0
    %676 = vmatpush1.msra.mxu0 0.0
    %677 = vmatprep.subr.mxu0 0.0
    %678 = vmatpush1.msra.mxu0 0.0
    %679 = vmatprep.subr.mxu0 0.0
    %680 = vmatpush1.msra.mxu0 0.0
    %681 = vmatprep.subr.mxu0 0.0
    %682 = vmatpush1.msra.mxu0 0.0
    %683 = vmatprep.subr.mxu0 0.0
    %684 = vmatpush1.msra.mxu0 0.0
    %685 = vmatprep.subr.mxu0 0.0
    %686 = vmatpush1.msra.mxu0 0.0
    %687 = vmatprep.subr.mxu0 0.0
    %688 = vmatpush1.msra.mxu0 0.0
    %689 = vmatprep.subr.mxu0 0.0
    %690 = vmatpush1.msra.mxu0 0.0
    %691 = vmatprep.subr.mxu0 0.0
    %692 = vmatpush1.msra.mxu0 0.0
    %693 = vmatprep.mubr.f32.mxu0 0.0
    %694 = vmatmul.mubr.f32.gmra.mrb[0].mxu0 %v627
    %v695 = vpop.f32.mrb[0].mxu0
    %v696 = vadd.f32 0.0, %v695
    %v697 = vpop.f32.mrb[0].mxu0
    %698 = vdwg.mxu0
    %701 = vrot.lane.b32.xlu0 %v271, 32
    %v702 = vpop.permute.xlu0 %701
    %703 = vrot.lane.b32.xlu0 %v272, 32
    %v704 = vpop.permute.xlu0 %703
    %v708 = vsel %vm361, %v696, 0
    %710 = vmatprep.subr.mxu0 0.0
    %711 = vmatpush1.msra.mxu0 %v702
    %712 = vmatprep.subr.mxu0 0.0
    %713 = vmatpush1.msra.mxu0 %v704
    %714 = vmatprep.subr.mxu0 0.0
    %715 = vmatpush1.msra.mxu0 0.0
    %716 = vmatprep.subr.mxu0 0.0
    %717 = vmatpush1.msra.mxu0 0.0
    %718 = vmatprep.subr.mxu0 0.0
    %719 = vmatpush1.msra.mxu0 0.0
    %720 = vmatprep.subr.mxu0 0.0
    %721 = vmatpush1.msra.mxu0 0.0
    %722 = vmatprep.subr.mxu0 0.0
    %723 = vmatpush1.msra.mxu0 0.0
    %724 = vmatprep.subr.mxu0 0.0
    %725 = vmatpush1.msra.mxu0 0.0
    %726 = vmatprep.subr.mxu0 0.0
    %727 = vmatpush1.msra.mxu0 0.0
    %728 = vmatprep.subr.mxu0 0.0
    %729 = vmatpush1.msra.mxu0 0.0
    %730 = vmatprep.subr.mxu0 0.0
    %731 = vmatpush1.msra.mxu0 0.0
    %732 = vmatprep.subr.mxu0 0.0
    %733 = vmatpush1.msra.mxu0 0.0
    %734 = vmatprep.subr.mxu0 0.0
    %735 = vmatpush1.msra.mxu0 0.0
    %736 = vmatprep.subr.mxu0 0.0
    %737 = vmatpush1.msra.mxu0 0.0
    %738 = vmatprep.subr.mxu0 0.0
    %739 = vmatpush1.msra.mxu0 0.0
    %740 = vmatprep.subr.mxu0 0.0
    %741 = vmatpush1.msra.mxu0 0.0
    %742 = vmatprep.subr.mxu0 0.0
    %743 = vmatpush1.msra.mxu0 0.0
    %744 = vmatprep.subr.mxu0 0.0
    %745 = vmatpush1.msra.mxu0 0.0
    %746 = vmatprep.subr.mxu0 0.0
    %747 = vmatpush1.msra.mxu0 0.0
    %748 = vmatprep.subr.mxu0 0.0
    %749 = vmatpush1.msra.mxu0 0.0
    %750 = vmatprep.subr.mxu0 0.0
    %751 = vmatpush1.msra.mxu0 0.0
    %752 = vmatprep.subr.mxu0 0.0
    %753 = vmatpush1.msra.mxu0 0.0
    %754 = vmatprep.subr.mxu0 0.0
    %755 = vmatpush1.msra.mxu0 0.0
    %756 = vmatprep.subr.mxu0 0.0
    %757 = vmatpush1.msra.mxu0 0.0
    %758 = vmatprep.subr.mxu0 0.0
    %759 = vmatpush1.msra.mxu0 0.0
    %760 = vmatprep.subr.mxu0 0.0
    %761 = vmatpush1.msra.mxu0 0.0
    %762 = vmatprep.subr.mxu0 0.0
    %763 = vmatpush1.msra.mxu0 0.0
    %764 = vmatprep.subr.mxu0 0.0
    %765 = vmatpush1.msra.mxu0 0.0
    %766 = vmatprep.subr.mxu0 0.0
    %767 = vmatpush1.msra.mxu0 0.0
    %768 = vmatprep.subr.mxu0 0.0
    %769 = vmatpush1.msra.mxu0 0.0
    %770 = vmatprep.subr.mxu0 0.0
    %771 = vmatpush1.msra.mxu0 0.0
    %772 = vmatprep.subr.mxu0 0.0
    %773 = vmatpush1.msra.mxu0 0.0
    %774 = vmatprep.mubr.f32.mxu0 0.0
    %775 = vmatmul.mubr.f32.gmra.mrb[0].mxu0 %v708
    %v776 = vpop.f32.mrb[0].mxu0
    %v777 = vadd.f32 0.0, %v776
    %v778 = vpop.f32.mrb[0].mxu0
    %779 = vdwg.mxu0
    %782 = vrot.lane.b32.xlu0 %v530, 32
    %v783 = vpop.permute.xlu0 %782
    %784 = vrot.lane.b32.xlu0 %v531, 32
    %v785 = vpop.permute.xlu0 %784
    %v789 = vsel %vm361, %v527, 0
    %791 = vmatprep.subr.mxu0 0.0
    %792 = vmatpush1.msra.mxu0 %v783
    %793 = vmatprep.subr.mxu0 0.0
    %794 = vmatpush1.msra.mxu0 %v785
    %795 = vmatprep.subr.mxu0 0.0
    %796 = vmatpush1.msra.mxu0 0.0
    %797 = vmatprep.subr.mxu0 0.0
    %798 = vmatpush1.msra.mxu0 0.0
    %799 = vmatprep.subr.mxu0 0.0
    %800 = vmatpush1.msra.mxu0 0.0
    %801 = vmatprep.subr.mxu0 0.0
    %802 = vmatpush1.msra.mxu0 0.0
    %803 = vmatprep.subr.mxu0 0.0
    %804 = vmatpush1.msra.mxu0 0.0
    %805 = vmatprep.subr.mxu0 0.0
    %806 = vmatpush1.msra.mxu0 0.0
    %807 = vmatprep.subr.mxu0 0.0
    %808 = vmatpush1.msra.mxu0 0.0
    %809 = vmatprep.subr.mxu0 0.0
    %810 = vmatpush1.msra.mxu0 0.0
    %811 = vmatprep.subr.mxu0 0.0
    %812 = vmatpush1.msra.mxu0 0.0
    %813 = vmatprep.subr.mxu0 0.0
    %814 = vmatpush1.msra.mxu0 0.0
    %815 = vmatprep.subr.mxu0 0.0
    %816 = vmatpush1.msra.mxu0 0.0
    %817 = vmatprep.subr.mxu0 0.0
    %818 = vmatpush1.msra.mxu0 0.0
    %819 = vmatprep.subr.mxu0 0.0
    %820 = vmatpush1.msra.mxu0 0.0
    %821 = vmatprep.subr.mxu0 0.0
    %822 = vmatpush1.msra.mxu0 0.0
    %823 = vmatprep.subr.mxu0 0.0
    %824 = vmatpush1.msra.mxu0 0.0
    %825 = vmatprep.subr.mxu0 0.0
    %826 = vmatpush1.msra.mxu0 0.0
    %827 = vmatprep.subr.mxu0 0.0
    %828 = vmatpush1.msra.mxu0 0.0
    %829 = vmatprep.subr.mxu0 0.0
    %830 = vmatpush1.msra.mxu0 0.0
    %831 = vmatprep.subr.mxu0 0.0
    %832 = vmatpush1.msra.mxu0 0.0
    %833 = vmatprep.subr.mxu0 0.0
    %834 = vmatpush1.msra.mxu0 0.0
    %835 = vmatprep.subr.mxu0 0.0
    %836 = vmatpush1.msra.mxu0 0.0
    %837 = vmatprep.subr.mxu0 0.0
    %838 = vmatpush1.msra.mxu0 0.0
    %839 = vmatprep.subr.mxu0 0.0
    %840 = vmatpush1.msra.mxu0 0.0
    %841 = vmatprep.subr.mxu0 0.0
    %842 = vmatpush1.msra.mxu0 0.0
    %843 = vmatprep.subr.mxu0 0.0
    %844 = vmatpush1.msra.mxu0 0.0
    %845 = vmatprep.subr.mxu0 0.0
    %846 = vmatpush1.msra.mxu0 0.0
    %847 = vmatprep.subr.mxu0 0.0
    %848 = vmatpush1.msra.mxu0 0.0
    %849 = vmatprep.subr.mxu0 0.0
    %850 = vmatpush1.msra.mxu0 0.0
    %851 = vmatprep.subr.mxu0 0.0
    %852 = vmatpush1.msra.mxu0 0.0
    %853 = vmatprep.subr.mxu0 0.0
    %854 = vmatpush1.msra.mxu0 0.0
    %855 = vmatprep.mubr.f32.mxu0 0.0
    %856 = vmatmul.mubr.f32.gmra.mrb[0].mxu0 %v789
    %v857 = vpop.f32.mrb[0].mxu0
    %v858 = vadd.f32 %v777, %v857
    %v859 = vpop.f32.mrb[0].mxu0
    %860 = vdwg.mxu0
    %862 = vrot.lane.b32.xlu0 %v355, 112
    %v863 = vpop.permute.xlu0 %862
    %v864 = vsel %vm361, %v355, 0
    %v866 = vsel %vm361, %v863, 0
    %868 = vmatprep.subr.mxu0 0.0
    %869 = vmatpush1.xpose.msra.mxu0 %v866
    %870 = vmatprep.subr.mxu0 0.0
    %871 = vmatpush1.xpose.msra.mxu0 0.0
    %872 = vmatprep.subr.mxu0 0.0
    %873 = vmatpush1.xpose.msra.mxu0 0.0
    %874 = vmatprep.subr.mxu0 0.0
    %875 = vmatpush1.xpose.msra.mxu0 0.0
    %876 = vmatprep.subr.mxu0 0.0
    %877 = vmatpush1.xpose.msra.mxu0 0.0
    %878 = vmatprep.subr.mxu0 0.0
    %879 = vmatpush1.xpose.msra.mxu0 0.0
    %880 = vmatprep.subr.mxu0 0.0
    %881 = vmatpush1.xpose.msra.mxu0 0.0
    %882 = vmatprep.subr.mxu0 0.0
    %883 = vmatpush1.xpose.msra.mxu0 0.0
    %884 = vmatprep.subr.mxu0 0.0
    %885 = vmatpush1.xpose.msra.mxu0 0.0
    %886 = vmatprep.subr.mxu0 0.0
    %887 = vmatpush1.xpose.msra.mxu0 0.0
    %888 = vmatprep.subr.mxu0 0.0
    %889 = vmatpush1.xpose.msra.mxu0 0.0
    %890 = vmatprep.subr.mxu0 0.0
    %891 = vmatpush1.xpose.msra.mxu0 0.0
    %892 = vmatprep.subr.mxu0 0.0
    %893 = vmatpush1.xpose.msra.mxu0 0.0
    %894 = vmatprep.subr.mxu0 0.0
    %895 = vmatpush1.xpose.msra.mxu0 0.0
    %896 = vmatprep.subr.mxu0 0.0
    %897 = vmatpush1.xpose.msra.mxu0 0.0
    %898 = vmatprep.subr.mxu0 0.0
    %899 = vmatpush1.xpose.msra.mxu0 0.0
    %900 = vmatprep.subr.mxu0 0.0
    %901 = vmatpush1.xpose.msra.mxu0 0.0
    %902 = vmatprep.subr.mxu0 0.0
    %903 = vmatpush1.xpose.msra.mxu0 0.0
    %904 = vmatprep.subr.mxu0 0.0
    %905 = vmatpush1.xpose.msra.mxu0 0.0
    %906 = vmatprep.subr.mxu0 0.0
    %907 = vmatpush1.xpose.msra.mxu0 0.0
    %908 = vmatprep.subr.mxu0 0.0
    %909 = vmatpush1.xpose.msra.mxu0 0.0
    %910 = vmatprep.subr.mxu0 0.0
    %911 = vmatpush1.xpose.msra.mxu0 0.0
    %912 = vmatprep.subr.mxu0 0.0
    %913 = vmatpush1.xpose.msra.mxu0 0.0
    %914 = vmatprep.subr.mxu0 0.0
    %915 = vmatpush1.xpose.msra.mxu0 0.0
    %916 = vmatprep.subr.mxu0 0.0
    %917 = vmatpush1.xpose.msra.mxu0 0.0
    %918 = vmatprep.subr.mxu0 0.0
    %919 = vmatpush1.xpose.msra.mxu0 0.0
    %920 = vmatprep.subr.mxu0 0.0
    %921 = vmatpush1.xpose.msra.mxu0 0.0
    %922 = vmatprep.subr.mxu0 0.0
    %923 = vmatpush1.xpose.msra.mxu0 0.0
    %924 = vmatprep.subr.mxu0 0.0
    %925 = vmatpush1.xpose.msra.mxu0 0.0
    %926 = vmatprep.subr.mxu0 0.0
    %927 = vmatpush1.xpose.msra.mxu0 0.0
    %928 = vmatprep.subr.mxu0 0.0
    %929 = vmatpush1.xpose.msra.mxu0 0.0
    %930 = vmatprep.subr.mxu0 0.0
    %931 = vmatpush1.xpose.msra.mxu0 0.0
    %932 = vmatprep.mubr.f32.mxu0 0.0
    %933 = vmatmul.mubr.f32.gmra.mrb[0].mxu0 %v864
    %v934 = vpop.f32.mrb[0].mxu0
    %v935 = vadd.f32 0.0, %v934
    %v936 = vpop.f32.mrb[0].mxu0
    %937 = vdwg.mxu0
    %v938 = vmul.f32 %v935, 0.25
    %v939 = vlaneseq
    %v940 = vshrl.u32 %v939, 7
    %v941 = vsub.s32 1, %v940
    %v942 = vrot.slane %v260, %v941
    %v943 = vadd.f32 %v938, %v942
    %v944 = vsel %vm442, %v943, -inf
    %945 = vmax.xlane.f32.xlu0 %v944
    %v946 = vpop.xlane.xlu0 %945
    %v947 = vsub.f32 %v943, %v946
    %v948 = vmul.f32 %v947, 1.442695
    %v949 = vpow.pop %v948
    %v950 = vsel %vm442, %v949, 0.0
    %951 = vadd.xlane.f32.xlu0 %v950
    %v952 = vpop.xlane.xlu0 %951
    %v953 = vrcp.pop %v952
    %v954 = vmul.f32 %v949, %v953
    %955 = vrot.lane.b32.xlu0 %v355, 96
    %v956 = vpop.permute.xlu0 %955
    %v959 = vsel %vm442, %v954, 0
    %961 = vmatprep.subr.mxu0 0.0
    %962 = vmatpush1.msra.mxu0 %v956
    %963 = vmatprep.subr.mxu0 0.0
    %964 = vmatpush1.msra.mxu0 0.0
    %965 = vmatprep.subr.mxu0 0.0
    %966 = vmatpush1.msra.mxu0 0.0
    %967 = vmatprep.subr.mxu0 0.0
    %968 = vmatpush1.msra.mxu0 0.0
    %969 = vmatprep.subr.mxu0 0.0
    %970 = vmatpush1.msra.mxu0 0.0
    %971 = vmatprep.subr.mxu0 0.0
    %972 = vmatpush1.msra.mxu0 0.0
    %973 = vmatprep.subr.mxu0 0.0
    %974 = vmatpush1.msra.mxu0 0.0
    %975 = vmatprep.subr.mxu0 0.0
    %976 = vmatpush1.msra.mxu0 0.0
    %977 = vmatprep.subr.mxu0 0.0
    %978 = vmatpush1.msra.mxu0 0.0
    %979 = vmatprep.subr.mxu0 0.0
    %980 = vmatpush1.msra.mxu0 0.0
    %981 = vmatprep.subr.mxu0 0.0
    %982 = vmatpush1.msra.mxu0 0.0
    %983 = vmatprep.subr.mxu0 0.0
    %984 = vmatpush1.msra.mxu0 0.0
    %985 = vmatprep.subr.mxu0 0.0
    %986 = vmatpush1.msra.mxu0 0.0
    %987 = vmatprep.subr.mxu0 0.0
    %988 = vmatpush1.msra.mxu0 0.0
    %989 = vmatprep.subr.mxu0 0.0
    %990 = vmatpush1.msra.mxu0 0.0
    %991 = vmatprep.subr.mxu0 0.0
    %992 = vmatpush1.msra.mxu0 0.0
    %993 = vmatprep.subr.mxu0 0.0
    %994 = vmatpush1.msra.mxu0 0.0
    %995 = vmatprep.subr.mxu0 0.0
    %996 = vmatpush1.msra.mxu0 0.0
    %997 = vmatprep.subr.mxu0 0.0
    %998 = vmatpush1.msra.mxu0 0.0
    %999 = vmatprep.subr.mxu0 0.0
    %1000 = vmatpush1.msra.mxu0 0.0
    %1001 = vmatprep.subr.mxu0 0.0
    %1002 = vmatpush1.msra.mxu0 0.0
    %1003 = vmatprep.subr.mxu0 0.0
    %1004 = vmatpush1.msra.mxu0 0.0
    %1005 = vmatprep.subr.mxu0 0.0
    %1006 = vmatpush1.msra.mxu0 0.0
    %1007 = vmatprep.subr.mxu0 0.0
    %1008 = vmatpush1.msra.mxu0 0.0
    %1009 = vmatprep.subr.mxu0 0.0
    %1010 = vmatpush1.msra.mxu0 0.0
    %1011 = vmatprep.subr.mxu0 0.0
    %1012 = vmatpush1.msra.mxu0 0.0
    %1013 = vmatprep.subr.mxu0 0.0
    %1014 = vmatpush1.msra.mxu0 0.0
    %1015 = vmatprep.subr.mxu0 0.0
    %1016 = vmatpush1.msra.mxu0 0.0
    %1017 = vmatprep.subr.mxu0 0.0
    %1018 = vmatpush1.msra.mxu0 0.0
    %1019 = vmatprep.subr.mxu0 0.0
    %1020 = vmatpush1.msra.mxu0 0.0
    %1021 = vmatprep.subr.mxu0 0.0
    %1022 = vmatpush1.msra.mxu0 0.0
    %1023 = vmatprep.subr.mxu0 0.0
    %1024 = vmatpush1.msra.mxu0 0.0
    %1025 = vmatprep.mubr.f32.mxu0 0.0
    %1026 = vmatmul.mubr.f32.gmra.mrb[0].mxu0 %v959
    %v1027 = vpop.f32.mrb[0].mxu0
    %v1028 = vadd.f32 0.0, %v1027
    %v1029 = vpop.f32.mrb[0].mxu0
    %1030 = vdwg.mxu0
    %1031 = vrot.lane.b32.xlu0 %v355, 80
    %v1032 = vpop.permute.xlu0 %1031
    %1033 = vrot.lane.b32.xlu0 %v355, 64
    %v1034 = vpop.permute.xlu0 %1033
    %v1035 = vsel %vm361, %v1032, 0
    %v1037 = vsel %vm361, %v1034, 0
    %1039 = vmatprep.subr.mxu0 0.0
    %1040 = vmatpush1.xpose.msra.mxu0 %v1037
    %1041 = vmatprep.subr.mxu0 0.0
    %1042 = vmatpush1.xpose.msra.mxu0 0.0
    %1043 = vmatprep.subr.mxu0 0.0
    %1044 = vmatpush1.xpose.msra.mxu0 0.0
    %1045 = vmatprep.subr.mxu0 0.0
    %1046 = vmatpush1.xpose.msra.mxu0 0.0
    %1047 = vmatprep.subr.mxu0 0.0
    %1048 = vmatpush1.xpose.msra.mxu0 0.0
    %1049 = vmatprep.subr.mxu0 0.0
    %1050 = vmatpush1.xpose.msra.mxu0 0.0
    %1051 = vmatprep.subr.mxu0 0.0
    %1052 = vmatpush1.xpose.msra.mxu0 0.0
    %1053 = vmatprep.subr.mxu0 0.0
    %1054 = vmatpush1.xpose.msra.mxu0 0.0
    %1055 = vmatprep.subr.mxu0 0.0
    %1056 = vmatpush1.xpose.msra.mxu0 0.0
    %1057 = vmatprep.subr.mxu0 0.0
    %1058 = vmatpush1.xpose.msra.mxu0 0.0
    %1059 = vmatprep.subr.mxu0 0.0
    %1060 = vmatpush1.xpose.msra.mxu0 0.0
    %1061 = vmatprep.subr.mxu0 0.0
    %1062 = vmatpush1.xpose.msra.mxu0 0.0
    %1063 = vmatprep.subr.mxu0 0.0
    %1064 = vmatpush1.xpose.msra.mxu0 0.0
    %1065 = vmatprep.subr.mxu0 0.0
    %1066 = vmatpush1.xpose.msra.mxu0 0.0
    %1067 = vmatprep.subr.mxu0 0.0
    %1068 = vmatpush1.xpose.msra.mxu0 0.0
    %1069 = vmatprep.subr.mxu0 0.0
    %1070 = vmatpush1.xpose.msra.mxu0 0.0
    %1071 = vmatprep.subr.mxu0 0.0
    %1072 = vmatpush1.xpose.msra.mxu0 0.0
    %1073 = vmatprep.subr.mxu0 0.0
    %1074 = vmatpush1.xpose.msra.mxu0 0.0
    %1075 = vmatprep.subr.mxu0 0.0
    %1076 = vmatpush1.xpose.msra.mxu0 0.0
    %1077 = vmatprep.subr.mxu0 0.0
    %1078 = vmatpush1.xpose.msra.mxu0 0.0
    %1079 = vmatprep.subr.mxu0 0.0
    %1080 = vmatpush1.xpose.msra.mxu0 0.0
    %1081 = vmatprep.subr.mxu0 0.0
    %1082 = vmatpush1.xpose.msra.mxu0 0.0
    %1083 = vmatprep.subr.mxu0 0.0
    %1084 = vmatpush1.xpose.msra.mxu0 0.0
    %1085 = vmatprep.subr.mxu0 0.0
    %1086 = vmatpush1.xpose.msra.mxu0 0.0
    %1087 = vmatprep.subr.mxu0 0.0
    %1088 = vmatpush1.xpose.msra.mxu0 0.0
    %1089 = vmatprep.subr.mxu0 0.0
    %1090 = vmatpush1.xpose.msra.mxu0 0.0
    %1091 = vmatprep.subr.mxu0 0.0
    %1092 = vmatpush1.xpose.msra.mxu0 0.0
    %1093 = vmatprep.subr.mxu0 0.0
    %1094 = vmatpush1.xpose.msra.mxu0 0.0
    %1095 = vmatprep.subr.mxu0 0.0
    %1096 = vmatpush1.xpose.msra.mxu0 0.0
    %1097 = vmatprep.subr.mxu0 0.0
    %1098 = vmatpush1.xpose.msra.mxu0 0.0
    %1099 = vmatprep.subr.mxu0 0.0
    %1100 = vmatpush1.xpose.msra.mxu0 0.0
    %1101 = vmatprep.subr.mxu0 0.0
    %1102 = vmatpush1.xpose.msra.mxu0 0.0
    %1103 = vmatprep.mubr.f32.mxu0 0.0
    %1104 = vmatmul.mubr.f32.gmra.mrb[0].mxu0 %v1035
    %v1105 = vpop.f32.mrb[0].mxu0
    %v1106 = vadd.f32 0.0, %v1105
    %v1107 = vpop.f32.mrb[0].mxu0
    %1108 = vdwg.mxu0
    %v1109 = vmul.f32 %v1106, 0.25
    %v1110 = vadd.f32 %v1109, %v942
    %v1111 = vsel %vm442, %v1110, -inf
    %1112 = vmax.xlane.f32.xlu0 %v1111
    %v1113 = vpop.xlane.xlu0 %1112
    %v1114 = vsub.f32 %v1110, %v1113
    %v1115 = vmul.f32 %v1114, 1.442695
    %v1116 = vpow.pop %v1115
    %v1117 = vsel %vm442, %v1116, 0.0
    %1118 = vadd.xlane.f32.xlu0 %v1117
    %v1119 = vpop.xlane.xlu0 %1118
    %v1120 = vrcp.pop %v1119
    %v1121 = vmul.f32 %v1116, %v1120
    %1122 = vrot.lane.b32.xlu0 %v355, 48
    %v1123 = vpop.permute.xlu0 %1122
    %v1126 = vsel %vm442, %v1121, 0
    %1128 = vmatprep.subr.mxu0 0.0
    %1129 = vmatpush1.msra.mxu0 %v1123
    %1130 = vmatprep.subr.mxu0 0.0
    %1131 = vmatpush1.msra.mxu0 0.0
    %1132 = vmatprep.subr.mxu0 0.0
    %1133 = vmatpush1.msra.mxu0 0.0
    %1134 = vmatprep.subr.mxu0 0.0
    %1135 = vmatpush1.msra.mxu0 0.0
    %1136 = vmatprep.subr.mxu0 0.0
    %1137 = vmatpush1.msra.mxu0 0.0
    %1138 = vmatprep.subr.mxu0 0.0
    %1139 = vmatpush1.msra.mxu0 0.0
    %1140 = vmatprep.subr.mxu0 0.0
    %1141 = vmatpush1.msra.mxu0 0.0
    %1142 = vmatprep.subr.mxu0 0.0
    %1143 = vmatpush1.msra.mxu0 0.0
    %1144 = vmatprep.subr.mxu0 0.0
    %1145 = vmatpush1.msra.mxu0 0.0
    %1146 = vmatprep.subr.mxu0 0.0
    %1147 = vmatpush1.msra.mxu0 0.0
    %1148 = vmatprep.subr.mxu0 0.0
    %1149 = vmatpush1.msra.mxu0 0.0
    %1150 = vmatprep.subr.mxu0 0.0
    %1151 = vmatpush1.msra.mxu0 0.0
    %1152 = vmatprep.subr.mxu0 0.0
    %1153 = vmatpush1.msra.mxu0 0.0
    %1154 = vmatprep.subr.mxu0 0.0
    %1155 = vmatpush1.msra.mxu0 0.0
    %1156 = vmatprep.subr.mxu0 0.0
    %1157 = vmatpush1.msra.mxu0 0.0
    %1158 = vmatprep.subr.mxu0 0.0
    %1159 = vmatpush1.msra.mxu0 0.0
    %1160 = vmatprep.subr.mxu0 0.0
    %1161 = vmatpush1.msra.mxu0 0.0
    %1162 = vmatprep.subr.mxu0 0.0
    %1163 = vmatpush1.msra.mxu0 0.0
    %1164 = vmatprep.subr.mxu0 0.0
    %1165 = vmatpush1.msra.mxu0 0.0
    %1166 = vmatprep.subr.mxu0 0.0
    %1167 = vmatpush1.msra.mxu0 0.0
    %1168 = vmatprep.subr.mxu0 0.0
    %1169 = vmatpush1.msra.mxu0 0.0
    %1170 = vmatprep.subr.mxu0 0.0
    %1171 = vmatpush1.msra.mxu0 0.0
    %1172 = vmatprep.subr.mxu0 0.0
    %1173 = vmatpush1.msra.mxu0 0.0
    %1174 = vmatprep.subr.mxu0 0.0
    %1175 = vmatpush1.msra.mxu0 0.0
    %1176 = vmatprep.subr.mxu0 0.0
    %1177 = vmatpush1.msra.mxu0 0.0
    %1178 = vmatprep.subr.mxu0 0.0
    %1179 = vmatpush1.msra.mxu0 0.0
    %1180 = vmatprep.subr.mxu0 0.0
    %1181 = vmatpush1.msra.mxu0 0.0
    %1182 = vmatprep.subr.mxu0 0.0
    %1183 = vmatpush1.msra.mxu0 0.0
    %1184 = vmatprep.subr.mxu0 0.0
    %1185 = vmatpush1.msra.mxu0 0.0
    %1186 = vmatprep.subr.mxu0 0.0
    %1187 = vmatpush1.msra.mxu0 0.0
    %1188 = vmatprep.subr.mxu0 0.0
    %1189 = vmatpush1.msra.mxu0 0.0
    %1190 = vmatprep.subr.mxu0 0.0
    %1191 = vmatpush1.msra.mxu0 0.0
    %1192 = vmatprep.mubr.f32.mxu0 0.0
    %1193 = vmatmul.mubr.f32.gmra.mrb[0].mxu0 %v1126
    %v1194 = vpop.f32.mrb[0].mxu0
    %v1195 = vadd.f32 0.0, %v1194
    %v1196 = vpop.f32.mrb[0].mxu0
    %1197 = vdwg.mxu0
    %v1199 = vsel %vm361, %v1195, 0
    %1201 = vmatprep.subr.mxu0 0.0
    %1202 = vmatpush1.msra.mxu0 %v702
    %1203 = vmatprep.subr.mxu0 0.0
    %1204 = vmatpush1.msra.mxu0 %v704
    %1205 = vmatprep.subr.mxu0 0.0
    %1206 = vmatpush1.msra.mxu0 0.0
    %1207 = vmatprep.subr.mxu0 0.0
    %1208 = vmatpush1.msra.mxu0 0.0
    %1209 = vmatprep.subr.mxu0 0.0
    %1210 = vmatpush1.msra.mxu0 0.0
    %1211 = vmatprep.subr.mxu0 0.0
    %1212 = vmatpush1.msra.mxu0 0.0
    %1213 = vmatprep.subr.mxu0 0.0
    %1214 = vmatpush1.msra.mxu0 0.0
    %1215 = vmatprep.subr.mxu0 0.0
    %1216 = vmatpush1.msra.mxu0 0.0
    %1217 = vmatprep.subr.mxu0 0.0
    %1218 = vmatpush1.msra.mxu0 0.0
    %1219 = vmatprep.subr.mxu0 0.0
    %1220 = vmatpush1.msra.mxu0 0.0
    %1221 = vmatprep.subr.mxu0 0.0
    %1222 = vmatpush1.msra.mxu0 0.0
    %1223 = vmatprep.subr.mxu0 0.0
    %1224 = vmatpush1.msra.mxu0 0.0
    %1225 = vmatprep.subr.mxu0 0.0
    %1226 = vmatpush1.msra.mxu0 0.0
    %1227 = vmatprep.subr.mxu0 0.0
    %1228 = vmatpush1.msra.mxu0 0.0
    %1229 = vmatprep.subr.mxu0 0.0
    %1230 = vmatpush1.msra.mxu0 0.0
    %1231 = vmatprep.subr.mxu0 0.0
    %1232 = vmatpush1.msra.mxu0 0.0
    %1233 = vmatprep.subr.mxu0 0.0
    %1234 = vmatpush1.msra.mxu0 0.0
    %1235 = vmatprep.subr.mxu0 0.0
    %1236 = vmatpush1.msra.mxu0 0.0
    %1237 = vmatprep.subr.mxu0 0.0
    %1238 = vmatpush1.msra.mxu0 0.0
    %1239 = vmatprep.subr.mxu0 0.0
    %1240 = vmatpush1.msra.mxu0 0.0
    %1241 = vmatprep.subr.mxu0 0.0
    %1242 = vmatpush1.msra.mxu0 0.0
    %1243 = vmatprep.subr.mxu0 0.0
    %1244 = vmatpush1.msra.mxu0 0.0
    %1245 = vmatprep.subr.mxu0 0.0
    %1246 = vmatpush1.msra.mxu0 0.0
    %1247 = vmatprep.subr.mxu0 0.0
    %1248 = vmatpush1.msra.mxu0 0.0
    %1249 = vmatprep.subr.mxu0 0.0
    %1250 = vmatpush1.msra.mxu0 0.0
    %1251 = vmatprep.subr.mxu0 0.0
    %1252 = vmatpush1.msra.mxu0 0.0
    %1253 = vmatprep.subr.mxu0 0.0
    %1254 = vmatpush1.msra.mxu0 0.0
    %1255 = vmatprep.subr.mxu0 0.0
    %1256 = vmatpush1.msra.mxu0 0.0
    %1257 = vmatprep.subr.mxu0 0.0
    %1258 = vmatpush1.msra.mxu0 0.0
    %1259 = vmatprep.subr.mxu0 0.0
    %1260 = vmatpush1.msra.mxu0 0.0
    %1261 = vmatprep.subr.mxu0 0.0
    %1262 = vmatpush1.msra.mxu0 0.0
    %1263 = vmatprep.subr.mxu0 0.0
    %1264 = vmatpush1.msra.mxu0 0.0
    %1265 = vmatprep.mubr.f32.mxu0 0.0
    %1266 = vmatmul.mubr.f32.gmra.mrb[0].mxu0 %v1199
    %v1267 = vpop.f32.mrb[0].mxu0
    %v1268 = vadd.f32 0.0, %v1267
    %v1269 = vpop.f32.mrb[0].mxu0
    %1270 = vdwg.mxu0
    %v1272 = vsel %vm361, %v1028, 0
    %1274 = vmatprep.subr.mxu0 0.0
    %1275 = vmatpush1.msra.mxu0 %v783
    %1276 = vmatprep.subr.mxu0 0.0
    %1277 = vmatpush1.msra.mxu0 %v785
    %1278 = vmatprep.subr.mxu0 0.0
    %1279 = vmatpush1.msra.mxu0 0.0
    %1280 = vmatprep.subr.mxu0 0.0
    %1281 = vmatpush1.msra.mxu0 0.0
    %1282 = vmatprep.subr.mxu0 0.0
    %1283 = vmatpush1.msra.mxu0 0.0
    %1284 = vmatprep.subr.mxu0 0.0
    %1285 = vmatpush1.msra.mxu0 0.0
    %1286 = vmatprep.subr.mxu0 0.0
    %1287 = vmatpush1.msra.mxu0 0.0
    %1288 = vmatprep.subr.mxu0 0.0
    %1289 = vmatpush1.msra.mxu0 0.0
    %1290 = vmatprep.subr.mxu0 0.0
    %1291 = vmatpush1.msra.mxu0 0.0
    %1292 = vmatprep.subr.mxu0 0.0
    %1293 = vmatpush1.msra.mxu0 0.0
    %1294 = vmatprep.subr.mxu0 0.0
    %1295 = vmatpush1.msra.mxu0 0.0
    %1296 = vmatprep.subr.mxu0 0.0
    %1297 = vmatpush1.msra.mxu0 0.0
    %1298 = vmatprep.subr.mxu0 0.0
    %1299 = vmatpush1.msra.mxu0 0.0
    %1300 = vmatprep.subr.mxu0 0.0
    %1301 = vmatpush1.msra.mxu0 0.0
    %1302 = vmatprep.subr.mxu0 0.0
    %1303 = vmatpush1.msra.mxu0 0.0
    %1304 = vmatprep.subr.mxu0 0.0
    %1305 = vmatpush1.msra.mxu0 0.0
    %1306 = vmatprep.subr.mxu0 0.0
    %1307 = vmatpush1.msra.mxu0 0.0
    %1308 = vmatprep.subr.mxu0 0.0
    %1309 = vmatpush1.msra.mxu0 0.0
    %1310 = vmatprep.subr.mxu0 0.0
    %1311 = vmatpush1.msra.mxu0 0.0
    %1312 = vmatprep.subr.mxu0 0.0
    %1313 = vmatpush1.msra.mxu0 0.0
    %1314 = vmatprep.subr.mxu0 0.0
    %1315 = vmatpush1.msra.mxu0 0.0
    %1316 = vmatprep.subr.mxu0 0.0
    %1317 = vmatpush1.msra.mxu0 0.0
    %1318 = vmatprep.subr.mxu0 0.0
    %1319 = vmatpush1.msra.mxu0 0.0
    %1320 = vmatprep.subr.mxu0 0.0
    %1321 = vmatpush1.msra.mxu0 0.0
    %1322 = vmatprep.subr.mxu0 0.0
    %1323 = vmatpush1.msra.mxu0 0.0
    %1324 = vmatprep.subr.mxu0 0.0
    %1325 = vmatpush1.msra.mxu0 0.0
    %1326 = vmatprep.subr.mxu0 0.0
    %1327 = vmatpush1.msra.mxu0 0.0
    %1328 = vmatprep.subr.mxu0 0.0
    %1329 = vmatpush1.msra.mxu0 0.0
    %1330 = vmatprep.subr.mxu0 0.0
    %1331 = vmatpush1.msra.mxu0 0.0
    %1332 = vmatprep.subr.mxu0 0.0
    %1333 = vmatpush1.msra.mxu0 0.0
    %1334 = vmatprep.subr.mxu0 0.0
    %1335 = vmatpush1.msra.mxu0 0.0
    %1336 = vmatprep.subr.mxu0 0.0
    %1337 = vmatpush1.msra.mxu0 0.0
    %1338 = vmatprep.mubr.f32.mxu0 0.0
    %1339 = vmatmul.mubr.f32.gmra.mrb[0].mxu0 %v1272
    %v1340 = vpop.f32.mrb[0].mxu0
    %v1341 = vadd.f32 %v1268, %v1340
    %v1342 = vpop.f32.mrb[0].mxu0
    %1343 = vdwg.mxu0
    %v1344 = vlaneseq
    %v1345 = vshrl.u32 %v1344, 7
    %v1346 = vsub.s32 0, %v1345
    %v1347 = vrot.slane %v262, %v1346
    %v1348 = vadd.f32 %v858, %v1347
    %v1349 = vadd.f32 %v1341, %v1347
    %v1350 = vadd.f32 %v255, %v1348
    %v1351 = vadd.f32 %v256, %v1349
    %v1352 = vsel %vm217, %v1350, 0.0
    %1353 = vadd.xlane.f32.xlu0 %v1352
    %v1354 = vpop.xlane.xlu0 %1353
    %v1355 = vsel %vm217, %v1351, 0.0
    %1356 = vadd.xlane.f32.xlu0 %v1355
    %v1357 = vpop.xlane.xlu0 %1356
    %v1358 = vmul.f32 %v1354, %v224
    %v1359 = vmul.f32 %v1357, %v224
    %v1360 = vsub.f32 %v1350, %v1358
    %v1361 = vsub.f32 %v1351, %v1359
    %v1362 = vmul.f32 %v1360, %v1360
    %v1363 = vmul.f32 %v1361, %v1361
    %v1364 = vsel %vm217, %v1362, 0.0
    %1365 = vadd.xlane.f32.xlu0 %v1364
    %v1366 = vpop.xlane.xlu0 %1365
    %v1367 = vsel %vm217, %v1363, 0.0
    %1368 = vadd.xlane.f32.xlu0 %v1367
    %v1369 = vpop.xlane.xlu0 %1368
    %v1370 = vmul.f32 %v1366, %v224
    %v1371 = vmul.f32 %v1369, %v224
    %v1372 = vadd.f32 %v1370, 1e-12
    %v1373 = vadd.f32 %v1371, 1e-12
    %v1374 = vrsqrt.pop %v1372
    %v1375 = vrsqrt.pop %v1373
    %v1376 = vmul.f32 %v1360, %v1374
    %v1377 = vmul.f32 %v1361, %v1375
    %v1378 = vlaneseq
    %v1379 = vshrl.u32 %v1378, 7
    %v1380 = vsub.s32 0, %v1379
    %v1381 = vrot.slane %v263, %v1380
    %v1382 = vmul.f32 %v1376, %v1381
    %v1383 = vmul.f32 %v1377, %v1381
    %v1384 = vlaneseq
    %v1385 = vshrl.u32 %v1384, 7
    %v1386 = vsub.s32 0, %v1385
    %v1387 = vrot.slane %v264, %v1386
    %v1388 = vadd.f32 %v1382, %v1387
    %v1389 = vadd.f32 %v1383, %v1387
    %v1390 = vld [vmem:[%s5 + $0x8] sm:$0xff]
    %v1391 = vld [vmem:[%s5 + $0x18] sm:$0xff]
    %v1392 = vld [vmem:[%s5 + $0x28] sm:$0xff]
    %v1393 = vld [vmem:[%s5 + $0x38] sm:$0xff]
    %v1394 = vlaneseq
    %v1395 = vshrl.u32 %v1394, 7
    %v1396 = vsub.s32 0, %v1395
    %v1397 = vrot.slane %v265, %v1396
    %v1399 = vsel %vm217, %v1388, 0
    %v1402 = vsel %vm217, %v1389, 0
    %1404 = vmatprep.subr.mxu0 0.0
    %1405 = vmatpush1.msra.mxu0 %v1390
    %1406 = vmatprep.subr.mxu0 0.0
    %1407 = vmatpush1.msra.mxu0 %v1391
    %1408 = vmatprep.subr.mxu0 0.0
    %1409 = vmatpush1.msra.mxu0 %v1392
    %1410 = vmatprep.subr.mxu0 0.0
    %1411 = vmatpush1.msra.mxu0 %v1393
    %1412 = vmatprep.subr.mxu0 0.0
    %1413 = vmatpush1.msra.mxu0 0.0
    %1414 = vmatprep.subr.mxu0 0.0
    %1415 = vmatpush1.msra.mxu0 0.0
    %1416 = vmatprep.subr.mxu0 0.0
    %1417 = vmatpush1.msra.mxu0 0.0
    %1418 = vmatprep.subr.mxu0 0.0
    %1419 = vmatpush1.msra.mxu0 0.0
    %1420 = vmatprep.subr.mxu0 0.0
    %1421 = vmatpush1.msra.mxu0 0.0
    %1422 = vmatprep.subr.mxu0 0.0
    %1423 = vmatpush1.msra.mxu0 0.0
    %1424 = vmatprep.subr.mxu0 0.0
    %1425 = vmatpush1.msra.mxu0 0.0
    %1426 = vmatprep.subr.mxu0 0.0
    %1427 = vmatpush1.msra.mxu0 0.0
    %1428 = vmatprep.subr.mxu0 0.0
    %1429 = vmatpush1.msra.mxu0 0.0
    %1430 = vmatprep.subr.mxu0 0.0
    %1431 = vmatpush1.msra.mxu0 0.0
    %1432 = vmatprep.subr.mxu0 0.0
    %1433 = vmatpush1.msra.mxu0 0.0
    %1434 = vmatprep.subr.mxu0 0.0
    %1435 = vmatpush1.msra.mxu0 0.0
    %1436 = vmatprep.subr.mxu0 0.0
    %1437 = vmatpush1.msra.mxu0 0.0
    %1438 = vmatprep.subr.mxu0 0.0
    %1439 = vmatpush1.msra.mxu0 0.0
    %1440 = vmatprep.subr.mxu0 0.0
    %1441 = vmatpush1.msra.mxu0 0.0
    %1442 = vmatprep.subr.mxu0 0.0
    %1443 = vmatpush1.msra.mxu0 0.0
    %1444 = vmatprep.subr.mxu0 0.0
    %1445 = vmatpush1.msra.mxu0 0.0
    %1446 = vmatprep.subr.mxu0 0.0
    %1447 = vmatpush1.msra.mxu0 0.0
    %1448 = vmatprep.subr.mxu0 0.0
    %1449 = vmatpush1.msra.mxu0 0.0
    %1450 = vmatprep.subr.mxu0 0.0
    %1451 = vmatpush1.msra.mxu0 0.0
    %1452 = vmatprep.subr.mxu0 0.0
    %1453 = vmatpush1.msra.mxu0 0.0
    %1454 = vmatprep.subr.mxu0 0.0
    %1455 = vmatpush1.msra.mxu0 0.0
    %1456 = vmatprep.subr.mxu0 0.0
    %1457 = vmatpush1.msra.mxu0 0.0
    %1458 = vmatprep.subr.mxu0 0.0
    %1459 = vmatpush1.msra.mxu0 0.0
    %1460 = vmatprep.subr.mxu0 0.0
    %1461 = vmatpush1.msra.mxu0 0.0
    %1462 = vmatprep.subr.mxu0 0.0
    %1463 = vmatpush1.msra.mxu0 0.0
    %1464 = vmatprep.subr.mxu0 0.0
    %1465 = vmatpush1.msra.mxu0 0.0
    %1466 = vmatprep.subr.mxu0 0.0
    %1467 = vmatpush1.msra.mxu0 0.0
    %1468 = vmatprep.mubr.f32.mxu0 0.0
    %1469 = vmatmul.mubr.f32.gmra.mrb[0].mxu0 %v1399
    %v1470 = vpop.f32.mrb[0].mxu0
    %v1471 = vadd.f32 %v1397, %v1470
    %v1472 = vpop.f32.mrb[0].mxu0
    %1473 = vmatprep.mubr.f32.mxu0 0.0
    %1474 = vmatmul.mubr.f32.gmra.mrb[0].mxu0 %v1402
    %v1475 = vpop.f32.mrb[0].mxu0
    %v1476 = vadd.f32 %v1397, %v1475
    %v1477 = vpop.f32.mrb[0].mxu0
    %1478 = vdwg.mxu0
    %v1479 = vmul.f32 %v1471, 0.5
    %v1480 = vmul.f32 %v1476, 0.5
    %v1481 = vmul.f32 %v1471, 0.044715
    %v1482 = vmul.f32 %v1476, 0.044715
    %v1483 = vmul.f32 %v1481, %v1471
    %v1484 = vmul.f32 %v1482, %v1476
    %v1485 = vmul.f32 %v1483, %v1471
    %v1486 = vmul.f32 %v1484, %v1476
    %v1487 = vadd.f32 %v1471, %v1485
    %v1488 = vadd.f32 %v1476, %v1486
    %v1489 = vmul.f32 %v1487, 0.7978846
    %v1490 = vmul.f32 %v1488, 0.7978846
    %v1491 = vtanh.pop %v1489
    %v1492 = vtanh.pop %v1490
    %v1493 = vadd.f32 %v1491, 1.0
    %v1494 = vadd.f32 %v1492, 1.0
    %v1495 = vmul.f32 %v1479, %v1493
    %v1496 = vmul.f32 %v1480, %v1494
    %v1497 = vlaneseq
    %v1498 = vshrl.u32 %v1497, 7
    %v1499 = vsub.s32 0, %v1498
    %v1500 = vrot.slane %v266, %v1499
    %1505 = vrot.lane.b32.xlu0 %v1390, 64
    %v1506 = vpop.permute.xlu0 %1505
    %1507 = vrot.lane.b32.xlu0 %v1391, 64
    %v1508 = vpop.permute.xlu0 %1507
    %1509 = vrot.lane.b32.xlu0 %v1392, 64
    %v1510 = vpop.permute.xlu0 %1509
    %1511 = vrot.lane.b32.xlu0 %v1393, 64
    %v1512 = vpop.permute.xlu0 %1511
    %vm1513 = vcmask 523264
    %v1515 = vsel %vm1513, %v1495, 0
    %v1518 = vsel %vm1513, %v1496, 0
    %v1520 = vsel %vm1513, %v1506, 0
    %v1522 = vsel %vm1513, %v1508, 0
    %v1524 = vsel %vm1513, %v1510, 0
    %v1526 = vsel %vm1513, %v1512, 0
    %1528 = vmatprep.subr.mxu0 0.0
    %1529 = vmatpush1.xpose.msra.mxu0 %v1520
    %1530 = vmatprep.subr.mxu0 0.0
    %1531 = vmatpush1.xpose.msra.mxu0 %v1522
    %1532 = vmatprep.subr.mxu0 0.0
    %1533 = vmatpush1.xpose.msra.mxu0 %v1524
    %1534 = vmatprep.subr.mxu0 0.0
    %1535 = vmatpush1.xpose.msra.mxu0 %v1526
    %1536 = vmatprep.subr.mxu0 0.0
    %1537 = vmatpush1.xpose.msra.mxu0 0.0
    %1538 = vmatprep.subr.mxu0 0.0
    %1539 = vmatpush1.xpose.msra.mxu0 0.0
    %1540 = vmatprep.subr.mxu0 0.0
    %1541 = vmatpush1.xpose.msra.mxu0 0.0
    %1542 = vmatprep.subr.mxu0 0.0
    %1543 = vmatpush1.xpose.msra.mxu0 0.0
    %1544 = vmatprep.subr.mxu0 0.0
    %1545 = vmatpush1.xpose.msra.mxu0 0.0
    %1546 = vmatprep.subr.mxu0 0.0
    %1547 = vmatpush1.xpose.msra.mxu0 0.0
    %1548 = vmatprep.subr.mxu0 0.0
    %1549 = vmatpush1.xpose.msra.mxu0 0.0
    %1550 = vmatprep.subr.mxu0 0.0
    %1551 = vmatpush1.xpose.msra.mxu0 0.0
    %1552 = vmatprep.subr.mxu0 0.0
    %1553 = vmatpush1.xpose.msra.mxu0 0.0
    %1554 = vmatprep.subr.mxu0 0.0
    %1555 = vmatpush1.xpose.msra.mxu0 0.0
    %1556 = vmatprep.subr.mxu0 0.0
    %1557 = vmatpush1.xpose.msra.mxu0 0.0
    %1558 = vmatprep.subr.mxu0 0.0
    %1559 = vmatpush1.xpose.msra.mxu0 0.0
    %1560 = vmatprep.subr.mxu0 0.0
    %1561 = vmatpush1.xpose.msra.mxu0 0.0
    %1562 = vmatprep.subr.mxu0 0.0
    %1563 = vmatpush1.xpose.msra.mxu0 0.0
    %1564 = vmatprep.subr.mxu0 0.0
    %1565 = vmatpush1.xpose.msra.mxu0 0.0
    %1566 = vmatprep.subr.mxu0 0.0
    %1567 = vmatpush1.xpose.msra.mxu0 0.0
    %1568 = vmatprep.subr.mxu0 0.0
    %1569 = vmatpush1.xpose.msra.mxu0 0.0
    %1570 = vmatprep.subr.mxu0 0.0
    %1571 = vmatpush1.xpose.msra.mxu0 0.0
    %1572 = vmatprep.subr.mxu0 0.0
    %1573 = vmatpush1.xpose.msra.mxu0 0.0
    %1574 = vmatprep.subr.mxu0 0.0
    %1575 = vmatpush1.xpose.msra.mxu0 0.0
    %1576 = vmatprep.subr.mxu0 0.0
    %1577 = vmatpush1.xpose.msra.mxu0 0.0
    %1578 = vmatprep.subr.mxu0 0.0
    %1579 = vmatpush1.xpose.msra.mxu0 0.0
    %1580 = vmatprep.subr.mxu0 0.0
    %1581 = vmatpush1.xpose.msra.mxu0 0.0
    %1582 = vmatprep.subr.mxu0 0.0
    %1583 = vmatpush1.xpose.msra.mxu0 0.0
    %1584 = vmatprep.subr.mxu0 0.0
    %1585 = vmatpush1.xpose.msra.mxu0 0.0
    %1586 = vmatprep.subr.mxu0 0.0
    %1587 = vmatpush1.xpose.msra.mxu0 0.0
    %1588 = vmatprep.subr.mxu0 0.0
    %1589 = vmatpush1.xpose.msra.mxu0 0.0
    %1590 = vmatprep.subr.mxu0 0.0
    %1591 = vmatpush1.xpose.msra.mxu0 0.0
    %1592 = vmatprep.mubr.f32.mxu0 0.0
    %1593 = vmatmul.mubr.f32.gmra.mrb[0].mxu0 %v1515
    %v1594 = vpop.f32.mrb[0].mxu0
    %v1595 = vadd.f32 %v1500, %v1594
    %v1596 = vpop.f32.mrb[0].mxu0
    %1597 = vmatprep.mubr.f32.mxu0 0.0
    %1598 = vmatmul.mubr.f32.gmra.mrb[0].mxu0 %v1518
    %v1599 = vpop.f32.mrb[0].mxu0
    %v1600 = vadd.f32 %v1500, %v1599
    %v1601 = vpop.f32.mrb[0].mxu0
    %1602 = vdwg.mxu0
    %v1603 = vadd.f32 %v1388, %v1595
    %v1604 = vadd.f32 %v1389, %v1600
    %v1605 = vsel %vm217, %v1603, 0.0
    %1606 = vadd.xlane.f32.xlu0 %v1605
    %v1607 = vpop.xlane.xlu0 %1606
    %v1608 = vsel %vm217, %v1604, 0.0
    %1609 = vadd.xlane.f32.xlu0 %v1608
    %v1610 = vpop.xlane.xlu0 %1609
    %v1611 = vmul.f32 %v1607, %v224
    %v1612 = vmul.f32 %v1610, %v224
    %v1613 = vsub.f32 %v1603, %v1611
    %v1614 = vsub.f32 %v1604, %v1612
    %v1615 = vmul.f32 %v1613, %v1613
    %v1616 = vmul.f32 %v1614, %v1614
    %v1617 = vsel %vm217, %v1615, 0.0
    %1618 = vadd.xlane.f32.xlu0 %v1617
    %v1619 = vpop.xlane.xlu0 %1618
    %v1620 = vsel %vm217, %v1616, 0.0
    %1621 = vadd.xlane.f32.xlu0 %v1620
    %v1622 = vpop.xlane.xlu0 %1621
    %v1623 = vmul.f32 %v1619, %v224
    %v1624 = vmul.f32 %v1622, %v224
    %v1625 = vadd.f32 %v1623, 1e-12
    %v1626 = vadd.f32 %v1624, 1e-12
    %v1627 = vrsqrt.pop %v1625
    %v1628 = vrsqrt.pop %v1626
    %v1629 = vmul.f32 %v1613, %v1627
    %v1630 = vmul.f32 %v1614, %v1628
    %v1631 = vlaneseq
    %v1632 = vshrl.u32 %v1631, 7
    %v1633 = vsub.s32 0, %v1632
    %v1634 = vrot.slane %v267, %v1633
    %v1635 = vmul.f32 %v1629, %v1634
    %v1636 = vmul.f32 %v1630, %v1634
    %v1637 = vlaneseq
    %v1638 = vshrl.u32 %v1637, 7
    %v1639 = vsub.s32 0, %v1638
    %v1640 = vrot.slane %v268, %v1639
    %v1641 = vadd.f32 %v1635, %v1640
    %v1642 = vadd.f32 %v1636, %v1640
    %s1643 = scalar_lea.vmem %s6, 8
    %v1644 = vld [vmem:[%s1643] sm:$0x1]
    %v1645 = vld [vmem:[%s1643 + $0x1] sm:$0x1]
    %v1646 = vld [vmem:[%s1643 + $0x2] sm:$0x1]
    %v1647 = vld [vmem:[%s1643 + $0x3] sm:$0x1]
    %v1648 = vld [vmem:[%s1643 + $0x4] sm:$0x1]
    %v1649 = vld [vmem:[%s1643 + $0x5] sm:$0x1]
    %v1650 = vld [vmem:[%s1643 + $0x6] sm:$0x1]
    %v1651 = vld [vmem:[%s1643 + $0x7] sm:$0x1]
    %s1652 = scalar_lea.vmem %s5, 64
    %v1653 = vld [vmem:[%s1652] sm:$0xff]
    %v1654 = vld [vmem:[%s1652 + $0x10] sm:$0xff]
    %v1655 = vld [vmem:[%s1652 + $0x20] sm:$0xff]
    %v1656 = vld [vmem:[%s1652 + $0x30] sm:$0xff]
    %v1657 = vlaneseq
    %v1658 = vshrl.u32 %v1657, 7
    %v1659 = vsub.s32 0, %v1658
    %v1660 = vrot.slane %v1644, %v1659
    %v1662 = vsel %vm217, %v1641, 0
    %v1665 = vsel %vm217, %v1642, 0
    %1667 = vmatprep.subr.mxu0 0.0
    %1668 = vmatpush1.msra.mxu0 %v1653
    %1669 = vmatprep.subr.mxu0 0.0
    %1670 = vmatpush1.msra.mxu0 %v1654
    %1671 = vmatprep.subr.mxu0 0.0
    %1672 = vmatpush1.msra.mxu0 %v1655
    %1673 = vmatprep.subr.mxu0 0.0
    %1674 = vmatpush1.msra.mxu0 %v1656
    %1675 = vmatprep.subr.mxu0 0.0
    %1676 = vmatpush1.msra.mxu0 0.0
    %1677 = vmatprep.subr.mxu0 0.0
    %1678 = vmatpush1.msra.mxu0 0.0
    %1679 = vmatprep.subr.mxu0 0.0
    %1680 = vmatpush1.msra.mxu0 0.0
    %1681 = vmatprep.subr.mxu0 0.0
    %1682 = vmatpush1.msra.mxu0 0.0
    %1683 = vmatprep.subr.mxu0 0.0
    %1684 = vmatpush1.msra.mxu0 0.0
    %1685 = vmatprep.subr.mxu0 0.0
    %1686 = vmatpush1.msra.mxu0 0.0
    %1687 = vmatprep.subr.mxu0 0.0
    %1688 = vmatpush1.msra.mxu0 0.0
    %1689 = vmatprep.subr.mxu0 0.0
    %1690 = vmatpush1.msra.mxu0 0.0
    %1691 = vmatprep.subr.mxu0 0.0
    %1692 = vmatpush1.msra.mxu0 0.0
    %1693 = vmatprep.subr.mxu0 0.0
    %1694 = vmatpush1.msra.mxu0 0.0
    %1695 = vmatprep.subr.mxu0 0.0
    %1696 = vmatpush1.msra.mxu0 0.0
    %1697 = vmatprep.subr.mxu0 0.0
    %1698 = vmatpush1.msra.mxu0 0.0
    %1699 = vmatprep.subr.mxu0 0.0
    %1700 = vmatpush1.msra.mxu0 0.0
    %1701 = vmatprep.subr.mxu0 0.0
    %1702 = vmatpush1.msra.mxu0 0.0
    %1703 = vmatprep.subr.mxu0 0.0
    %1704 = vmatpush1.msra.mxu0 0.0
    %1705 = vmatprep.subr.mxu0 0.0
    %1706 = vmatpush1.msra.mxu0 0.0
    %1707 = vmatprep.subr.mxu0 0.0
    %1708 = vmatpush1.msra.mxu0 0.0
    %1709 = vmatprep.subr.mxu0 0.0
    %1710 = vmatpush1.msra.mxu0 0.0
    %1711 = vmatprep.subr.mxu0 0.0
    %1712 = vmatpush1.msra.mxu0 0.0
    %1713 = vmatprep.subr.mxu0 0.0
    %1714 = vmatpush1.msra.mxu0 0.0
    %1715 = vmatprep.subr.mxu0 0.0
    %1716 = vmatpush1.msra.mxu0 0.0
    %1717 = vmatprep.subr.mxu0 0.0
    %1718 = vmatpush1.msra.mxu0 0.0
    %1719 = vmatprep.subr.mxu0 0.0
    %1720 = vmatpush1.msra.mxu0 0.0
    %1721 = vmatprep.subr.mxu0 0.0
    %1722 = vmatpush1.msra.mxu0 0.0
    %1723 = vmatprep.subr.mxu0 0.0
    %1724 = vmatpush1.msra.mxu0 0.0
    %1725 = vmatprep.subr.mxu0 0.0
    %1726 = vmatpush1.msra.mxu0 0.0
    %1727 = vmatprep.subr.mxu0 0.0
    %1728 = vmatpush1.msra.mxu0 0.0
    %1729 = vmatprep.subr.mxu0 0.0
    %1730 = vmatpush1.msra.mxu0 0.0
    %1731 = vmatprep.mubr.f32.mxu0 0.0
    %1732 = vmatmul.mubr.f32.gmra.mrb[0].mxu0 %v1662
    %v1733 = vpop.f32.mrb[0].mxu0
    %v1734 = vadd.f32 %v1660, %v1733
    %v1735 = vpop.f32.mrb[0].mxu0
    %1736 = vmatprep.mubr.f32.mxu0 0.0
    %1737 = vmatmul.mubr.f32.gmra.mrb[0].mxu0 %v1665
    %v1738 = vpop.f32.mrb[0].mxu0
    %v1739 = vadd.f32 %v1660, %v1738
    %v1740 = vpop.f32.mrb[0].mxu0
    %1741 = vdwg.mxu0
    %1743 = vrot.lane.b32.xlu0 %v1734, 112
    %v1744 = vpop.permute.xlu0 %1743
    %v1745 = vsel %vm361, %v1734, 0
    %v1747 = vsel %vm361, %v1744, 0
    %1749 = vmatprep.subr.mxu0 0.0
    %1750 = vmatpush1.xpose.msra.mxu0 %v1747
    %1751 = vmatprep.subr.mxu0 0.0
    %1752 = vmatpush1.xpose.msra.mxu0 0.0
    %1753 = vmatprep.subr.mxu0 0.0
    %1754 = vmatpush1.xpose.msra.mxu0 0.0
    %1755 = vmatprep.subr.mxu0 0.0
    %1756 = vmatpush1.xpose.msra.mxu0 0.0
    %1757 = vmatprep.subr.mxu0 0.0
    %1758 = vmatpush1.xpose.msra.mxu0 0.0
    %1759 = vmatprep.subr.mxu0 0.0
    %1760 = vmatpush1.xpose.msra.mxu0 0.0
    %1761 = vmatprep.subr.mxu0 0.0
    %1762 = vmatpush1.xpose.msra.mxu0 0.0
    %1763 = vmatprep.subr.mxu0 0.0
    %1764 = vmatpush1.xpose.msra.mxu0 0.0
    %1765 = vmatprep.subr.mxu0 0.0
    %1766 = vmatpush1.xpose.msra.mxu0 0.0
    %1767 = vmatprep.subr.mxu0 0.0
    %1768 = vmatpush1.xpose.msra.mxu0 0.0
    %1769 = vmatprep.subr.mxu0 0.0
    %1770 = vmatpush1.xpose.msra.mxu0 0.0
    %1771 = vmatprep.subr.mxu0 0.0
    %1772 = vmatpush1.xpose.msra.mxu0 0.0
    %1773 = vmatprep.subr.mxu0 0.0
    %1774 = vmatpush1.xpose.msra.mxu0 0.0
    %1775 = vmatprep.subr.mxu0 0.0
    %1776 = vmatpush1.xpose.msra.mxu0 0.0
    %1777 = vmatprep.subr.mxu0 0.0
    %1778 = vmatpush1.xpose.msra.mxu0 0.0
    %1779 = vmatprep.subr.mxu0 0.0
    %1780 = vmatpush1.xpose.msra.mxu0 0.0
    %1781 = vmatprep.subr.mxu0 0.0
    %1782 = vmatpush1.xpose.msra.mxu0 0.0
    %1783 = vmatprep.subr.mxu0 0.0
    %1784 = vmatpush1.xpose.msra.mxu0 0.0
    %1785 = vmatprep.subr.mxu0 0.0
    %1786 = vmatpush1.xpose.msra.mxu0 0.0
    %1787 = vmatprep.subr.mxu0 0.0
    %1788 = vmatpush1.xpose.msra.mxu0 0.0
    %1789 = vmatprep.subr.mxu0 0.0
    %1790 = vmatpush1.xpose.msra.mxu0 0.0
    %1791 = vmatprep.subr.mxu0 0.0
    %1792 = vmatpush1.xpose.msra.mxu0 0.0
    %1793 = vmatprep.subr.mxu0 0.0
    %1794 = vmatpush1.xpose.msra.mxu0 0.0
    %1795 = vmatprep.subr.mxu0 0.0
    %1796 = vmatpush1.xpose.msra.mxu0 0.0
    %1797 = vmatprep.subr.mxu0 0.0
    %1798 = vmatpush1.xpose.msra.mxu0 0.0
    %1799 = vmatprep.subr.mxu0 0.0
    %1800 = vmatpush1.xpose.msra.mxu0 0.0
    %1801 = vmatprep.subr.mxu0 0.0
    %1802 = vmatpush1.xpose.msra.mxu0 0.0
    %1803 = vmatprep.subr.mxu0 0.0
    %1804 = vmatpush1.xpose.msra.mxu0 0.0
    %1805 = vmatprep.subr.mxu0 0.0
    %1806 = vmatpush1.xpose.msra.mxu0 0.0
    %1807 = vmatprep.subr.mxu0 0.0
    %1808 = vmatpush1.xpose.msra.mxu0 0.0
    %1809 = vmatprep.subr.mxu0 0.0
    %1810 = vmatpush1.xpose.msra.mxu0 0.0
    %1811 = vmatprep.subr.mxu0 0.0
    %1812 = vmatpush1.xpose.msra.mxu0 0.0
    %1813 = vmatprep.mubr.f32.mxu0 0.0
    %1814 = vmatmul.mubr.f32.gmra.mrb[0].mxu0 %v1745
    %v1815 = vpop.f32.mrb[0].mxu0
    %v1816 = vadd.f32 0.0, %v1815
    %v1817 = vpop.f32.mrb[0].mxu0
    %1818 = vdwg.mxu0
    %v1819 = vmul.f32 %v1816, 0.25
    %v1820 = vadd.f32 %v1819, %v440
    %v1821 = vsel %vm442, %v1820, -inf
    %1822 = vmax.xlane.f32.xlu0 %v1821
    %v1823 = vpop.xlane.xlu0 %1822
    %v1824 = vsub.f32 %v1820, %v1823
    %v1825 = vmul.f32 %v1824, 1.442695
    %v1826 = vpow.pop %v1825
    %v1827 = vsel %vm442, %v1826, 0.0
    %1828 = vadd.xlane.f32.xlu0 %v1827
    %v1829 = vpop.xlane.xlu0 %1828
    %v1830 = vrcp.pop %v1829
    %v1831 = vmul.f32 %v1826, %v1830
    %1832 = vrot.lane.b32.xlu0 %v1734, 96
    %v1833 = vpop.permute.xlu0 %1832
    %v1836 = vsel %vm442, %v1831, 0
    %1838 = vmatprep.subr.mxu0 0.0
    %1839 = vmatpush1.msra.mxu0 %v1833
    %1840 = vmatprep.subr.mxu0 0.0
    %1841 = vmatpush1.msra.mxu0 0.0
    %1842 = vmatprep.subr.mxu0 0.0
    %1843 = vmatpush1.msra.mxu0 0.0
    %1844 = vmatprep.subr.mxu0 0.0
    %1845 = vmatpush1.msra.mxu0 0.0
    %1846 = vmatprep.subr.mxu0 0.0
    %1847 = vmatpush1.msra.mxu0 0.0
    %1848 = vmatprep.subr.mxu0 0.0
    %1849 = vmatpush1.msra.mxu0 0.0
    %1850 = vmatprep.subr.mxu0 0.0
    %1851 = vmatpush1.msra.mxu0 0.0
    %1852 = vmatprep.subr.mxu0 0.0
    %1853 = vmatpush1.msra.mxu0 0.0
    %1854 = vmatprep.subr.mxu0 0.0
    %1855 = vmatpush1.msra.mxu0 0.0
    %1856 = vmatprep.subr.mxu0 0.0
    %1857 = vmatpush1.msra.mxu0 0.0
    %1858 = vmatprep.subr.mxu0 0.0
    %1859 = vmatpush1.msra.mxu0 0.0
    %1860 = vmatprep.subr.mxu0 0.0
    %1861 = vmatpush1.msra.mxu0 0.0
    %1862 = vmatprep.subr.mxu0 0.0
    %1863 = vmatpush1.msra.mxu0 0.0
    %1864 = vmatprep.subr.mxu0 0.0
    %1865 = vmatpush1.msra.mxu0 0.0
    %1866 = vmatprep.subr.mxu0 0.0
    %1867 = vmatpush1.msra.mxu0 0.0
    %1868 = vmatprep.subr.mxu0 0.0
    %1869 = vmatpush1.msra.mxu0 0.0
    %1870 = vmatprep.subr.mxu0 0.0
    %1871 = vmatpush1.msra.mxu0 0.0
    %1872 = vmatprep.subr.mxu0 0.0
    %1873 = vmatpush1.msra.mxu0 0.0
    %1874 = vmatprep.subr.mxu0 0.0
    %1875 = vmatpush1.msra.mxu0 0.0
    %1876 = vmatprep.subr.mxu0 0.0
    %1877 = vmatpush1.msra.mxu0 0.0
    %1878 = vmatprep.subr.mxu0 0.0
    %1879 = vmatpush1.msra.mxu0 0.0
    %1880 = vmatprep.subr.mxu0 0.0
    %1881 = vmatpush1.msra.mxu0 0.0
    %1882 = vmatprep.subr.mxu0 0.0
    %1883 = vmatpush1.msra.mxu0 0.0
    %1884 = vmatprep.subr.mxu0 0.0
    %1885 = vmatpush1.msra.mxu0 0.0
    %1886 = vmatprep.subr.mxu0 0.0
    %1887 = vmatpush1.msra.mxu0 0.0
    %1888 = vmatprep.subr.mxu0 0.0
    %1889 = vmatpush1.msra.mxu0 0.0
    %1890 = vmatprep.subr.mxu0 0.0
    %1891 = vmatpush1.msra.mxu0 0.0
    %1892 = vmatprep.subr.mxu0 0.0
    %1893 = vmatpush1.msra.mxu0 0.0
    %1894 = vmatprep.subr.mxu0 0.0
    %1895 = vmatpush1.msra.mxu0 0.0
    %1896 = vmatprep.subr.mxu0 0.0
    %1897 = vmatpush1.msra.mxu0 0.0
    %1898 = vmatprep.subr.mxu0 0.0
    %1899 = vmatpush1.msra.mxu0 0.0
    %1900 = vmatprep.subr.mxu0 0.0
    %1901 = vmatpush1.msra.mxu0 0.0
    %1902 = vmatprep.mubr.f32.mxu0 0.0
    %1903 = vmatmul.mubr.f32.gmra.mrb[0].mxu0 %v1836
    %v1904 = vpop.f32.mrb[0].mxu0
    %v1905 = vadd.f32 0.0, %v1904
    %v1906 = vpop.f32.mrb[0].mxu0
    %1907 = vdwg.mxu0
    %v1908 = vld [vmem:[%s1652] sm:$0xff]
    %v1909 = vld [vmem:[%s1652 + $0x10] sm:$0xff]
    %1910 = vrot.lane.b32.xlu0 %v1734, 80
    %v1911 = vpop.permute.xlu0 %1910
    %1912 = vrot.lane.b32.xlu0 %v1734, 64
    %v1913 = vpop.permute.xlu0 %1912
    %v1914 = vsel %vm361, %v1911, 0
    %v1916 = vsel %vm361, %v1913, 0
    %1918 = vmatprep.subr.mxu0 0.0
    %1919 = vmatpush1.xpose.msra.mxu0 %v1916
    %1920 = vmatprep.subr.mxu0 0.0
    %1921 = vmatpush1.xpose.msra.mxu0 0.0
    %1922 = vmatprep.subr.mxu0 0.0
    %1923 = vmatpush1.xpose.msra.mxu0 0.0
    %1924 = vmatprep.subr.mxu0 0.0
    %1925 = vmatpush1.xpose.msra.mxu0 0.0
    %1926 = vmatprep.subr.mxu0 0.0
    %1927 = vmatpush1.xpose.msra.mxu0 0.0
    %1928 = vmatprep.subr.mxu0 0.0
    %1929 = vmatpush1.xpose.msra.mxu0 0.0
    %1930 = vmatprep.subr.mxu0 0.0
    %1931 = vmatpush1.xpose.msra.mxu0 0.0
    %1932 = vmatprep.subr.mxu0 0.0
    %1933 = vmatpush1.xpose.msra.mxu0 0.0
    %1934 = vmatprep.subr.mxu0 0.0
    %1935 = vmatpush1.xpose.msra.mxu0 0.0
    %1936 = vmatprep.subr.mxu0 0.0
    %1937 = vmatpush1.xpose.msra.mxu0 0.0
    %1938 = vmatprep.subr.mxu0 0.0
    %1939 = vmatpush1.xpose.msra.mxu0 0.0
    %1940 = vmatprep.subr.mxu0 0.0
    %1941 = vmatpush1.xpose.msra.mxu0 0.0
    %1942 = vmatprep.subr.mxu0 0.0
    %1943 = vmatpush1.xpose.msra.mxu0 0.0
    %1944 = vmatprep.subr.mxu0 0.0
    %1945 = vmatpush1.xpose.msra.mxu0 0.0
    %1946 = vmatprep.subr.mxu0 0.0
    %1947 = vmatpush1.xpose.msra.mxu0 0.0
    %1948 = vmatprep.subr.mxu0 0.0
    %1949 = vmatpush1.xpose.msra.mxu0 0.0
    %1950 = vmatprep.subr.mxu0 0.0
    %1951 = vmatpush1.xpose.msra.mxu0 0.0
    %1952 = vmatprep.subr.mxu0 0.0
    %1953 = vmatpush1.xpose.msra.mxu0 0.0
    %1954 = vmatprep.subr.mxu0 0.0
    %1955 = vmatpush1.xpose.msra.mxu0 0.0
    %1956 = vmatprep.subr.mxu0 0.0
    %1957 = vmatpush1.xpose.msra.mxu0 0.0
    %1958 = vmatprep.subr.mxu0 0.0
    %1959 = vmatpush1.xpose.msra.mxu0 0.0
    %1960 = vmatprep.subr.mxu0 0.0
    %1961 = vmatpush1.xpose.msra.mxu0 0.0
    %1962 = vmatprep.subr.mxu0 0.0
    %1963 = vmatpush1.xpose.msra.mxu0 0.0
    %1964 = vmatprep.subr.mxu0 0.0
    %1965 = vmatpush1.xpose.msra.mxu0 0.0
    %1966 = vmatprep.subr.mxu0 0.0
    %1967 = vmatpush1.xpose.msra.mxu0 0.0
    %1968 = vmatprep.subr.mxu0 0.0
    %1969 = vmatpush1.xpose.msra.mxu0 0.0
    %1970 = vmatprep.subr.mxu0 0.0
    %1971 = vmatpush1.xpose.msra.mxu0 0.0
    %1972 = vmatprep.subr.mxu0 0.0
    %1973 = vmatpush1.xpose.msra.mxu0 0.0
    %1974 = vmatprep.subr.mxu0 0.0
    %1975 = vmatpush1.xpose.msra.mxu0 0.0
    %1976 = vmatprep.subr.mxu0 0.0
    %1977 = vmatpush1.xpose.msra.mxu0 0.0
    %1978 = vmatprep.subr.mxu0 0.0
    %1979 = vmatpush1.xpose.msra.mxu0 0.0
    %1980 = vmatprep.subr.mxu0 0.0
    %1981 = vmatpush1.xpose.msra.mxu0 0.0
    %1982 = vmatprep.mubr.f32.mxu0 0.0
    %1983 = vmatmul.mubr.f32.gmra.mrb[0].mxu0 %v1914
    %v1984 = vpop.f32.mrb[0].mxu0
    %v1985 = vadd.f32 0.0, %v1984
    %v1986 = vpop.f32.mrb[0].mxu0
    %1987 = vdwg.mxu0
    %v1988 = vmul.f32 %v1985, 0.25
    %v1989 = vadd.f32 %v1988, %v440
    %v1990 = vsel %vm442, %v1989, -inf
    %1991 = vmax.xlane.f32.xlu0 %v1990
    %v1992 = vpop.xlane.xlu0 %1991
    %v1993 = vsub.f32 %v1989, %v1992
    %v1994 = vmul.f32 %v1993, 1.442695
    %v1995 = vpow.pop %v1994
    %v1996 = vsel %vm442, %v1995, 0.0
    %1997 = vadd.xlane.f32.xlu0 %v1996
    %v1998 = vpop.xlane.xlu0 %1997
    %v1999 = vrcp.pop %v1998
    %v2000 = vmul.f32 %v1995, %v1999
    %2001 = vrot.lane.b32.xlu0 %v1734, 48
    %v2002 = vpop.permute.xlu0 %2001
    %v2005 = vsel %vm442, %v2000, 0
    %2007 = vmatprep.subr.mxu0 0.0
    %2008 = vmatpush1.msra.mxu0 %v2002
    %2009 = vmatprep.subr.mxu0 0.0
    %2010 = vmatpush1.msra.mxu0 0.0
    %2011 = vmatprep.subr.mxu0 0.0
    %2012 = vmatpush1.msra.mxu0 0.0
    %2013 = vmatprep.subr.mxu0 0.0
    %2014 = vmatpush1.msra.mxu0 0.0
    %2015 = vmatprep.subr.mxu0 0.0
    %2016 = vmatpush1.msra.mxu0 0.0
    %2017 = vmatprep.subr.mxu0 0.0
    %2018 = vmatpush1.msra.mxu0 0.0
    %2019 = vmatprep.subr.mxu0 0.0
    %2020 = vmatpush1.msra.mxu0 0.0
    %2021 = vmatprep.subr.mxu0 0.0
    %2022 = vmatpush1.msra.mxu0 0.0
    %2023 = vmatprep.subr.mxu0 0.0
    %2024 = vmatpush1.msra.mxu0 0.0
    %2025 = vmatprep.subr.mxu0 0.0
    %2026 = vmatpush1.msra.mxu0 0.0
    %2027 = vmatprep.subr.mxu0 0.0
    %2028 = vmatpush1.msra.mxu0 0.0
    %2029 = vmatprep.subr.mxu0 0.0
    %2030 = vmatpush1.msra.mxu0 0.0
    %2031 = vmatprep.subr.mxu0 0.0
    %2032 = vmatpush1.msra.mxu0 0.0
    %2033 = vmatprep.subr.mxu0 0.0
    %2034 = vmatpush1.msra.mxu0 0.0
    %2035 = vmatprep.subr.mxu0 0.0
    %2036 = vmatpush1.msra.mxu0 0.0
    %2037 = vmatprep.subr.mxu0 0.0
    %2038 = vmatpush1.msra.mxu0 0.0
    %2039 = vmatprep.subr.mxu0 0.0
    %2040 = vmatpush1.msra.mxu0 0.0
    %2041 = vmatprep.subr.mxu0 0.0
    %2042 = vmatpush1.msra.mxu0 0.0
    %2043 = vmatprep.subr.mxu0 0.0
    %2044 = vmatpush1.msra.mxu0 0.0
    %2045 = vmatprep.subr.mxu0 0.0
    %2046 = vmatpush1.msra.mxu0 0.0
    %2047 = vmatprep.subr.mxu0 0.0
    %2048 = vmatpush1.msra.mxu0 0.0
    %2049 = vmatprep.subr.mxu0 0.0
    %2050 = vmatpush1.msra.mxu0 0.0
    %2051 = vmatprep.subr.mxu0 0.0
    %2052 = vmatpush1.msra.mxu0 0.0
    %2053 = vmatprep.subr.mxu0 0.0
    %2054 = vmatpush1.msra.mxu0 0.0
    %2055 = vmatprep.subr.mxu0 0.0
    %2056 = vmatpush1.msra.mxu0 0.0
    %2057 = vmatprep.subr.mxu0 0.0
    %2058 = vmatpush1.msra.mxu0 0.0
    %2059 = vmatprep.subr.mxu0 0.0
    %2060 = vmatpush1.msra.mxu0 0.0
    %2061 = vmatprep.subr.mxu0 0.0
    %2062 = vmatpush1.msra.mxu0 0.0
    %2063 = vmatprep.subr.mxu0 0.0
    %2064 = vmatpush1.msra.mxu0 0.0
    %2065 = vmatprep.subr.mxu0 0.0
    %2066 = vmatpush1.msra.mxu0 0.0
    %2067 = vmatprep.subr.mxu0 0.0
    %2068 = vmatpush1.msra.mxu0 0.0
    %2069 = vmatprep.subr.mxu0 0.0
    %2070 = vmatpush1.msra.mxu0 0.0
    %2071 = vmatprep.mubr.f32.mxu0 0.0
    %2072 = vmatmul.mubr.f32.gmra.mrb[0].mxu0 %v2005
    %v2073 = vpop.f32.mrb[0].mxu0
    %v2074 = vadd.f32 0.0, %v2073
    %v2075 = vpop.f32.mrb[0].mxu0
    %2076 = vdwg.mxu0
    %2079 = vrot.lane.b32.xlu0 %v1655, 32
    %v2080 = vpop.permute.xlu0 %2079
    %2081 = vrot.lane.b32.xlu0 %v1656, 32
    %v2082 = vpop.permute.xlu0 %2081
    %v2086 = vsel %vm361, %v2074, 0
    %2088 = vmatprep.subr.mxu0 0.0
    %2089 = vmatpush1.msra.mxu0 %v2080
    %2090 = vmatprep.subr.mxu0 0.0
    %2091 = vmatpush1.msra.mxu0 %v2082
    %2092 = vmatprep.subr.mxu0 0.0
    %2093 = vmatpush1.msra.mxu0 0.0
    %2094 = vmatprep.subr.mxu0 0.0
    %2095 = vmatpush1.msra.mxu0 0.0
    %2096 = vmatprep.subr.mxu0 0.0
    %2097 = vmatpush1.msra.mxu0 0.0
    %2098 = vmatprep.subr.mxu0 0.0
    %2099 = vmatpush1.msra.mxu0 0.0
    %2100 = vmatprep.subr.mxu0 0.0
    %2101 = vmatpush1.msra.mxu0 0.0
    %2102 = vmatprep.subr.mxu0 0.0
    %2103 = vmatpush1.msra.mxu0 0.0
    %2104 = vmatprep.subr.mxu0 0.0
    %2105 = vmatpush1.msra.mxu0 0.0
    %2106 = vmatprep.subr.mxu0 0.0
    %2107 = vmatpush1.msra.mxu0 0.0
    %2108 = vmatprep.subr.mxu0 0.0
    %2109 = vmatpush1.msra.mxu0 0.0
    %2110 = vmatprep.subr.mxu0 0.0
    %2111 = vmatpush1.msra.mxu0 0.0
    %2112 = vmatprep.subr.mxu0 0.0
    %2113 = vmatpush1.msra.mxu0 0.0
    %2114 = vmatprep.subr.mxu0 0.0
    %2115 = vmatpush1.msra.mxu0 0.0
    %2116 = vmatprep.subr.mxu0 0.0
    %2117 = vmatpush1.msra.mxu0 0.0
    %2118 = vmatprep.subr.mxu0 0.0
    %2119 = vmatpush1.msra.mxu0 0.0
    %2120 = vmatprep.subr.mxu0 0.0
    %2121 = vmatpush1.msra.mxu0 0.0
    %2122 = vmatprep.subr.mxu0 0.0
    %2123 = vmatpush1.msra.mxu0 0.0
    %2124 = vmatprep.subr.mxu0 0.0
    %2125 = vmatpush1.msra.mxu0 0.0
    %2126 = vmatprep.subr.mxu0 0.0
    %2127 = vmatpush1.msra.mxu0 0.0
    %2128 = vmatprep.subr.mxu0 0.0
    %2129 = vmatpush1.msra.mxu0 0.0
    %2130 = vmatprep.subr.mxu0 0.0
    %2131 = vmatpush1.msra.mxu0 0.0
    %2132 = vmatprep.subr.mxu0 0.0
    %2133 = vmatpush1.msra.mxu0 0.0
    %2134 = vmatprep.subr.mxu0 0.0
    %2135 = vmatpush1.msra.mxu0 0.0
    %2136 = vmatprep.subr.mxu0 0.0
    %2137 = vmatpush1.msra.mxu0 0.0
    %2138 = vmatprep.subr.mxu0 0.0
    %2139 = vmatpush1.msra.mxu0 0.0
    %2140 = vmatprep.subr.mxu0 0.0
    %2141 = vmatpush1.msra.mxu0 0.0
    %2142 = vmatprep.subr.mxu0 0.0
    %2143 = vmatpush1.msra.mxu0 0.0
    %2144 = vmatprep.subr.mxu0 0.0
    %2145 = vmatpush1.msra.mxu0 0.0
    %2146 = vmatprep.subr.mxu0 0.0
    %2147 = vmatpush1.msra.mxu0 0.0
    %2148 = vmatprep.subr.mxu0 0.0
    %2149 = vmatpush1.msra.mxu0 0.0
    %2150 = vmatprep.subr.mxu0 0.0
    %2151 = vmatpush1.msra.mxu0 0.0
    %2152 = vmatprep.mubr.f32.mxu0 0.0
    %2153 = vmatmul.mubr.f32.gmra.mrb[0].mxu0 %v2086
    %v2154 = vpop.f32.mrb[0].mxu0
    %v2155 = vadd.f32 0.0, %v2154
    %v2156 = vpop.f32.mrb[0].mxu0
    %2157 = vdwg.mxu0
    %2160 = vrot.lane.b32.xlu0 %v1908, 32
    %v2161 = vpop.permute.xlu0 %2160
    %2162 = vrot.lane.b32.xlu0 %v1909, 32
    %v2163 = vpop.permute.xlu0 %2162
    %v2167 = vsel %vm361, %v1905, 0
    %2169 = vmatprep.subr.mxu0 0.0
    %2170 = vmatpush1.msra.mxu0 %v2161
    %2171 = vmatprep.subr.mxu0 0.0
    %2172 = vmatpush1.msra.mxu0 %v2163
    %2173 = vmatprep.subr.mxu0 0.0
    %2174 = vmatpush1.msra.mxu0 0.0
    %2175 = vmatprep.subr.mxu0 0.0
    %2176 = vmatpush1.msra.mxu0 0.0
    %2177 = vmatprep.subr.mxu0 0.0
    %2178 = vmatpush1.msra.mxu0 0.0
    %2179 = vmatprep.subr.mxu0 0.0
    %2180 = vmatpush1.msra.mxu0 0.0
    %2181 = vmatprep.subr.mxu0 0.0
    %2182 = vmatpush1.msra.mxu0 0.0
    %2183 = vmatprep.subr.mxu0 0.0
    %2184 = vmatpush1.msra.mxu0 0.0
    %2185 = vmatprep.subr.mxu0 0.0
    %2186 = vmatpush1.msra.mxu0 0.0
    %2187 = vmatprep.subr.mxu0 0.0
    %2188 = vmatpush1.msra.mxu0 0.0
    %2189 = vmatprep.subr.mxu0 0.0
    %2190 = vmatpush1.msra.mxu0 0.0
    %2191 = vmatprep.subr.mxu0 0.0
    %2192 = vmatpush1.msra.mxu0 0.0
    %2193 = vmatprep.subr.mxu0 0.0
    %2194 = vmatpush1.msra.mxu0 0.0
    %2195 = vmatprep.subr.mxu0 0.0
    %2196 = vmatpush1.msra.mxu0 0.0
    %2197 = vmatprep.subr.mxu0 0.0
    %2198 = vmatpush1.msra.mxu0 0.0
    %2199 = vmatprep.subr.mxu0 0.0
    %2200 = vmatpush1.msra.mxu0 0.0
    %2201 = vmatprep.subr.mxu0 0.0
    %2202 = vmatpush1.msra.mxu0 0.0
    %2203 = vmatprep.subr.mxu0 0.0
    %2204 = vmatpush1.msra.mxu0 0.0
    %2205 = vmatprep.subr.mxu0 0.0
    %2206 = vmatpush1.msra.mxu0 0.0
    %2207 = vmatprep.subr.mxu0 0.0
    %2208 = vmatpush1.msra.mxu0 0.0
    %2209 = vmatprep.subr.mxu0 0.0
    %2210 = vmatpush1.msra.mxu0 0.0
    %2211 = vmatprep.subr.mxu0 0.0
    %2212 = vmatpush1.msra.mxu0 0.0
    %2213 = vmatprep.subr.mxu0 0.0
    %2214 = vmatpush1.msra.mxu0 0.0
    %2215 = vmatprep.subr.mxu0 0.0
    %2216 = vmatpush1.msra.mxu0 0.0
    %2217 = vmatprep.subr.mxu0 0.0
    %2218 = vmatpush1.msra.mxu0 0.0
    %2219 = vmatprep.subr.mxu0 0.0
    %2220 = vmatpush1.msra.mxu0 0.0
    %2221 = vmatprep.subr.mxu0 0.0
    %2222 = vmatpush1.msra.mxu0 0.0
    %2223 = vmatprep.subr.mxu0 0.0
    %2224 = vmatpush1.msra.mxu0 0.0
    %2225 = vmatprep.subr.mxu0 0.0
    %2226 = vmatpush1.msra.mxu0 0.0
    %2227 = vmatprep.subr.mxu0 0.0
    %2228 = vmatpush1.msra.mxu0 0.0
    %2229 = vmatprep.subr.mxu0 0.0
    %2230 = vmatpush1.msra.mxu0 0.0
    %2231 = vmatprep.subr.mxu0 0.0
    %2232 = vmatpush1.msra.mxu0 0.0
    %2233 = vmatprep.mubr.f32.mxu0 0.0
    %2234 = vmatmul.mubr.f32.gmra.mrb[0].mxu0 %v2167
    %v2235 = vpop.f32.mrb[0].mxu0
    %v2236 = vadd.f32 %v2155, %v2235
    %v2237 = vpop.f32.mrb[0].mxu0
    %2238 = vdwg.mxu0
    %2240 = vrot.lane.b32.xlu0 %v1739, 112
    %v2241 = vpop.permute.xlu0 %2240
    %v2242 = vsel %vm361, %v1739, 0
    %v2244 = vsel %vm361, %v2241, 0
    %2246 = vmatprep.subr.mxu0 0.0
    %2247 = vmatpush1.xpose.msra.mxu0 %v2244
    %2248 = vmatprep.subr.mxu0 0.0
    %2249 = vmatpush1.xpose.msra.mxu0 0.0
    %2250 = vmatprep.subr.mxu0 0.0
    %2251 = vmatpush1.xpose.msra.mxu0 0.0
    %2252 = vmatprep.subr.mxu0 0.0
    %2253 = vmatpush1.xpose.msra.mxu0 0.0
    %2254 = vmatprep.subr.mxu0 0.0
    %2255 = vmatpush1.xpose.msra.mxu0 0.0
    %2256 = vmatprep.subr.mxu0 0.0
    %2257 = vmatpush1.xpose.msra.mxu0 0.0
    %2258 = vmatprep.subr.mxu0 0.0
    %2259 = vmatpush1.xpose.msra.mxu0 0.0
    %2260 = vmatprep.subr.mxu0 0.0
    %2261 = vmatpush1.xpose.msra.mxu0 0.0
    %2262 = vmatprep.subr.mxu0 0.0
    %2263 = vmatpush1.xpose.msra.mxu0 0.0
    %2264 = vmatprep.subr.mxu0 0.0
    %2265 = vmatpush1.xpose.msra.mxu0 0.0
    %2266 = vmatprep.subr.mxu0 0.0
    %2267 = vmatpush1.xpose.msra.mxu0 0.0
    %2268 = vmatprep.subr.mxu0 0.0
    %2269 = vmatpush1.xpose.msra.mxu0 0.0
    %2270 = vmatprep.subr.mxu0 0.0
    %2271 = vmatpush1.xpose.msra.mxu0 0.0
    %2272 = vmatprep.subr.mxu0 0.0
    %2273 = vmatpush1.xpose.msra.mxu0 0.0
    %2274 = vmatprep.subr.mxu0 0.0
    %2275 = vmatpush1.xpose.msra.mxu0 0.0
    %2276 = vmatprep.subr.mxu0 0.0
    %2277 = vmatpush1.xpose.msra.mxu0 0.0
    %2278 = vmatprep.subr.mxu0 0.0
    %2279 = vmatpush1.xpose.msra.mxu0 0.0
    %2280 = vmatprep.subr.mxu0 0.0
    %2281 = vmatpush1.xpose.msra.mxu0 0.0
    %2282 = vmatprep.subr.mxu0 0.0
    %2283 = vmatpush1.xpose.msra.mxu0 0.0
    %2284 = vmatprep.subr.mxu0 0.0
    %2285 = vmatpush1.xpose.msra.mxu0 0.0
    %2286 = vmatprep.subr.mxu0 0.0
    %2287 = vmatpush1.xpose.msra.mxu0 0.0
    %2288 = vmatprep.subr.mxu0 0.0
    %2289 = vmatpush1.xpose.msra.mxu0 0.0
    %2290 = vmatprep.subr.mxu0 0.0
    %2291 = vmatpush1.xpose.msra.mxu0 0.0
    %2292 = vmatprep.subr.mxu0 0.0
    %2293 = vmatpush1.xpose.msra.mxu0 0.0
    %2294 = vmatprep.subr.mxu0 0.0
    %2295 = vmatpush1.xpose.msra.mxu0 0.0
    %2296 = vmatprep.subr.mxu0 0.0
    %2297 = vmatpush1.xpose.msra.mxu0 0.0
    %2298 = vmatprep.subr.mxu0 0.0
    %2299 = vmatpush1.xpose.msra.mxu0 0.0
    %2300 = vmatprep.subr.mxu0 0.0
    %2301 = vmatpush1.xpose.msra.mxu0 0.0
    %2302 = vmatprep.subr.mxu0 0.0
    %2303 = vmatpush1.xpose.msra.mxu0 0.0
    %2304 = vmatprep.subr.mxu0 0.0
    %2305 = vmatpush1.xpose.msra.mxu0 0.0
    %2306 = vmatprep.subr.mxu0 0.0
    %2307 = vmatpush1.xpose.msra.mxu0 0.0
    %2308 = vmatprep.subr.mxu0 0.0
    %2309 = vmatpush1.xpose.msra.mxu0 0.0
    %2310 = vmatprep.mubr.f32.mxu0 0.0
    %2311 = vmatmul.mubr.f32.gmra.mrb[0].mxu0 %v2242
    %v2312 = vpop.f32.mrb[0].mxu0
    %v2313 = vadd.f32 0.0, %v2312
    %v2314 = vpop.f32.mrb[0].mxu0
    %2315 = vdwg.mxu0
    %v2316 = vmul.f32 %v2313, 0.25
    %v2317 = vadd.f32 %v2316, %v942
    %v2318 = vsel %vm442, %v2317, -inf
    %2319 = vmax.xlane.f32.xlu0 %v2318
    %v2320 = vpop.xlane.xlu0 %2319
    %v2321 = vsub.f32 %v2317, %v2320
    %v2322 = vmul.f32 %v2321, 1.442695
    %v2323 = vpow.pop %v2322
    %v2324 = vsel %vm442, %v2323, 0.0
    %2325 = vadd.xlane.f32.xlu0 %v2324
    %v2326 = vpop.xlane.xlu0 %2325
    %v2327 = vrcp.pop %v2326
    %v2328 = vmul.f32 %v2323, %v2327
    %2329 = vrot.lane.b32.xlu0 %v1739, 96
    %v2330 = vpop.permute.xlu0 %2329
    %v2333 = vsel %vm442, %v2328, 0
    %2335 = vmatprep.subr.mxu0 0.0
    %2336 = vmatpush1.msra.mxu0 %v2330
    %2337 = vmatprep.subr.mxu0 0.0
    %2338 = vmatpush1.msra.mxu0 0.0
    %2339 = vmatprep.subr.mxu0 0.0
    %2340 = vmatpush1.msra.mxu0 0.0
    %2341 = vmatprep.subr.mxu0 0.0
    %2342 = vmatpush1.msra.mxu0 0.0
    %2343 = vmatprep.subr.mxu0 0.0
    %2344 = vmatpush1.msra.mxu0 0.0
    %2345 = vmatprep.subr.mxu0 0.0
    %2346 = vmatpush1.msra.mxu0 0.0
    %2347 = vmatprep.subr.mxu0 0.0
    %2348 = vmatpush1.msra.mxu0 0.0
    %2349 = vmatprep.subr.mxu0 0.0
    %2350 = vmatpush1.msra.mxu0 0.0
    %2351 = vmatprep.subr.mxu0 0.0
    %2352 = vmatpush1.msra.mxu0 0.0
    %2353 = vmatprep.subr.mxu0 0.0
    %2354 = vmatpush1.msra.mxu0 0.0
    %2355 = vmatprep.subr.mxu0 0.0
    %2356 = vmatpush1.msra.mxu0 0.0
    %2357 = vmatprep.subr.mxu0 0.0
    %2358 = vmatpush1.msra.mxu0 0.0
    %2359 = vmatprep.subr.mxu0 0.0
    %2360 = vmatpush1.msra.mxu0 0.0
    %2361 = vmatprep.subr.mxu0 0.0
    %2362 = vmatpush1.msra.mxu0 0.0
    %2363 = vmatprep.subr.mxu0 0.0
    %2364 = vmatpush1.msra.mxu0 0.0
    %2365 = vmatprep.subr.mxu0 0.0
    %2366 = vmatpush1.msra.mxu0 0.0
    %2367 = vmatprep.subr.mxu0 0.0
    %2368 = vmatpush1.msra.mxu0 0.0
    %2369 = vmatprep.subr.mxu0 0.0
    %2370 = vmatpush1.msra.mxu0 0.0
    %2371 = vmatprep.subr.mxu0 0.0
    %2372 = vmatpush1.msra.mxu0 0.0
    %2373 = vmatprep.subr.mxu0 0.0
    %2374 = vmatpush1.msra.mxu0 0.0
    %2375 = vmatprep.subr.mxu0 0.0
    %2376 = vmatpush1.msra.mxu0 0.0
    %2377 = vmatprep.subr.mxu0 0.0
    %2378 = vmatpush1.msra.mxu0 0.0
    %2379 = vmatprep.subr.mxu0 0.0
    %2380 = vmatpush1.msra.mxu0 0.0
    %2381 = vmatprep.subr.mxu0 0.0
    %2382 = vmatpush1.msra.mxu0 0.0
    %2383 = vmatprep.subr.mxu0 0.0
    %2384 = vmatpush1.msra.mxu0 0.0
    %2385 = vmatprep.subr.mxu0 0.0
    %2386 = vmatpush1.msra.mxu0 0.0
    %2387 = vmatprep.subr.mxu0 0.0
    %2388 = vmatpush1.msra.mxu0 0.0
    %2389 = vmatprep.subr.mxu0 0.0
    %2390 = vmatpush1.msra.mxu0 0.0
    %2391 = vmatprep.subr.mxu0 0.0
    %2392 = vmatpush1.msra.mxu0 0.0
    %2393 = vmatprep.subr.mxu0 0.0
    %2394 = vmatpush1.msra.mxu0 0.0
    %2395 = vmatprep.subr.mxu0 0.0
    %2396 = vmatpush1.msra.mxu0 0.0
    %2397 = vmatprep.subr.mxu0 0.0
    %2398 = vmatpush1.msra.mxu0 0.0
    %2399 = vmatprep.mubr.f32.mxu0 0.0
    %2400 = vmatmul.mubr.f32.gmra.mrb[0].mxu0 %v2333
    %v2401 = vpop.f32.mrb[0].mxu0
    %v2402 = vadd.f32 0.0, %v2401
    %v2403 = vpop.f32.mrb[0].mxu0
    %2404 = vdwg.mxu0
    %2405 = vrot.lane.b32.xlu0 %v1739, 80
    %v2406 = vpop.permute.xlu0 %2405
    %2407 = vrot.lane.b32.xlu0 %v1739, 64
    %v2408 = vpop.permute.xlu0 %2407
    %v2409 = vsel %vm361, %v2406, 0
    %v2411 = vsel %vm361, %v2408, 0
    %2413 = vmatprep.subr.mxu0 0.0
    %2414 = vmatpush1.xpose.msra.mxu0 %v2411
    %2415 = vmatprep.subr.mxu0 0.0
    %2416 = vmatpush1.xpose.msra.mxu0 0.0
    %2417 = vmatprep.subr.mxu0 0.0
    %2418 = vmatpush1.xpose.msra.mxu0 0.0
    %2419 = vmatprep.subr.mxu0 0.0
    %2420 = vmatpush1.xpose.msra.mxu0 0.0
    %2421 = vmatprep.subr.mxu0 0.0
    %2422 = vmatpush1.xpose.msra.mxu0 0.0
    %2423 = vmatprep.subr.mxu0 0.0
    %2424 = vmatpush1.xpose.msra.mxu0 0.0
    %2425 = vmatprep.subr.mxu0 0.0
    %2426 = vmatpush1.xpose.msra.mxu0 0.0
    %2427 = vmatprep.subr.mxu0 0.0
    %2428 = vmatpush1.xpose.msra.mxu0 0.0
    %2429 = vmatprep.subr.mxu0 0.0
    %2430 = vmatpush1.xpose.msra.mxu0 0.0
    %2431 = vmatprep.subr.mxu0 0.0
    %2432 = vmatpush1.xpose.msra.mxu0 0.0
    %2433 = vmatprep.subr.mxu0 0.0
    %2434 = vmatpush1.xpose.msra.mxu0 0.0
    %2435 = vmatprep.subr.mxu0 0.0
    %2436 = vmatpush1.xpose.msra.mxu0 0.0
    %2437 = vmatprep.subr.mxu0 0.0
    %2438 = vmatpush1.xpose.msra.mxu0 0.0
    %2439 = vmatprep.subr.mxu0 0.0
    %2440 = vmatpush1.xpose.msra.mxu0 0.0
    %2441 = vmatprep.subr.mxu0 0.0
    %2442 = vmatpush1.xpose.msra.mxu0 0.0
    %2443 = vmatprep.subr.mxu0 0.0
    %2444 = vmatpush1.xpose.msra.mxu0 0.0
    %2445 = vmatprep.subr.mxu0 0.0
    %2446 = vmatpush1.xpose.msra.mxu0 0.0
    %2447 = vmatprep.subr.mxu0 0.0
    %2448 = vmatpush1.xpose.msra.mxu0 0.0
    %2449 = vmatprep.subr.mxu0 0.0
    %2450 = vmatpush1.xpose.msra.mxu0 0.0
    %2451 = vmatprep.subr.mxu0 0.0
    %2452 = vmatpush1.xpose.msra.mxu0 0.0
    %2453 = vmatprep.subr.mxu0 0.0
    %2454 = vmatpush1.xpose.msra.mxu0 0.0
    %2455 = vmatprep.subr.mxu0 0.0
    %2456 = vmatpush1.xpose.msra.mxu0 0.0
    %2457 = vmatprep.subr.mxu0 0.0
    %2458 = vmatpush1.xpose.msra.mxu0 0.0
    %2459 = vmatprep.subr.mxu0 0.0
    %2460 = vmatpush1.xpose.msra.mxu0 0.0
    %2461 = vmatprep.subr.mxu0 0.0
    %2462 = vmatpush1.xpose.msra.mxu0 0.0
    %2463 = vmatprep.subr.mxu0 0.0
    %2464 = vmatpush1.xpose.msra.mxu0 0.0
    %2465 = vmatprep.subr.mxu0 0.0
    %2466 = vmatpush1.xpose.msra.mxu0 0.0
    %2467 = vmatprep.subr.mxu0 0.0
    %2468 = vmatpush1.xpose.msra.mxu0 0.0
    %2469 = vmatprep.subr.mxu0 0.0
    %2470 = vmatpush1.xpose.msra.mxu0 0.0
    %2471 = vmatprep.subr.mxu0 0.0
    %2472 = vmatpush1.xpose.msra.mxu0 0.0
    %2473 = vmatprep.subr.mxu0 0.0
    %2474 = vmatpush1.xpose.msra.mxu0 0.0
    %2475 = vmatprep.subr.mxu0 0.0
    %2476 = vmatpush1.xpose.msra.mxu0 0.0
    %2477 = vmatprep.mubr.f32.mxu0 0.0
    %2478 = vmatmul.mubr.f32.gmra.mrb[0].mxu0 %v2409
    %v2479 = vpop.f32.mrb[0].mxu0
    %v2480 = vadd.f32 0.0, %v2479
    %v2481 = vpop.f32.mrb[0].mxu0
    %2482 = vdwg.mxu0
    %v2483 = vmul.f32 %v2480, 0.25
    %v2484 = vadd.f32 %v2483, %v942
    %v2485 = vsel %vm442, %v2484, -inf
    %2486 = vmax.xlane.f32.xlu0 %v2485
    %v2487 = vpop.xlane.xlu0 %2486
    %v2488 = vsub.f32 %v2484, %v2487
    %v2489 = vmul.f32 %v2488, 1.442695
    %v2490 = vpow.pop %v2489
    %v2491 = vsel %vm442, %v2490, 0.0
    %2492 = vadd.xlane.f32.xlu0 %v2491
    %v2493 = vpop.xlane.xlu0 %2492
    %v2494 = vrcp.pop %v2493
    %v2495 = vmul.f32 %v2490, %v2494
    %2496 = vrot.lane.b32.xlu0 %v1739, 48
    %v2497 = vpop.permute.xlu0 %2496
    %v2500 = vsel %vm442, %v2495, 0
    %2502 = vmatprep.subr.mxu0 0.0
    %2503 = vmatpush1.msra.mxu0 %v2497
    %2504 = vmatprep.subr.mxu0 0.0
    %2505 = vmatpush1.msra.mxu0 0.0
    %2506 = vmatprep.subr.mxu0 0.0
    %2507 = vmatpush1.msra.mxu0 0.0
    %2508 = vmatprep.subr.mxu0 0.0
    %2509 = vmatpush1.msra.mxu0 0.0
    %2510 = vmatprep.subr.mxu0 0.0
    %2511 = vmatpush1.msra.mxu0 0.0
    %2512 = vmatprep.subr.mxu0 0.0
    %2513 = vmatpush1.msra.mxu0 0.0
    %2514 = vmatprep.subr.mxu0 0.0
    %2515 = vmatpush1.msra.mxu0 0.0
    %2516 = vmatprep.subr.mxu0 0.0
    %2517 = vmatpush1.msra.mxu0 0.0
    %2518 = vmatprep.subr.mxu0 0.0
    %2519 = vmatpush1.msra.mxu0 0.0
    %2520 = vmatprep.subr.mxu0 0.0
    %2521 = vmatpush1.msra.mxu0 0.0
    %2522 = vmatprep.subr.mxu0 0.0
    %2523 = vmatpush1.msra.mxu0 0.0
    %2524 = vmatprep.subr.mxu0 0.0
    %2525 = vmatpush1.msra.mxu0 0.0
    %2526 = vmatprep.subr.mxu0 0.0
    %2527 = vmatpush1.msra.mxu0 0.0
    %2528 = vmatprep.subr.mxu0 0.0
    %2529 = vmatpush1.msra.mxu0 0.0
    %2530 = vmatprep.subr.mxu0 0.0
    %2531 = vmatpush1.msra.mxu0 0.0
    %2532 = vmatprep.subr.mxu0 0.0
    %2533 = vmatpush1.msra.mxu0 0.0
    %2534 = vmatprep.subr.mxu0 0.0
    %2535 = vmatpush1.msra.mxu0 0.0
    %2536 = vmatprep.subr.mxu0 0.0
    %2537 = vmatpush1.msra.mxu0 0.0
    %2538 = vmatprep.subr.mxu0 0.0
    %2539 = vmatpush1.msra.mxu0 0.0
    %2540 = vmatprep.subr.mxu0 0.0
    %2541 = vmatpush1.msra.mxu0 0.0
    %2542 = vmatprep.subr.mxu0 0.0
    %2543 = vmatpush1.msra.mxu0 0.0
    %2544 = vmatprep.subr.mxu0 0.0
    %2545 = vmatpush1.msra.mxu0 0.0
    %2546 = vmatprep.subr.mxu0 0.0
    %2547 = vmatpush1.msra.mxu0 0.0
    %2548 = vmatprep.subr.mxu0 0.0
    %2549 = vmatpush1.msra.mxu0 0.0
    %2550 = vmatprep.subr.mxu0 0.0
    %2551 = vmatpush1.msra.mxu0 0.0
    %2552 = vmatprep.subr.mxu0 0.0
    %2553 = vmatpush1.msra.mxu0 0.0
    %2554 = vmatprep.subr.mxu0 0.0
    %2555 = vmatpush1.msra.mxu0 0.0
    %2556 = vmatprep.subr.mxu0 0.0
    %2557 = vmatpush1.msra.mxu0 0.0
    %2558 = vmatprep.subr.mxu0 0.0
    %2559 = vmatpush1.msra.mxu0 0.0
    %2560 = vmatprep.subr.mxu0 0.0
    %2561 = vmatpush1.msra.mxu0 0.0
    %2562 = vmatprep.subr.mxu0 0.0
    %2563 = vmatpush1.msra.mxu0 0.0
    %2564 = vmatprep.subr.mxu0 0.0
    %2565 = vmatpush1.msra.mxu0 0.0
    %2566 = vmatprep.mubr.f32.mxu0 0.0
    %2567 = vmatmul.mubr.f32.gmra.mrb[0].mxu0 %v2500
    %v2568 = vpop.f32.mrb[0].mxu0
    %v2569 = vadd.f32 0.0, %v2568
    %v2570 = vpop.f32.mrb[0].mxu0
    %2571 = vdwg.mxu0
    %v2573 = vsel %vm361, %v2569, 0
    %2575 = vmatprep.subr.mxu0 0.0
    %2576 = vmatpush1.msra.mxu0 %v2080
    %2577 = vmatprep.subr.mxu0 0.0
    %2578 = vmatpush1.msra.mxu0 %v2082
    %2579 = vmatprep.subr.mxu0 0.0
    %2580 = vmatpush1.msra.mxu0 0.0
    %2581 = vmatprep.subr.mxu0 0.0
    %2582 = vmatpush1.msra.mxu0 0.0
    %2583 = vmatprep.subr.mxu0 0.0
    %2584 = vmatpush1.msra.mxu0 0.0
    %2585 = vmatprep.subr.mxu0 0.0
    %2586 = vmatpush1.msra.mxu0 0.0
    %2587 = vmatprep.subr.mxu0 0.0
    %2588 = vmatpush1.msra.mxu0 0.0
    %2589 = vmatprep.subr.mxu0 0.0
    %2590 = vmatpush1.msra.mxu0 0.0
    %2591 = vmatprep.subr.mxu0 0.0
    %2592 = vmatpush1.msra.mxu0 0.0
    %2593 = vmatprep.subr.mxu0 0.0
    %2594 = vmatpush1.msra.mxu0 0.0
    %2595 = vmatprep.subr.mxu0 0.0
    %2596 = vmatpush1.msra.mxu0 0.0
    %2597 = vmatprep.subr.mxu0 0.0
    %2598 = vmatpush1.msra.mxu0 0.0
    %2599 = vmatprep.subr.mxu0 0.0
    %2600 = vmatpush1.msra.mxu0 0.0
    %2601 = vmatprep.subr.mxu0 0.0
    %2602 = vmatpush1.msra.mxu0 0.0
    %2603 = vmatprep.subr.mxu0 0.0
    %2604 = vmatpush1.msra.mxu0 0.0
    %2605 = vmatprep.subr.mxu0 0.0
    %2606 = vmatpush1.msra.mxu0 0.0
    %2607 = vmatprep.subr.mxu0 0.0
    %2608 = vmatpush1.msra.mxu0 0.0
    %2609 = vmatprep.subr.mxu0 0.0
    %2610 = vmatpush1.msra.mxu0 0.0
    %2611 = vmatprep.subr.mxu0 0.0
    %2612 = vmatpush1.msra.mxu0 0.0
    %2613 = vmatprep.subr.mxu0 0.0
    %2614 = vmatpush1.msra.mxu0 0.0
    %2615 = vmatprep.subr.mxu0 0.0
    %2616 = vmatpush1.msra.mxu0 0.0
    %2617 = vmatprep.subr.mxu0 0.0
    %2618 = vmatpush1.msra.mxu0 0.0
    %2619 = vmatprep.subr.mxu0 0.0
    %2620 = vmatpush1.msra.mxu0 0.0
    %2621 = vmatprep.subr.mxu0 0.0
    %2622 = vmatpush1.msra.mxu0 0.0
    %2623 = vmatprep.subr.mxu0 0.0
    %2624 = vmatpush1.msra.mxu0 0.0
    %2625 = vmatprep.subr.mxu0 0.0
    %2626 = vmatpush1.msra.mxu0 0.0
    %2627 = vmatprep.subr.mxu0 0.0
    %2628 = vmatpush1.msra.mxu0 0.0
    %2629 = vmatprep.subr.mxu0 0.0
    %2630 = vmatpush1.msra.mxu0 0.0
    %2631 = vmatprep.subr.mxu0 0.0
    %2632 = vmatpush1.msra.mxu0 0.0
    %2633 = vmatprep.subr.mxu0 0.0
    %2634 = vmatpush1.msra.mxu0 0.0
    %2635 = vmatprep.subr.mxu0 0.0
    %2636 = vmatpush1.msra.mxu0 0.0
    %2637 = vmatprep.subr.mxu0 0.0
    %2638 = vmatpush1.msra.mxu0 0.0
    %2639 = vmatprep.mubr.f32.mxu0 0.0
    %2640 = vmatmul.mubr.f32.gmra.mrb[0].mxu0 %v2573
    %v2641 = vpop.f32.mrb[0].mxu0
    %v2642 = vadd.f32 0.0, %v2641
    %v2643 = vpop.f32.mrb[0].mxu0
    %2644 = vdwg.mxu0
    %v2646 = vsel %vm361, %v2402, 0
    %2648 = vmatprep.subr.mxu0 0.0
    %2649 = vmatpush1.msra.mxu0 %v2161
    %2650 = vmatprep.subr.mxu0 0.0
    %2651 = vmatpush1.msra.mxu0 %v2163
    %2652 = vmatprep.subr.mxu0 0.0
    %2653 = vmatpush1.msra.mxu0 0.0
    %2654 = vmatprep.subr.mxu0 0.0
    %2655 = vmatpush1.msra.mxu0 0.0
    %2656 = vmatprep.subr.mxu0 0.0
    %2657 = vmatpush1.msra.mxu0 0.0
    %2658 = vmatprep.subr.mxu0 0.0
    %2659 = vmatpush1.msra.mxu0 0.0
    %2660 = vmatprep.subr.mxu0 0.0
    %2661 = vmatpush1.msra.mxu0 0.0
    %2662 = vmatprep.subr.mxu0 0.0
    %2663 = vmatpush1.msra.mxu0 0.0
    %2664 = vmatprep.subr.mxu0 0.0
    %2665 = vmatpush1.msra.mxu0 0.0
    %2666 = vmatprep.subr.mxu0 0.0
    %2667 = vmatpush1.msra.mxu0 0.0
    %2668 = vmatprep.subr.mxu0 0.0
    %2669 = vmatpush1.msra.mxu0 0.0
    %2670 = vmatprep.subr.mxu0 0.0
    %2671 = vmatpush1.msra.mxu0 0.0
    %2672 = vmatprep.subr.mxu0 0.0
    %2673 = vmatpush1.msra.mxu0 0.0
    %2674 = vmatprep.subr.mxu0 0.0
    %2675 = vmatpush1.msra.mxu0 0.0
    %2676 = vmatprep.subr.mxu0 0.0
    %2677 = vmatpush1.msra.mxu0 0.0
    %2678 = vmatprep.subr.mxu0 0.0
    %2679 = vmatpush1.msra.mxu0 0.0
    %2680 = vmatprep.subr.mxu0 0.0
    %2681 = vmatpush1.msra.mxu0 0.0
    %2682 = vmatprep.subr.mxu0 0.0
    %2683 = vmatpush1.msra.mxu0 0.0
    %2684 = vmatprep.subr.mxu0 0.0
    %2685 = vmatpush1.msra.mxu0 0.0
    %2686 = vmatprep.subr.mxu0 0.0
    %2687 = vmatpush1.msra.mxu0 0.0
    %2688 = vmatprep.subr.mxu0 0.0
    %2689 = vmatpush1.msra.mxu0 0.0
    %2690 = vmatprep.subr.mxu0 0.0
    %2691 = vmatpush1.msra.mxu0 0.0
    %2692 = vmatprep.subr.mxu0 0.0
    %2693 = vmatpush1.msra.mxu0 0.0
    %2694 = vmatprep.subr.mxu0 0.0
    %2695 = vmatpush1.msra.mxu0 0.0
    %2696 = vmatprep.subr.mxu0 0.0
    %2697 = vmatpush1.msra.mxu0 0.0
    %2698 = vmatprep.subr.mxu0 0.0
    %2699 = vmatpush1.msra.mxu0 0.0
    %2700 = vmatprep.subr.mxu0 0.0
    %2701 = vmatpush1.msra.mxu0 0.0
    %2702 = vmatprep.subr.mxu0 0.0
    %2703 = vmatpush1.msra.mxu0 0.0
    %2704 = vmatprep.subr.mxu0 0.0
    %2705 = vmatpush1.msra.mxu0 0.0
    %2706 = vmatprep.subr.mxu0 0.0
    %2707 = vmatpush1.msra.mxu0 0.0
    %2708 = vmatprep.subr.mxu0 0.0
    %2709 = vmatpush1.msra.mxu0 0.0
    %2710 = vmatprep.subr.mxu0 0.0
    %2711 = vmatpush1.msra.mxu0 0.0
    %2712 = vmatprep.mubr.f32.mxu0 0.0
    %2713 = vmatmul.mubr.f32.gmra.mrb[0].mxu0 %v2646
    %v2714 = vpop.f32.mrb[0].mxu0
    %v2715 = vadd.f32 %v2642, %v2714
    %v2716 = vpop.f32.mrb[0].mxu0
    %2717 = vdwg.mxu0
    %v2718 = vlaneseq
    %v2719 = vshrl.u32 %v2718, 7
    %v2720 = vsub.s32 0, %v2719
    %v2721 = vrot.slane %v1645, %v2720
    %v2722 = vadd.f32 %v2236, %v2721
    %v2723 = vadd.f32 %v2715, %v2721
    %v2724 = vadd.f32 %v1641, %v2722
    %v2725 = vadd.f32 %v1642, %v2723
    %v2726 = vsel %vm217, %v2724, 0.0
    %2727 = vadd.xlane.f32.xlu0 %v2726
    %v2728 = vpop.xlane.xlu0 %2727
    %v2729 = vsel %vm217, %v2725, 0.0
    %2730 = vadd.xlane.f32.xlu0 %v2729
    %v2731 = vpop.xlane.xlu0 %2730
    %v2732 = vmul.f32 %v2728, %v224
    %v2733 = vmul.f32 %v2731, %v224
    %v2734 = vsub.f32 %v2724, %v2732
    %v2735 = vsub.f32 %v2725, %v2733
    %v2736 = vmul.f32 %v2734, %v2734
    %v2737 = vmul.f32 %v2735, %v2735
    %v2738 = vsel %vm217, %v2736, 0.0
    %2739 = vadd.xlane.f32.xlu0 %v2738
    %v2740 = vpop.xlane.xlu0 %2739
    %v2741 = vsel %vm217, %v2737, 0.0
    %2742 = vadd.xlane.f32.xlu0 %v2741
    %v2743 = vpop.xlane.xlu0 %2742
    %v2744 = vmul.f32 %v2740, %v224
    %v2745 = vmul.f32 %v2743, %v224
    %v2746 = vadd.f32 %v2744, 1e-12
    %v2747 = vadd.f32 %v2745, 1e-12
    %v2748 = vrsqrt.pop %v2746
    %v2749 = vrsqrt.pop %v2747
    %v2750 = vmul.f32 %v2734, %v2748
    %v2751 = vmul.f32 %v2735, %v2749
    %v2752 = vlaneseq
    %v2753 = vshrl.u32 %v2752, 7
    %v2754 = vsub.s32 0, %v2753
    %v2755 = vrot.slane %v1646, %v2754
    %v2756 = vmul.f32 %v2750, %v2755
    %v2757 = vmul.f32 %v2751, %v2755
    %v2758 = vlaneseq
    %v2759 = vshrl.u32 %v2758, 7
    %v2760 = vsub.s32 0, %v2759
    %v2761 = vrot.slane %v1647, %v2760
    %v2762 = vadd.f32 %v2756, %v2761
    %v2763 = vadd.f32 %v2757, %v2761
    %v2764 = vld [vmem:[%s1652 + $0x8] sm:$0xff]
    %v2765 = vld [vmem:[%s1652 + $0x18] sm:$0xff]
    %v2766 = vld [vmem:[%s1652 + $0x28] sm:$0xff]
    %v2767 = vld [vmem:[%s1652 + $0x38] sm:$0xff]
    %v2768 = vlaneseq
    %v2769 = vshrl.u32 %v2768, 7
    %v2770 = vsub.s32 0, %v2769
    %v2771 = vrot.slane %v1648, %v2770
    %v2773 = vsel %vm217, %v2762, 0
    %v2776 = vsel %vm217, %v2763, 0
    %2778 = vmatprep.subr.mxu0 0.0
    %2779 = vmatpush1.msra.mxu0 %v2764
    %2780 = vmatprep.subr.mxu0 0.0
    %2781 = vmatpush1.msra.mxu0 %v2765
    %2782 = vmatprep.subr.mxu0 0.0
    %2783 = vmatpush1.msra.mxu0 %v2766
    %2784 = vmatprep.subr.mxu0 0.0
    %2785 = vmatpush1.msra.mxu0 %v2767
    %2786 = vmatprep.subr.mxu0 0.0
    %2787 = vmatpush1.msra.mxu0 0.0
    %2788 = vmatprep.subr.mxu0 0.0
    %2789 = vmatpush1.msra.mxu0 0.0
    %2790 = vmatprep.subr.mxu0 0.0
    %2791 = vmatpush1.msra.mxu0 0.0
    %2792 = vmatprep.subr.mxu0 0.0
    %2793 = vmatpush1.msra.mxu0 0.0
    %2794 = vmatprep.subr.mxu0 0.0
    %2795 = vmatpush1.msra.mxu0 0.0
    %2796 = vmatprep.subr.mxu0 0.0
    %2797 = vmatpush1.msra.mxu0 0.0
    %2798 = vmatprep.subr.mxu0 0.0
    %2799 = vmatpush1.msra.mxu0 0.0
    %2800 = vmatprep.subr.mxu0 0.0
    %2801 = vmatpush1.msra.mxu0 0.0
    %2802 = vmatprep.subr.mxu0 0.0
    %2803 = vmatpush1.msra.mxu0 0.0
    %2804 = vmatprep.subr.mxu0 0.0
    %2805 = vmatpush1.msra.mxu0 0.0
    %2806 = vmatprep.subr.mxu0 0.0
    %2807 = vmatpush1.msra.mxu0 0.0
    %2808 = vmatprep.subr.mxu0 0.0
    %2809 = vmatpush1.msra.mxu0 0.0
    %2810 = vmatprep.subr.mxu0 0.0
    %2811 = vmatpush1.msra.mxu0 0.0
    %2812 = vmatprep.subr.mxu0 0.0
    %2813 = vmatpush1.msra.mxu0 0.0
    %2814 = vmatprep.subr.mxu0 0.0
    %2815 = vmatpush1.msra.mxu0 0.0
    %2816 = vmatprep.subr.mxu0 0.0
    %2817 = vmatpush1.msra.mxu0 0.0
    %2818 = vmatprep.subr.mxu0 0.0
    %2819 = vmatpush1.msra.mxu0 0.0
    %2820 = vmatprep.subr.mxu0 0.0
    %2821 = vmatpush1.msra.mxu0 0.0
    %2822 = vmatprep.subr.mxu0 0.0
    %2823 = vmatpush1.msra.mxu0 0.0
    %2824 = vmatprep.subr.mxu0 0.0
    %2825 = vmatpush1.msra.mxu0 0.0
    %2826 = vmatprep.subr.mxu0 0.0
    %2827 = vmatpush1.msra.mxu0 0.0
    %2828 = vmatprep.subr.mxu0 0.0
    %2829 = vmatpush1.msra.mxu0 0.0
    %2830 = vmatprep.subr.mxu0 0.0
    %2831 = vmatpush1.msra.mxu0 0.0
    %2832 = vmatprep.subr.mxu0 0.0
    %2833 = vmatpush1.msra.mxu0 0.0
    %2834 = vmatprep.subr.mxu0 0.0
    %2835 = vmatpush1.msra.mxu0 0.0
    %2836 = vmatprep.subr.mxu0 0.0
    %2837 = vmatpush1.msra.mxu0 0.0
    %2838 = vmatprep.subr.mxu0 0.0
    %2839 = vmatpush1.msra.mxu0 0.0
    %2840 = vmatprep.subr.mxu0 0.0
    %2841 = vmatpush1.msra.mxu0 0.0
    %2842 = vmatprep.mubr.f32.mxu0 0.0
    %2843 = vmatmul.mubr.f32.gmra.mrb[0].mxu0 %v2773
    %v2844 = vpop.f32.mrb[0].mxu0
    %v2845 = vadd.f32 %v2771, %v2844
    %v2846 = vpop.f32.mrb[0].mxu0
    %2847 = vmatprep.mubr.f32.mxu0 0.0
    %2848 = vmatmul.mubr.f32.gmra.mrb[0].mxu0 %v2776
    %v2849 = vpop.f32.mrb[0].mxu0
    %v2850 = vadd.f32 %v2771, %v2849
    %v2851 = vpop.f32.mrb[0].mxu0
    %2852 = vdwg.mxu0
    %v2853 = vmul.f32 %v2845, 0.5
    %v2854 = vmul.f32 %v2850, 0.5
    %v2855 = vmul.f32 %v2845, 0.044715
    %v2856 = vmul.f32 %v2850, 0.044715
    %v2857 = vmul.f32 %v2855, %v2845
    %v2858 = vmul.f32 %v2856, %v2850
    %v2859 = vmul.f32 %v2857, %v2845
    %v2860 = vmul.f32 %v2858, %v2850
    %v2861 = vadd.f32 %v2845, %v2859
    %v2862 = vadd.f32 %v2850, %v2860
    %v2863 = vmul.f32 %v2861, 0.7978846
    %v2864 = vmul.f32 %v2862, 0.7978846
    %v2865 = vtanh.pop %v2863
    %v2866 = vtanh.pop %v2864
    %v2867 = vadd.f32 %v2865, 1.0
    %v2868 = vadd.f32 %v2866, 1.0
    %v2869 = vmul.f32 %v2853, %v2867
    %v2870 = vmul.f32 %v2854, %v2868
    %v2871 = vlaneseq
    %v2872 = vshrl.u32 %v2871, 7
    %v2873 = vsub.s32 0, %v2872
    %v2874 = vrot.slane %v1649, %v2873
    %2879 = vrot.lane.b32.xlu0 %v2764, 64
    %v2880 = vpop.permute.xlu0 %2879
    %2881 = vrot.lane.b32.xlu0 %v2765, 64
    %v2882 = vpop.permute.xlu0 %2881
    %2883 = vrot.lane.b32.xlu0 %v2766, 64
    %v2884 = vpop.permute.xlu0 %2883
    %2885 = vrot.lane.b32.xlu0 %v2767, 64
    %v2886 = vpop.permute.xlu0 %2885
    %v2888 = vsel %vm1513, %v2869, 0
    %v2891 = vsel %vm1513, %v2870, 0
    %v2893 = vsel %vm1513, %v2880, 0
    %v2895 = vsel %vm1513, %v2882, 0
    %v2897 = vsel %vm1513, %v2884, 0
    %v2899 = vsel %vm1513, %v2886, 0
    %2901 = vmatprep.subr.mxu0 0.0
    %2902 = vmatpush1.xpose.msra.mxu0 %v2893
    %2903 = vmatprep.subr.mxu0 0.0
    %2904 = vmatpush1.xpose.msra.mxu0 %v2895
    %2905 = vmatprep.subr.mxu0 0.0
    %2906 = vmatpush1.xpose.msra.mxu0 %v2897
    %2907 = vmatprep.subr.mxu0 0.0
    %2908 = vmatpush1.xpose.msra.mxu0 %v2899
    %2909 = vmatprep.subr.mxu0 0.0
    %2910 = vmatpush1.xpose.msra.mxu0 0.0
    %2911 = vmatprep.subr.mxu0 0.0
    %2912 = vmatpush1.xpose.msra.mxu0 0.0
    %2913 = vmatprep.subr.mxu0 0.0
    %2914 = vmatpush1.xpose.msra.mxu0 0.0
    %2915 = vmatprep.subr.mxu0 0.0
    %2916 = vmatpush1.xpose.msra.mxu0 0.0
    %2917 = vmatprep.subr.mxu0 0.0
    %2918 = vmatpush1.xpose.msra.mxu0 0.0
    %2919 = vmatprep.subr.mxu0 0.0
    %2920 = vmatpush1.xpose.msra.mxu0 0.0
    %2921 = vmatprep.subr.mxu0 0.0
    %2922 = vmatpush1.xpose.msra.mxu0 0.0
    %2923 = vmatprep.subr.mxu0 0.0
    %2924 = vmatpush1.xpose.msra.mxu0 0.0
    %2925 = vmatprep.subr.mxu0 0.0
    %2926 = vmatpush1.xpose.msra.mxu0 0.0
    %2927 = vmatprep.subr.mxu0 0.0
    %2928 = vmatpush1.xpose.msra.mxu0 0.0
    %2929 = vmatprep.subr.mxu0 0.0
    %2930 = vmatpush1.xpose.msra.mxu0 0.0
    %2931 = vmatprep.subr.mxu0 0.0
    %2932 = vmatpush1.xpose.msra.mxu0 0.0
    %2933 = vmatprep.subr.mxu0 0.0
    %2934 = vmatpush1.xpose.msra.mxu0 0.0
    %2935 = vmatprep.subr.mxu0 0.0
    %2936 = vmatpush1.xpose.msra.mxu0 0.0
    %2937 = vmatprep.subr.mxu0 0.0
    %2938 = vmatpush1.xpose.msra.mxu0 0.0
    %2939 = vmatprep.subr.mxu0 0.0
    %2940 = vmatpush1.xpose.msra.mxu0 0.0
    %2941 = vmatprep.subr.mxu0 0.0
    %2942 = vmatpush1.xpose.msra.mxu0 0.0
    %2943 = vmatprep.subr.mxu0 0.0
    %2944 = vmatpush1.xpose.msra.mxu0 0.0
    %2945 = vmatprep.subr.mxu0 0.0
    %2946 = vmatpush1.xpose.msra.mxu0 0.0
    %2947 = vmatprep.subr.mxu0 0.0
    %2948 = vmatpush1.xpose.msra.mxu0 0.0
    %2949 = vmatprep.subr.mxu0 0.0
    %2950 = vmatpush1.xpose.msra.mxu0 0.0
    %2951 = vmatprep.subr.mxu0 0.0
    %2952 = vmatpush1.xpose.msra.mxu0 0.0
    %2953 = vmatprep.subr.mxu0 0.0
    %2954 = vmatpush1.xpose.msra.mxu0 0.0
    %2955 = vmatprep.subr.mxu0 0.0
    %2956 = vmatpush1.xpose.msra.mxu0 0.0
    %2957 = vmatprep.subr.mxu0 0.0
    %2958 = vmatpush1.xpose.msra.mxu0 0.0
    %2959 = vmatprep.subr.mxu0 0.0
    %2960 = vmatpush1.xpose.msra.mxu0 0.0
    %2961 = vmatprep.subr.mxu0 0.0
    %2962 = vmatpush1.xpose.msra.mxu0 0.0
    %2963 = vmatprep.subr.mxu0 0.0
    %2964 = vmatpush1.xpose.msra.mxu0 0.0
    %2965 = vmatprep.mubr.f32.mxu0 0.0
    %2966 = vmatmul.mubr.f32.gmra.mrb[0].mxu0 %v2888
    %v2967 = vpop.f32.mrb[0].mxu0
    %v2968 = vadd.f32 %v2874, %v2967
    %v2969 = vpop.f32.mrb[0].mxu0
    %2970 = vmatprep.mubr.f32.mxu0 0.0
    %2971 = vmatmul.mubr.f32.gmra.mrb[0].mxu0 %v2891
    %v2972 = vpop.f32.mrb[0].mxu0
    %v2973 = vadd.f32 %v2874, %v2972
    %v2974 = vpop.f32.mrb[0].mxu0
    %2975 = vdwg.mxu0
    %v2976 = vadd.f32 %v2762, %v2968
    %v2977 = vadd.f32 %v2763, %v2973
    %v2978 = vsel %vm217, %v2976, 0.0
    %2979 = vadd.xlane.f32.xlu0 %v2978
    %v2980 = vpop.xlane.xlu0 %2979
    %v2981 = vsel %vm217, %v2977, 0.0
    %2982 = vadd.xlane.f32.xlu0 %v2981
    %v2983 = vpop.xlane.xlu0 %2982
    %v2984 = vmul.f32 %v2980, %v224
    %v2985 = vmul.f32 %v2983, %v224
    %v2986 = vsub.f32 %v2976, %v2984
    %v2987 = vsub.f32 %v2977, %v2985
    %v2988 = vmul.f32 %v2986, %v2986
    %v2989 = vmul.f32 %v2987, %v2987
    %v2990 = vsel %vm217, %v2988, 0.0
    %2991 = vadd.xlane.f32.xlu0 %v2990
    %v2992 = vpop.xlane.xlu0 %2991
    %v2993 = vsel %vm217, %v2989, 0.0
    %2994 = vadd.xlane.f32.xlu0 %v2993
    %v2995 = vpop.xlane.xlu0 %2994
    %v2996 = vmul.f32 %v2992, %v224
    %v2997 = vmul.f32 %v2995, %v224
    %v2998 = vadd.f32 %v2996, 1e-12
    %v2999 = vadd.f32 %v2997, 1e-12
    %v3000 = vrsqrt.pop %v2998
    %v3001 = vrsqrt.pop %v2999
    %v3002 = vmul.f32 %v2986, %v3000
    %v3003 = vmul.f32 %v2987, %v3001
    %v3004 = vlaneseq
    %v3005 = vshrl.u32 %v3004, 7
    %v3006 = vsub.s32 0, %v3005
    %v3007 = vrot.slane %v1650, %v3006
    %v3008 = vmul.f32 %v3002, %v3007
    %v3009 = vmul.f32 %v3003, %v3007
    %v3010 = vlaneseq
    %v3011 = vshrl.u32 %v3010, 7
    %v3012 = vsub.s32 0, %v3011
    %v3013 = vrot.slane %v1651, %v3012
    %v3014 = vadd.f32 %v3008, %v3013
    %v3015 = vadd.f32 %v3009, %v3013
    %v3017 = vrot.slane %v3015, 7
    %vm3019 = vcmask 1040384
    %v3020 = vsel %vm3019, %v3014, %v3017
    %v3021 = vld [vmem:[%s3 + $0x76] sm:$0xf]
    %v3022 = vld [vmem:[%s4 + $0x2] sm:$0x1]
    %v3023 = vlaneseq
    %v3024 = vshrl.u32 %v3023, 7
    %v3025 = vsub.s32 0, %v3024
    %v3026 = vrot.slane %v3022, %v3025
    %v3028 = vsel %vm217, %v3020, 0
    %v3031 = vsel %vm217, %v3021, 0
    %3033 = vmatprep.subr.mxu0 0.0
    %3034 = vmatpush1.xpose.msra.mxu0 %v3031
    %3035 = vmatprep.subr.mxu0 0.0
    %3036 = vmatpush1.xpose.msra.mxu0 0.0
    %3037 = vmatprep.subr.mxu0 0.0
    %3038 = vmatpush1.xpose.msra.mxu0 0.0
    %3039 = vmatprep.subr.mxu0 0.0
    %3040 = vmatpush1.xpose.msra.mxu0 0.0
    %3041 = vmatprep.subr.mxu0 0.0
    %3042 = vmatpush1.xpose.msra.mxu0 0.0
    %3043 = vmatprep.subr.mxu0 0.0
    %3044 = vmatpush1.xpose.msra.mxu0 0.0
    %3045 = vmatprep.subr.mxu0 0.0
    %3046 = vmatpush1.xpose.msra.mxu0 0.0
    %3047 = vmatprep.subr.mxu0 0.0
    %3048 = vmatpush1.xpose.msra.mxu0 0.0
    %3049 = vmatprep.subr.mxu0 0.0
    %3050 = vmatpush1.xpose.msra.mxu0 0.0
    %3051 = vmatprep.subr.mxu0 0.0
    %3052 = vmatpush1.xpose.msra.mxu0 0.0
    %3053 = vmatprep.subr.mxu0 0.0
    %3054 = vmatpush1.xpose.msra.mxu0 0.0
    %3055 = vmatprep.subr.mxu0 0.0
    %3056 = vmatpush1.xpose.msra.mxu0 0.0
    %3057 = vmatprep.subr.mxu0 0.0
    %3058 = vmatpush1.xpose.msra.mxu0 0.0
    %3059 = vmatprep.subr.mxu0 0.0
    %3060 = vmatpush1.xpose.msra.mxu0 0.0
    %3061 = vmatprep.subr.mxu0 0.0
    %3062 = vmatpush1.xpose.msra.mxu0 0.0
    %3063 = vmatprep.subr.mxu0 0.0
    %3064 = vmatpush1.xpose.msra.mxu0 0.0
    %3065 = vmatprep.subr.mxu0 0.0
    %3066 = vmatpush1.xpose.msra.mxu0 0.0
    %3067 = vmatprep.subr.mxu0 0.0
    %3068 = vmatpush1.xpose.msra.mxu0 0.0
    %3069 = vmatprep.subr.mxu0 0.0
    %3070 = vmatpush1.xpose.msra.mxu0 0.0
    %3071 = vmatprep.subr.mxu0 0.0
    %3072 = vmatpush1.xpose.msra.mxu0 0.0
    %3073 = vmatprep.subr.mxu0 0.0
    %3074 = vmatpush1.xpose.msra.mxu0 0.0
    %3075 = vmatprep.subr.mxu0 0.0
    %3076 = vmatpush1.xpose.msra.mxu0 0.0
    %3077 = vmatprep.subr.mxu0 0.0
    %3078 = vmatpush1.xpose.msra.mxu0 0.0
    %3079 = vmatprep.subr.mxu0 0.0
    %3080 = vmatpush1.xpose.msra.mxu0 0.0
    %3081 = vmatprep.subr.mxu0 0.0
    %3082 = vmatpush1.xpose.msra.mxu0 0.0
    %3083 = vmatprep.subr.mxu0 0.0
    %3084 = vmatpush1.xpose.msra.mxu0 0.0
    %3085 = vmatprep.subr.mxu0 0.0
    %3086 = vmatpush1.xpose.msra.mxu0 0.0
    %3087 = vmatprep.subr.mxu0 0.0
    %3088 = vmatpush1.xpose.msra.mxu0 0.0
    %3089 = vmatprep.subr.mxu0 0.0
    %3090 = vmatpush1.xpose.msra.mxu0 0.0
    %3091 = vmatprep.subr.mxu0 0.0
    %3092 = vmatpush1.xpose.msra.mxu0 0.0
    %3093 = vmatprep.subr.mxu0 0.0
    %3094 = vmatpush1.xpose.msra.mxu0 0.0
    %3095 = vmatprep.subr.mxu0 0.0
    %3096 = vmatpush1.xpose.msra.mxu0 0.0
    %3097 = vmatprep.mubr.f32.mxu0 0.0
    %3098 = vmatmul.mubr.f32.gmra.mrb[0].mxu0 %v3028
    %v3099 = vpop.f32.mrb[0].mxu0
    %v3100 = vadd.f32 %v3026, %v3099
    %v3101 = vpop.f32.mrb[0].mxu0
    %3102 = vdwg.mxu0
    %vm3103 = vcmask 254976
    %3104 = vst.msk [vmem:[#allocation6] sm:$0x3] %vm3103, %v3020
    %vm3105 = vcmask 25600
    %3106 = vst.msk [vmem:[#allocation8] sm:$0x3] %vm3105, %v3100
    // Predicated region
    $region22: #{_lambda_.1} parent=1 // pred_check
      _
    $region23: #{_lambda_.1} parent=1 // pred_check_branch
      %3108 = sbr.rel (0) target = $region25
    $region24: #{_lambda_.1} parent=1 // pred_region
      %s3110 = ssub.s32 32, 32
      %3111 = vsyncadd [#allocation7], %s3110
      %s3113 = sshll.u32 [#allocation6], 4
      %s3114 = int_to_ptr.vmem [resolvable:$true] %s3113
      %3116 = dma.vmem_to_hbm [thread:$0]  %s3114, 32, %s7, [#allocation7]
    $region25: #{_lambda_.1} parent=1 // pred_fallthru
      _
    // Predicated region
    $region26: #{_lambda_.1} parent=1 // pred_check
      _
    $region27: #{_lambda_.1} parent=1 // pred_check_branch
      %3118 = sbr.rel (0) target = $region29
    $region28: #{_lambda_.1} parent=1 // pred_region
      %s3120 = ssub.s32 32, 32
      %3121 = vsyncadd [#allocation9], %s3120
      %s3123 = sshll.u32 [#allocation8], 4
      %s3124 = int_to_ptr.vmem [resolvable:$true] %s3123
      %3126 = dma.vmem_to_hbm [thread:$0]  %s3124, 32, %s8, [#allocation9]
    $region29: #{_lambda_.1} parent=1 // pred_fallthru
      _
    // Predicated region
    $region30: #{_lambda_.1} parent=1 // pred_check
      _
    $region31: #{_lambda_.1} parent=1 // pred_check_branch
      %3128 = sbr.rel (0) target = $region33
    $region32: #{_lambda_.1} parent=1 // pred_region
      %3129 = dma.done [#allocation7], 32
    $region33: #{_lambda_.1} parent=1 // pred_fallthru
      _
    // Predicated region
    $region34: #{_lambda_.1} parent=1 // pred_check
      _
    $region35: #{_lambda_.1} parent=1 // pred_check_branch
      %3131 = sbr.rel (0) target = $region37
    $region36: #{_lambda_.1} parent=1 // pred_region
      %3132 = dma.done [#allocation9], 32
    $region37: #{_lambda_.1} parent=1 // pred_fallthru
      _
    %3133 = vsyncpa [#allocation7], 1
    %3134 = vsyncpa [#allocation9], 1

</llo_original>
